<compile_context>
chip_gen: v7x
topology: tpu7x:2x2x1
jax: 0.10.0
libtpu: 0.0.40
codegen_flags: <defaults>
</compile_context>

<pallas_src>
import numpy as np
import jax
import jax.numpy as jnp
from jax.experimental import pallas as pl
from jax.experimental.pallas import tpu as pltpu

# GaussianSmearing with fixed_offset=True: coeff = -0.5 / (offset[1]-offset[0])**2 = -0.5
GAUSS_COEFF = -0.5
FIXED_OFFSETS = [0, 1, 1.25, 1.5, 1.75, 2, 2.25, 2.5, 2.75, 3,
                 3.5, 4, 4.5, 5, 5.5, 6, 7, 8, 9, 10]


def _silu(t):
    return t * jax.nn.sigmoid(t)


def _cdiv(a, b):
    return -(-a // b)


def _round_up(a, b):
    return _cdiv(a, b) * b


def _vmem_capacity_bytes():
    try:
        return int(pltpu.get_tpu_info().vmem_capacity_bytes)
    except Exception:
        return 64 * 1024 * 1024           # v7x worst case -> safe on all generations


def _pick_edge_tile(n, hdim, gdim, requested, vmem_cap, e, n_split):
    """Pick the edge-tile length (multiple of 128) against a VMEM budget."""
    n_eff = max(n, 8)
    per_row = (6 * n_eff                                # three bf16 one-hots
               + 8 * n_eff                              # two int32 iota temporaries
               + 12 * (hdim + 3) + 4 * (hdim + 1)       # gather / head / cat scratches
               + 4 * (hdim + 3)                         # streamed eap + indices (x2 buf)
               + 16 * hdim + 8 * gdim + 64)             # f32 activation temporaries
    resident = (8 * n * (hdim + 3)                      # bf16 slabs (double buffered)
                + 4 * (gdim * hdim + hdim * hdim + hdim * (hdim + 1) + 4 * hdim + gdim)
                + 8 * n * (hdim + 3))                   # accumulator + output block
    budget = max(vmem_cap - resident - 6 * 2**20, 2 * 2**20)
    if requested is None:
        requested = 1024 if vmem_cap > 96 * 2**20 else 512
    te = max(128, (int(requested) // 128) * 128)
    te = min(te, max(128, _round_up(_cdiv(e, n_split), 128)))   # don't over-pad tiny graphs
    while te > 128 and te * per_row > budget:
        te -= 128
    return te


def egnn_edge_kernel(src_ref, dst_ref, dstr_ref, eap_ref,
                     slabd_ref, slabs_ref, off_ref, wdf_ref,
                     w2_ref, b2_ref, wxi_ref, bxi_ref, wx2_ref,
                     out_ref,
                     g_ref, t2_ref, cat_ref, acc_ref):
    step = pl.program_id(1)
    te = src_ref.shape[0]
    n = slabd_ref.shape[0]
    hdim = w2_ref.shape[0]

    @pl.when(step == 0)
    def _init():
        acc_ref[...] = jnp.zeros_like(acc_ref)

    # One-hot gather / scatter matrices (iotas regenerated inline: no scratch).
    # bf16 is exact for 0/1 and doubles MXU rate.  Padded edges carry node id
    # == n -> all-zero rows / columns -> no contribution to the scatter.
    ids_tn = jax.lax.broadcasted_iota(jnp.int32, (te, n), 1)
    ids_nt = jax.lax.broadcasted_iota(jnp.int32, (n, te), 0)
    oh_dst = (ids_tn == dst_ref[...]).astype(jnp.bfloat16)        # [TE, N]
    oh_src = (ids_tn == src_ref[...]).astype(jnp.bfloat16)        # [TE, N]
    oh_dst_t = (ids_nt == dstr_ref[...]).astype(jnp.bfloat16)     # [N, TE]

    # Fused gather of pre-projected features + coordinates:
    #   slab_dst = [h@W1_hi + b1 |  x],  slab_src = [h@W1_hj | -x]
    # -> g[:, :H] = hi@W1_hi + hj@W1_hj + b1,  g[:, H:] = x[dst] - x[src]
    g_ref[...] = (jnp.dot(oh_dst, slabd_ref[...], preferred_element_type=jnp.float32)
                  + jnp.dot(oh_src, slabs_ref[...], preferred_element_type=jnp.float32))
    proj = g_ref[:, :hdim]                                        # [TE, H]
    rel_x = g_ref[:, hdim:]                                       # [TE, 3]

    d = jnp.sqrt(jnp.sum(rel_x * rel_x, axis=-1, keepdims=True) + 1e-8)
    diff = d - off_ref[...]                                       # [TE, G]
    d_feat = jnp.exp(GAUSS_COEFF * diff * diff).astype(jnp.bfloat16)

    # edge_mlp: Linear(cat[hi, hj, d_feat, edge_attr]) -> SiLU -> Linear -> SiLU
    # (h and edge_attr parts pre-projected in the XLA wrapper)
    t1 = (proj
          + jnp.dot(d_feat, wdf_ref[...], preferred_element_type=jnp.float32)
          + eap_ref[...])
    a1 = _silu(t1).astype(jnp.bfloat16)
    mij = _silu(jnp.dot(a1, w2_ref[...], preferred_element_type=jnp.float32)
                + b2_ref[...])
    mij_b = mij.astype(jnp.bfloat16)

    # Merged heads: [x_mlp layer-1 | edge_inf] in a single MXU pass.
    t2_ref[...] = (jnp.dot(mij_b, wxi_ref[...], preferred_element_type=jnp.float32)
                   + bxi_ref[...])                                # [TE, H+1]
    v1 = _silu(t2_ref[:, :hdim]).astype(jnp.bfloat16)             # x_mlp hidden
    eij = jax.nn.sigmoid(t2_ref[:, hdim:])                        # edge_inf gate [TE,1]
    s = jnp.tanh(jnp.dot(v1, wx2_ref[...], preferred_element_type=jnp.float32))

    # Fused scatter payload [msg | xw] -> one [N, H+3] accumulator (single
    # [N,TE]@[TE,H+3] matmul instead of two).
    cat_ref[:, :hdim] = (mij * eij).astype(jnp.bfloat16)
    cat_ref[:, hdim:] = (rel_x * (pl.reciprocal(d + 1.0, approx=True) * s)
                         ).astype(jnp.bfloat16)
    acc_ref[...] += jnp.dot(oh_dst_t, cat_ref[...],
                            preferred_element_type=jnp.float32)

    @pl.when(step == pl.num_programs(1) - 1)
    def _epilogue():
        out_ref[...] = acc_ref[...]


def en_base_layer(h, x, src, dst, mask_ligand, edge_attr, params,
                  *, edge_tile=None, n_split=2):
    n, hdim = h.shape
    e = src.shape[0]
    gdim = params["offsets"].shape[1]

    # ---- generation-aware tile / VMEM sizing --------------------------------
    vmem_cap = _vmem_capacity_bytes()
    te = _pick_edge_tile(n, hdim, gdim, edge_tile, vmem_cap, e, n_split)
    tiles = _cdiv(e, te)
    tpc = _cdiv(tiles, n_split)                 # edge tiles per parallel partition
    e_pad = n_split * tpc * te
    pad = e_pad - e
    vmem_limit = int(min(vmem_cap - 8 * 2**20, 100 * 2**20))

    # pad with node id == n -> all-zero one-hot rows/columns (no contribution)
    src_p = jnp.pad(src.astype(jnp.int32), (0, pad), constant_values=n)
    dst_p = jnp.pad(dst.astype(jnp.int32), (0, pad), constant_values=n)
    src_col = src_p.reshape(e_pad, 1)
    dst_col = dst_p.reshape(e_pad, 1)
    dst_row = dst_p.reshape(n_split * tpc, 1, te)

    # ---- node-side / edge-attr pre-projection (XLA prologue) ----------------
    hp_dst = h @ params["w1_hi"] + params["b1"]           # bias folded in once
    hp_src = h @ params["w1_hj"]
    slab_dst = jnp.concatenate([hp_dst, x], axis=1).astype(jnp.bfloat16)   # [N,H+3]
    slab_src = jnp.concatenate([hp_src, -x], axis=1).astype(jnp.bfloat16)  # [N,H+3]
    ea_proj = jnp.pad((edge_attr.astype(jnp.float32) @ params["w1_ea"]
                       ).astype(jnp.bfloat16), ((0, pad), (0, 0)))         # [E_pad,H]

    wdf = params["w1_df"].astype(jnp.bfloat16)
    w2 = params["w2"].astype(jnp.bfloat16)
    wxi = jnp.concatenate([params["wx1"], params["w_inf"]], axis=1).astype(jnp.bfloat16)
    bxi = jnp.concatenate([params["bx1"], params["b_inf"]], axis=1)        # f32 [1,H+1]
    wx2 = params["wx2"].astype(jnp.bfloat16)

    rep = lambda a: pl.BlockSpec(a.shape, lambda c, i: (0,) * a.ndim)      # resident
    edge2 = lambda c, i: (c * tpc + i, 0)
    in_specs = [
        pl.BlockSpec((te, 1), edge2),                                      # src (col)
        pl.BlockSpec((te, 1), edge2),                                      # dst (col)
        pl.BlockSpec((None, 1, te), lambda c, i: (c * tpc + i, 0, 0)),     # dst (row)
        pl.BlockSpec((te, hdim), edge2),                                   # edge_attr@W1_ea
        rep(slab_dst), rep(slab_src), rep(params["offsets"]), rep(wdf),
        rep(w2), rep(params["b2"]), rep(wxi), rep(bxi), rep(wx2),
    ]
    out_specs = pl.BlockSpec((None, n, hdim + 3), lambda c, i: (c, 0, 0))
    out_shape = jax.ShapeDtypeStruct((n_split, n, hdim + 3), jnp.float32)

    partials = pl.pallas_call(
        egnn_edge_kernel,
        grid=(n_split, tpc),
        in_specs=in_specs,
        out_specs=out_specs,
        out_shape=out_shape,
        scratch_shapes=[pltpu.VMEM((te, hdim + 3), jnp.float32),   # gather result
                        pltpu.VMEM((te, hdim + 1), jnp.float32),   # merged-head output
                        pltpu.VMEM((te, hdim + 3), jnp.bfloat16),  # [msg | xw] payload
                        pltpu.VMEM((n, hdim + 3), jnp.float32)],   # scatter accumulator
        compiler_params=pltpu.CompilerParams(
            dimension_semantics=("parallel", "arbitrary"),
            vmem_limit_bytes=vmem_limit),
    )(src_col, dst_col, dst_row, ea_proj,
      slab_dst, slab_src, params["offsets"], wdf,
      w2, params["b2"], wxi, bxi, wx2)

    # ---- node update epilogue (XLA, O(N*H^2)) --------------------------------
    agg = jnp.sum(partials, axis=0)                      # [N, H+3]
    mi, dx = agg[:, :hdim], agg[:, hdim:]
    u1 = mi @ params["wn1_mi"] + h @ params["wn1_h"] + params["bn1"]
    h_out = h + (_silu(u1) @ params["wn2"] + params["bn2"])
    x_out = x + dx * mask_ligand.astype(jnp.float32)[:, None]
    return h_out, x_out


def init_params(key, hidden_dim, edge_feat_dim, num_r_gaussian):
    H, EF, G = hidden_dim, edge_feat_dim, num_r_gaussian
    assert G == len(FIXED_OFFSETS)   # fixed-offset GaussianSmearing => 20 gaussians
    ks = jax.random.split(key, 20)

    def lin(k, fan_in, shape):
        b = 1.0 / np.sqrt(fan_in)
        return jax.random.uniform(k, shape, jnp.float32, -b, b)

    in1 = 2 * H + EF + G
    return {
        "offsets": jnp.asarray(FIXED_OFFSETS, jnp.float32).reshape(1, G),
        # edge_mlp layer 1 (split along the concatenated input [hi|hj|d_feat|ea])
        "w1_hi": lin(ks[0], in1, (H, H)),
        "w1_hj": lin(ks[1], in1, (H, H)),
        "w1_df": lin(ks[2], in1, (G, H)),
        "w1_ea": lin(ks[3], in1, (EF, H)),
        "b1": lin(ks[4], in1, (1, H)),
        # edge_mlp layer 2
        "w2": lin(ks[5], H, (H, H)),
        "b2": lin(ks[6], H, (1, H)),
        # edge_inf
        "w_inf": lin(ks[7], H, (H, 1)),
        "b_inf": lin(ks[8], H, (1, 1)),
        # x_mlp
        "wx1": lin(ks[9], H, (H, H)),
        "bx1": lin(ks[10], H, (1, H)),
        # xavier_uniform(gain=0.001) on the final 1-output layer, no bias
        "wx2": 0.001 * np.sqrt(6.0 / (H + 1)) *
               jax.random.uniform(ks[11], (H, 1), jnp.float32, -1.0, 1.0),
        # node_mlp (split along the concatenated [mi, h] input)
        "wn1_mi": lin(ks[12], 2 * H, (H, H)),
        "wn1_h": lin(ks[13], 2 * H, (H, H)),
        "bn1": lin(ks[14], 2 * H, (1, H)),
        "wn2": lin(ks[15], H, (H, H)),
        "bn2": lin(ks[16], H, (1, H)),
    }


def reference(h, x, src, dst, mask_ligand, edge_attr, params):
    """Pure-JAX f32 reference mirroring the PyTorch forward."""
    hi, hj = h[dst], h[src]
    rel_x = x[dst] - x[src]
    d_sq = jnp.sum(rel_x ** 2, -1, keepdims=True)
    d = jnp.sqrt(d_sq + 1e-8)
    d_feat = jnp.exp(GAUSS_COEFF * (d - params["offsets"]) ** 2)
    t1 = (hi @ params["w1_hi"] + hj @ params["w1_hj"]
          + d_feat @ params["w1_df"] + edge_attr @ params["w1_ea"] + params["b1"])
    mij = _silu(_silu(t1) @ params["w2"] + params["b2"])
    eij = jax.nn.sigmoid(mij @ params["w_inf"] + params["b_inf"])
    mi = jnp.zeros_like(h).at[dst].add(mij * eij)
    u1 = mi @ params["wn1_mi"] + h @ params["wn1_h"] + params["bn1"]
    h_out = h + (_silu(u1) @ params["wn2"] + params["bn2"])
    v1 = _silu(mij @ params["wx1"] + params["bx1"])
    s = jnp.tanh(v1 @ params["wx2"])
    xw = rel_x / (d + 1.0) * s
    dxv = jnp.zeros((h.shape[0], 3), jnp.float32).at[dst].add(xw)
    x_out = x + dxv * mask_ligand[:, None]
    return h_out, x_out


if __name__ == "__main__":
    N, H, EF, G, E = 16, 32, 4, 20, 64
    key = jax.random.PRNGKey(0)
    k = jax.random.split(key, 8)
    h = jax.random.normal(k[0], (N, H), jnp.float32)
    x = jax.random.normal(k[1], (N, 3), jnp.float32)
    src = jax.random.randint(k[2], (E,), 0, N, dtype=jnp.int32)
    dst = jax.random.randint(k[3], (E,), 0, N, dtype=jnp.int32)
    mask_ligand = (jax.random.uniform(k[4], (N,)) > 0.5).astype(jnp.float32)
    edge_attr = jax.random.normal(k[5], (E, EF), jnp.float32)
    params = init_params(k[6], H, EF, G)

    h_out, x_out = en_base_layer(h, x, src, dst, mask_ligand, edge_attr, params)
    jax.block_until_ready((h_out, x_out))

    h_ref, x_ref = reference(h, x, src, dst, mask_ligand, edge_attr, params)
    np.testing.assert_allclose(np.asarray(h_out), np.asarray(h_ref), rtol=5e-2, atol=5e-2)
    np.testing.assert_allclose(np.asarray(x_out), np.asarray(x_ref), rtol=5e-2, atol=5e-2)
    print("KERNEL_OK")
</pallas_src>

<mosaic_0001>
module attributes {stable_mosaic.version = 11 : i64} {
  func.func @egnn_edge_kernel(%arg0: i32, %arg1: i32, %arg2: memref<128x1xi32, #tpu.memory_space<vmem>>, %arg3: memref<128x1xi32, #tpu.memory_space<vmem>>, %arg4: memref<1x1x128xi32, #tpu.memory_space<vmem>>, %arg5: memref<128x32xbf16, #tpu.memory_space<vmem>>, %arg6: memref<16x35xbf16, #tpu.memory_space<vmem>>, %arg7: memref<16x35xbf16, #tpu.memory_space<vmem>>, %arg8: memref<1x20xf32, #tpu.memory_space<vmem>>, %arg9: memref<20x32xbf16, #tpu.memory_space<vmem>>, %arg10: memref<32x32xbf16, #tpu.memory_space<vmem>>, %arg11: memref<1x32xf32, #tpu.memory_space<vmem>>, %arg12: memref<32x33xbf16, #tpu.memory_space<vmem>>, %arg13: memref<1x33xf32, #tpu.memory_space<vmem>>, %arg14: memref<32x1xbf16, #tpu.memory_space<vmem>>, %arg15: memref<1x16x35xf32, #tpu.memory_space<vmem>>, %arg16: memref<128x35xf32, #tpu.memory_space<vmem>>, %arg17: memref<128x33xf32, #tpu.memory_space<vmem>>, %arg18: memref<128x35xbf16, #tpu.memory_space<vmem>>, %arg19: memref<16x35xf32, #tpu.memory_space<vmem>>) attributes {dimension_semantics = [#tpu.dimension_semantics<parallel>, #tpu.dimension_semantics<arbitrary>], iteration_bounds = array<i64: 2, 1>, scalar_prefetch = 0 : i64, scratch_operands = 4 : i64, tpu.core_type = #tpu.core_type<tc>, window_params = [{transform_indices = @transform_0, window_bounds = array<i64: 128, 1>}, {transform_indices = @transform_1, window_bounds = array<i64: 128, 1>}, {transform_indices = @transform_2, window_bounds = array<i64: 1, 1, 128>}, {transform_indices = @transform_3, window_bounds = array<i64: 128, 32>}, {pipeline_mode = #tpu.pipeline_mode<synchronous>, transform_indices = @transform_4, window_bounds = array<i64: 16, 35>}, {pipeline_mode = #tpu.pipeline_mode<synchronous>, transform_indices = @transform_5, window_bounds = array<i64: 16, 35>}, {pipeline_mode = #tpu.pipeline_mode<synchronous>, transform_indices = @transform_6, window_bounds = array<i64: 1, 20>}, {pipeline_mode = #tpu.pipeline_mode<synchronous>, transform_indices = @transform_7, window_bounds = array<i64: 20, 32>}, {pipeline_mode = #tpu.pipeline_mode<synchronous>, transform_indices = @transform_8, window_bounds = array<i64: 32, 32>}, {pipeline_mode = #tpu.pipeline_mode<synchronous>, transform_indices = @transform_9, window_bounds = array<i64: 1, 32>}, {pipeline_mode = #tpu.pipeline_mode<synchronous>, transform_indices = @transform_10, window_bounds = array<i64: 32, 33>}, {pipeline_mode = #tpu.pipeline_mode<synchronous>, transform_indices = @transform_11, window_bounds = array<i64: 1, 33>}, {pipeline_mode = #tpu.pipeline_mode<synchronous>, transform_indices = @transform_12, window_bounds = array<i64: 32, 1>}, {transform_indices = @transform_13, window_bounds = array<i64: 1, 16, 35>}]} {
    %c0_i32 = arith.constant 0 : i32
    %0 = arith.cmpi eq, %arg1, %c0_i32 : i32
    %1 = arith.extui %0 : i1 to i32
    %c0_i32_0 = arith.constant 0 : i32
    %2 = arith.cmpi ne, %1, %c0_i32_0 : i32
    scf.if %2 {
      %cst_64 = arith.constant 0.000000e+00 : f32
      %115 = vector.broadcast %cst_64 : f32 to vector<16x35xf32>
      %c0_65 = arith.constant 0 : index
      %c0_66 = arith.constant 0 : index
      %116 = vector.load %arg19[%c0_65, %c0_66] : memref<16x35xf32, #tpu.memory_space<vmem>>, vector<16x35xf32>
      tpu.vector_store %arg19[%c0_65, %c0_66], %115 {strides = array<i32>} : memref<16x35xf32, #tpu.memory_space<vmem>>, vector<16x35xf32>,
    } else {
    }
    %3 = tpu.iota {dimensions = array<i32: 1>} : vector<128x16xi32>
    %4 = tpu.iota {dimensions = array<i32: 0>} : vector<16x128xi32>
    %c0 = arith.constant 0 : index
    %c0_1 = arith.constant 0 : index
    %5 = vector.load %arg3[%c0, %c0_1] : memref<128x1xi32, #tpu.memory_space<vmem>>, vector<128x1xi32>
    %6 = vector.broadcast %5 : vector<128x1xi32> to vector<128x16xi32>
    %7 = arith.cmpi eq, %3, %6 : vector<128x16xi32>
    %8 = arith.extui %7 : vector<128x16xi1> to vector<128x16xi32>
    %9 = arith.sitofp %8 : vector<128x16xi32> to vector<128x16xf32>
    %10 = arith.truncf %9 : vector<128x16xf32> to vector<128x16xbf16>
    %c0_2 = arith.constant 0 : index
    %c0_3 = arith.constant 0 : index
    %11 = vector.load %arg2[%c0_2, %c0_3] : memref<128x1xi32, #tpu.memory_space<vmem>>, vector<128x1xi32>
    %12 = vector.broadcast %11 : vector<128x1xi32> to vector<128x16xi32>
    %13 = arith.cmpi eq, %3, %12 : vector<128x16xi32>
    %14 = arith.extui %13 : vector<128x16xi1> to vector<128x16xi32>
    %15 = arith.sitofp %14 : vector<128x16xi32> to vector<128x16xf32>
    %16 = arith.truncf %15 : vector<128x16xf32> to vector<128x16xbf16>
    %c0_4 = arith.constant 0 : index
    %c0_5 = arith.constant 0 : index
    %c0_6 = arith.constant 0 : index
    %17 = vector.load %arg4[%c0_4, %c0_5, %c0_6] : memref<1x1x128xi32, #tpu.memory_space<vmem>>, vector<1x1x128xi32>
    %18 = vector.shape_cast %17 : vector<1x1x128xi32> to vector<1x128xi32>
    %19 = vector.broadcast %18 : vector<1x128xi32> to vector<16x128xi32>
    %20 = arith.cmpi eq, %4, %19 : vector<16x128xi32>
    %21 = arith.extui %20 : vector<16x128xi1> to vector<16x128xi32>
    %22 = arith.sitofp %21 : vector<16x128xi32> to vector<16x128xf32>
    %23 = arith.truncf %22 : vector<16x128xf32> to vector<16x128xbf16>
    %c0_7 = arith.constant 0 : index
    %c0_8 = arith.constant 0 : index
    %24 = vector.load %arg6[%c0_7, %c0_8] : memref<16x35xbf16, #tpu.memory_space<vmem>>, vector<16x35xbf16>
    %cst = arith.constant dense<0.000000e+00> : vector<128x35xf32>
    %25 = tpu.matmul %10, %24, %cst {dimension_numbers = #tpu.dot_dimension_numbers<[1], [0], [0], [1], [0, 0, 1, 1], [], []>} : vector<128x16xbf16>, vector<16x35xbf16>, vector<128x35xf32> -> vector<128x35xf32>
    %c0_9 = arith.constant 0 : index
    %c0_10 = arith.constant 0 : index
    %26 = vector.load %arg7[%c0_9, %c0_10] : memref<16x35xbf16, #tpu.memory_space<vmem>>, vector<16x35xbf16>
    %cst_11 = arith.constant dense<0.000000e+00> : vector<128x35xf32>
    %27 = tpu.matmul %16, %26, %cst_11 {dimension_numbers = #tpu.dot_dimension_numbers<[1], [0], [0], [1], [0, 0, 1, 1], [], []>} : vector<128x16xbf16>, vector<16x35xbf16>, vector<128x35xf32> -> vector<128x35xf32>
    %28 = arith.addf %25, %27 : vector<128x35xf32>
    %c0_12 = arith.constant 0 : index
    %c0_13 = arith.constant 0 : index
    %29 = vector.load %arg16[%c0_12, %c0_13] : memref<128x35xf32, #tpu.memory_space<vmem>>, vector<128x35xf32>
    tpu.vector_store %arg16[%c0_12, %c0_13], %28 {strides = array<i32>} : memref<128x35xf32, #tpu.memory_space<vmem>>, vector<128x35xf32>,
    %c0_14 = arith.constant 0 : index
    %c0_15 = arith.constant 0 : index
    %30 = vector.load %arg16[%c0_14, %c0_15] : memref<128x35xf32, #tpu.memory_space<vmem>>, vector<128x32xf32>
    %c0_16 = arith.constant 0 : index
    %c32 = arith.constant 32 : index
    %31 = vector.load %arg16[%c0_16, %c32] : memref<128x35xf32, #tpu.memory_space<vmem>>, vector<128x3xf32>
    %32 = arith.mulf %31, %31 : vector<128x3xf32>
    %cst_17 = arith.constant dense<0.000000e+00> : vector<128xf32>
    %33 = vector.multi_reduction <add>, %32, %cst_17 [1] : vector<128x3xf32> to vector<128xf32>
    %34 = vector.shape_cast %33 : vector<128xf32> to vector<128x1xf32>
    %cst_18 = arith.constant 9.99999993E-9 : f32
    %35 = vector.broadcast %cst_18 : f32 to vector<128x1xf32>
    %36 = arith.addf %34, %35 : vector<128x1xf32>
    %37 = math.sqrt %36 : vector<128x1xf32>
    %c0_19 = arith.constant 0 : index
    %c0_20 = arith.constant 0 : index
    %38 = vector.load %arg8[%c0_19, %c0_20] : memref<1x20xf32, #tpu.memory_space<vmem>>, vector<1x20xf32>
    %39 = vector.broadcast %37 : vector<128x1xf32> to vector<128x20xf32>
    %40 = vector.broadcast %38 : vector<1x20xf32> to vector<128x20xf32>
    %41 = arith.subf %39, %40 : vector<128x20xf32>
    %cst_21 = arith.constant -5.000000e-01 : f32
    %42 = vector.broadcast %cst_21 : f32 to vector<128x20xf32>
    %43 = arith.mulf %42, %41 : vector<128x20xf32>
    %44 = arith.mulf %43, %41 : vector<128x20xf32>
    %45 = math.exp %44 : vector<128x20xf32>
    %46 = arith.truncf %45 : vector<128x20xf32> to vector<128x20xbf16>
    %c0_22 = arith.constant 0 : index
    %c0_23 = arith.constant 0 : index
    %47 = vector.load %arg9[%c0_22, %c0_23] : memref<20x32xbf16, #tpu.memory_space<vmem>>, vector<20x32xbf16>
    %cst_24 = arith.constant dense<0.000000e+00> : vector<128x32xf32>
    %48 = tpu.matmul %46, %47, %cst_24 {dimension_numbers = #tpu.dot_dimension_numbers<[1], [0], [0], [1], [0, 0, 1, 1], [], []>} : vector<128x20xbf16>, vector<20x32xbf16>, vector<128x32xf32> -> vector<128x32xf32>
    %49 = arith.addf %30, %48 : vector<128x32xf32>
    %c0_25 = arith.constant 0 : index
    %c0_26 = arith.constant 0 : index
    %50 = vector.load %arg5[%c0_25, %c0_26] : memref<128x32xbf16, #tpu.memory_space<vmem>>, vector<128x32xbf16>
    %51 = arith.extf %50 : vector<128x32xbf16> to vector<128x32xf32>
    %52 = arith.addf %49, %51 : vector<128x32xf32>
    %53 = arith.negf %52 : vector<128x32xf32>
    %54 = math.exp %53 : vector<128x32xf32>
    %cst_27 = arith.constant 1.000000e+00 : f32
    %55 = vector.broadcast %cst_27 : f32 to vector<128x32xf32>
    %56 = arith.addf %55, %54 : vector<128x32xf32>
    %57 = arith.divf %55, %56 : vector<128x32xf32>
    %58 = arith.mulf %52, %57 : vector<128x32xf32>
    %59 = arith.truncf %58 : vector<128x32xf32> to vector<128x32xbf16>
    %c0_28 = arith.constant 0 : index
    %c0_29 = arith.constant 0 : index
    %60 = vector.load %arg10[%c0_28, %c0_29] : memref<32x32xbf16, #tpu.memory_space<vmem>>, vector<32x32xbf16>
    %cst_30 = arith.constant dense<0.000000e+00> : vector<128x32xf32>
    %61 = tpu.matmul %59, %60, %cst_30 {dimension_numbers = #tpu.dot_dimension_numbers<[1], [0], [0], [1], [0, 0, 1, 1], [], []>} : vector<128x32xbf16>, vector<32x32xbf16>, vector<128x32xf32> -> vector<128x32xf32>
    %c0_31 = arith.constant 0 : index
    %c0_32 = arith.constant 0 : index
    %62 = vector.load %arg11[%c0_31, %c0_32] : memref<1x32xf32, #tpu.memory_space<vmem>>, vector<1x32xf32>
    %63 = vector.broadcast %62 : vector<1x32xf32> to vector<128x32xf32>
    %64 = arith.addf %61, %63 : vector<128x32xf32>
    %65 = arith.negf %64 : vector<128x32xf32>
    %66 = math.exp %65 : vector<128x32xf32>
    %cst_33 = arith.constant 1.000000e+00 : f32
    %67 = vector.broadcast %cst_33 : f32 to vector<128x32xf32>
    %68 = arith.addf %67, %66 : vector<128x32xf32>
    %69 = arith.divf %67, %68 : vector<128x32xf32>
    %70 = arith.mulf %64, %69 : vector<128x32xf32>
    %71 = arith.truncf %70 : vector<128x32xf32> to vector<128x32xbf16>
    %c0_34 = arith.constant 0 : index
    %c0_35 = arith.constant 0 : index
    %72 = vector.load %arg12[%c0_34, %c0_35] : memref<32x33xbf16, #tpu.memory_space<vmem>>, vector<32x33xbf16>
    %cst_36 = arith.constant dense<0.000000e+00> : vector<128x33xf32>
    %73 = tpu.matmul %71, %72, %cst_36 {dimension_numbers = #tpu.dot_dimension_numbers<[1], [0], [0], [1], [0, 0, 1, 1], [], []>} : vector<128x32xbf16>, vector<32x33xbf16>, vector<128x33xf32> -> vector<128x33xf32>
    %c0_37 = arith.constant 0 : index
    %c0_38 = arith.constant 0 : index
    %74 = vector.load %arg13[%c0_37, %c0_38] : memref<1x33xf32, #tpu.memory_space<vmem>>, vector<1x33xf32>
    %75 = vector.broadcast %74 : vector<1x33xf32> to vector<128x33xf32>
    %76 = arith.addf %73, %75 : vector<128x33xf32>
    %c0_39 = arith.constant 0 : index
    %c0_40 = arith.constant 0 : index
    %77 = vector.load %arg17[%c0_39, %c0_40] : memref<128x33xf32, #tpu.memory_space<vmem>>, vector<128x33xf32>
    tpu.vector_store %arg17[%c0_39, %c0_40], %76 {strides = array<i32>} : memref<128x33xf32, #tpu.memory_space<vmem>>, vector<128x33xf32>,
    %c0_41 = arith.constant 0 : index
    %c0_42 = arith.constant 0 : index
    %78 = vector.load %arg17[%c0_41, %c0_42] : memref<128x33xf32, #tpu.memory_space<vmem>>, vector<128x32xf32>
    %79 = arith.negf %78 : vector<128x32xf32>
    %80 = math.exp %79 : vector<128x32xf32>
    %cst_43 = arith.constant 1.000000e+00 : f32
    %81 = vector.broadcast %cst_43 : f32 to vector<128x32xf32>
    %82 = arith.addf %81, %80 : vector<128x32xf32>
    %83 = arith.divf %81, %82 : vector<128x32xf32>
    %84 = arith.mulf %78, %83 : vector<128x32xf32>
    %85 = arith.truncf %84 : vector<128x32xf32> to vector<128x32xbf16>
    %c0_44 = arith.constant 0 : index
    %c32_45 = arith.constant 32 : index
    %86 = vector.load %arg17[%c0_44, %c32_45] : memref<128x33xf32, #tpu.memory_space<vmem>>, vector<128x1xf32>
    %87 = arith.negf %86 : vector<128x1xf32>
    %88 = math.exp %87 : vector<128x1xf32>
    %cst_46 = arith.constant 1.000000e+00 : f32
    %89 = vector.broadcast %cst_46 : f32 to vector<128x1xf32>
    %90 = arith.addf %89, %88 : vector<128x1xf32>
    %91 = arith.divf %89, %90 : vector<128x1xf32>
    %c0_47 = arith.constant 0 : index
    %c0_48 = arith.constant 0 : index
    %92 = vector.load %arg14[%c0_47, %c0_48] : memref<32x1xbf16, #tpu.memory_space<vmem>>, vector<32x1xbf16>
    %cst_49 = arith.constant dense<0.000000e+00> : vector<128x1xf32>
    %93 = tpu.matmul %85, %92, %cst_49 {dimension_numbers = #tpu.dot_dimension_numbers<[1], [0], [0], [1], [0, 0, 1, 1], [], []>} : vector<128x32xbf16>, vector<32x1xbf16>, vector<128x1xf32> -> vector<128x1xf32>
    %94 = math.tanh %93 : vector<128x1xf32>
    %95 = vector.broadcast %91 : vector<128x1xf32> to vector<128x32xf32>
    %96 = arith.mulf %70, %95 : vector<128x32xf32>
    %97 = arith.truncf %96 : vector<128x32xf32> to vector<128x32xbf16>
    %c0_50 = arith.constant 0 : index
    %c0_51 = arith.constant 0 : index
    %98 = vector.load %arg18[%c0_50, %c0_51] : memref<128x35xbf16, #tpu.memory_space<vmem>>, vector<128x32xbf16>
    tpu.vector_store %arg18[%c0_50, %c0_51], %97 {strides = array<i32>} : memref<128x35xbf16, #tpu.memory_space<vmem>>, vector<128x32xbf16>,
    %cst_52 = arith.constant 1.000000e+00 : f32
    %99 = vector.broadcast %cst_52 : f32 to vector<128x1xf32>
    %100 = arith.addf %37, %99 : vector<128x1xf32>
    %101 = tpu.reciprocal %100 {approx = true} : vector<128x1xf32> -> vector<128x1xf32>
    %102 = arith.mulf %101, %94 : vector<128x1xf32>
    %103 = vector.broadcast %102 : vector<128x1xf32> to vector<128x3xf32>
    %104 = arith.mulf %31, %103 : vector<128x3xf32>
    %105 = arith.truncf %104 : vector<128x3xf32> to vector<128x3xbf16>
    %c0_53 = arith.constant 0 : index
    %c32_54 = arith.constant 32 : index
    %106 = vector.load %arg18[%c0_53, %c32_54] : memref<128x35xbf16, #tpu.memory_space<vmem>>, vector<128x3xbf16>
    tpu.vector_store %arg18[%c0_53, %c32_54], %105 {strides = array<i32>} : memref<128x35xbf16, #tpu.memory_space<vmem>>, vector<128x3xbf16>,
    %c0_55 = arith.constant 0 : index
    %c0_56 = arith.constant 0 : index
    %107 = vector.load %arg19[%c0_55, %c0_56] : memref<16x35xf32, #tpu.memory_space<vmem>>, vector<16x35xf32>
    %c0_57 = arith.constant 0 : index
    %c0_58 = arith.constant 0 : index
    %108 = vector.load %arg18[%c0_57, %c0_58] : memref<128x35xbf16, #tpu.memory_space<vmem>>, vector<128x35xbf16>
    %cst_59 = arith.constant dense<0.000000e+00> : vector<16x35xf32>
    %109 = tpu.matmul %23, %108, %cst_59 {dimension_numbers = #tpu.dot_dimension_numbers<[1], [0], [0], [1], [0, 0, 1, 1], [], []>} : vector<16x128xbf16>, vector<128x35xbf16>, vector<16x35xf32> -> vector<16x35xf32>
    %110 = arith.addf %107, %109 : vector<16x35xf32>
    %c0_60 = arith.constant 0 : index
    %c0_61 = arith.constant 0 : index
    %111 = vector.load %arg19[%c0_60, %c0_61] : memref<16x35xf32, #tpu.memory_space<vmem>>, vector<16x35xf32>
    tpu.vector_store %arg19[%c0_60, %c0_61], %110 {strides = array<i32>} : memref<16x35xf32, #tpu.memory_space<vmem>>, vector<16x35xf32>,
    %c0_i32_62 = arith.constant 0 : i32
    %112 = arith.cmpi eq, %arg1, %c0_i32_62 : i32
    %113 = arith.extui %112 : i1 to i32
    %c0_i32_63 = arith.constant 0 : i32
    %114 = arith.cmpi ne, %113, %c0_i32_63 : i32
    scf.if %114 {
      %c0_64 = arith.constant 0 : index
      %c0_65 = arith.constant 0 : index
      %115 = vector.load %arg19[%c0_64, %c0_65] : memref<16x35xf32, #tpu.memory_space<vmem>>, vector<16x35xf32>
      %c0_66 = arith.constant 0 : index
      %c0_67 = arith.constant 0 : index
      %c0_68 = arith.constant 0 : index
      %116 = vector.load %arg15[%c0_66, %c0_67, %c0_68] : memref<1x16x35xf32, #tpu.memory_space<vmem>>, vector<1x16x35xf32>
      %117 = vector.shape_cast %116 : vector<1x16x35xf32> to vector<16x35xf32>
      %118 = vector.shape_cast %115 : vector<16x35xf32> to vector<1x16x35xf32>
      tpu.vector_store %arg15[%c0_66, %c0_67, %c0_68], %118 {strides = array<i32>} : memref<1x16x35xf32, #tpu.memory_space<vmem>>, vector<1x16x35xf32>,
    } else {
    }
    return
  }
  func.func @transform_0(%arg0: i32, %arg1: i32) -> (i32, i32) {
    %c1_i32 = arith.constant 1 : i32
    %0 = arith.muli %arg0, %c1_i32 : i32
    %1 = arith.addi %0, %arg1 : i32
    %c0_i32 = arith.constant 0 : i32
    %c0_i32_0 = arith.constant 0 : i32
    return %1, %c0_i32 : i32, i32
  }
  func.func @transform_1(%arg0: i32, %arg1: i32) -> (i32, i32) {
    %c1_i32 = arith.constant 1 : i32
    %0 = arith.muli %arg0, %c1_i32 : i32
    %1 = arith.addi %0, %arg1 : i32
    %c0_i32 = arith.constant 0 : i32
    %c0_i32_0 = arith.constant 0 : i32
    return %1, %c0_i32 : i32, i32
  }
  func.func @transform_2(%arg0: i32, %arg1: i32) -> (i32, i32, i32) {
    %c1_i32 = arith.constant 1 : i32
    %0 = arith.muli %arg0, %c1_i32 : i32
    %1 = arith.addi %0, %arg1 : i32
    %c0_i32 = arith.constant 0 : i32
    %c0_i32_0 = arith.constant 0 : i32
    %c0_i32_1 = arith.constant 0 : i32
    return %1, %c0_i32, %c0_i32_0 : i32, i32, i32
  }
  func.func @transform_3(%arg0: i32, %arg1: i32) -> (i32, i32) {
    %c1_i32 = arith.constant 1 : i32
    %0 = arith.muli %arg0, %c1_i32 : i32
    %1 = arith.addi %0, %arg1 : i32
    %c0_i32 = arith.constant 0 : i32
    %c0_i32_0 = arith.constant 0 : i32
    return %1, %c0_i32 : i32, i32
  }
  func.func @transform_4(%arg0: i32, %arg1: i32) -> (i32, i32) {
    %c0_i32 = arith.constant 0 : i32
    %c0_i32_0 = arith.constant 0 : i32
    %c0_i32_1 = arith.constant 0 : i32
    return %c0_i32, %c0_i32_0 : i32, i32
  }
  func.func @transform_5(%arg0: i32, %arg1: i32) -> (i32, i32) {
    %c0_i32 = arith.constant 0 : i32
    %c0_i32_0 = arith.constant 0 : i32
    %c0_i32_1 = arith.constant 0 : i32
    return %c0_i32, %c0_i32_0 : i32, i32
  }
  func.func @transform_6(%arg0: i32, %arg1: i32) -> (i32, i32) {
    %c0_i32 = arith.constant 0 : i32
    %c0_i32_0 = arith.constant 0 : i32
    %c0_i32_1 = arith.constant 0 : i32
    return %c0_i32, %c0_i32_0 : i32, i32
  }
  func.func @transform_7(%arg0: i32, %arg1: i32) -> (i32, i32) {
    %c0_i32 = arith.constant 0 : i32
    %c0_i32_0 = arith.constant 0 : i32
    %c0_i32_1 = arith.constant 0 : i32
    return %c0_i32, %c0_i32_0 : i32, i32
  }
  func.func @transform_8(%arg0: i32, %arg1: i32) -> (i32, i32) {
    %c0_i32 = arith.constant 0 : i32
    %c0_i32_0 = arith.constant 0 : i32
    %c0_i32_1 = arith.constant 0 : i32
    return %c0_i32, %c0_i32_0 : i32, i32
  }
  func.func @transform_9(%arg0: i32, %arg1: i32) -> (i32, i32) {
    %c0_i32 = arith.constant 0 : i32
    %c0_i32_0 = arith.constant 0 : i32
    %c0_i32_1 = arith.constant 0 : i32
    return %c0_i32, %c0_i32_0 : i32, i32
  }
  func.func @transform_10(%arg0: i32, %arg1: i32) -> (i32, i32) {
    %c0_i32 = arith.constant 0 : i32
    %c0_i32_0 = arith.constant 0 : i32
    %c0_i32_1 = arith.constant 0 : i32
    return %c0_i32, %c0_i32_0 : i32, i32
  }
  func.func @transform_11(%arg0: i32, %arg1: i32) -> (i32, i32) {
    %c0_i32 = arith.constant 0 : i32
    %c0_i32_0 = arith.constant 0 : i32
    %c0_i32_1 = arith.constant 0 : i32
    return %c0_i32, %c0_i32_0 : i32, i32
  }
  func.func @transform_12(%arg0: i32, %arg1: i32) -> (i32, i32) {
    %c0_i32 = arith.constant 0 : i32
    %c0_i32_0 = arith.constant 0 : i32
    %c0_i32_1 = arith.constant 0 : i32
    return %c0_i32, %c0_i32_0 : i32, i32
  }
  func.func @transform_13(%arg0: i32, %arg1: i32) -> (i32, i32, i32) {
    %c0_i32 = arith.constant 0 : i32
    %c0_i32_0 = arith.constant 0 : i32
    %c0_i32_1 = arith.constant 0 : i32
    return %arg0, %c0_i32, %c0_i32_0 : i32, i32, i32
  }
}

</mosaic_0001>

<llo_original>
// kernel: tpu_custom_call.1
$region0: #{tpu_custom_call.1}
  #allocation0 [shape = 'u32[]', space=smem, size = 0x4, offset = 0x4, fixed_abs, tag = 'smem constant byte address 0x4 - core index']
  #allocation1 [shape = 'u32[144,128]{1,0:T(1,128)}', space=vmem, size = 0x12000, scoped, tag = 'internal scratch']
  #allocation2 [shape = 'f32[128,35]{1,0:T(8,128)}', space=vmem, size = 0x10000, scoped, tag = 'scratch operand']
  #allocation3 [shape = 'f32[128,33]{1,0:T(8,128)}', space=vmem, size = 0x10000, scoped, tag = 'scratch operand']
  #allocation4 [shape = 'bf16[128,35]{1,0:T(16,128)(2,1)}', space=vmem, size = 0x8000, scoped, tag = 'scratch operand']
  #allocation5 [shape = 'f32[16,35]{1,0:T(8,128)}', space=vmem, size = 0x2000, scoped, tag = 'scratch operand']
  %s0 = inlined_call_operand.vmem [shape: s32[256,1], index: 0, kind: input, shape index: {}]
  %s1 = inlined_call_operand.vmem [shape: s32[256,1], index: 1, kind: input, shape index: {}]
  %s2 = inlined_call_operand.vmem [shape: s32[2,1,128], index: 2, kind: input, shape index: {}]
  %s3 = inlined_call_operand.vmem [shape: bf16[256,32], index: 3, kind: input, shape index: {}]
  %s4 = inlined_call_operand.vmem [shape: bf16[16,35], index: 4, kind: input, shape index: {}]
  %s5 = inlined_call_operand.vmem [shape: bf16[16,35], index: 5, kind: input, shape index: {}]
  %s6 = inlined_call_operand.vmem [shape: f32[1,20], index: 6, kind: input, shape index: {}]
  %s7 = inlined_call_operand.vmem [shape: bf16[20,32], index: 7, kind: input, shape index: {}]
  %s8 = inlined_call_operand.vmem [shape: bf16[32,32], index: 8, kind: input, shape index: {}]
  %s9 = inlined_call_operand.vmem [shape: f32[1,32], index: 9, kind: input, shape index: {}]
  %s10 = inlined_call_operand.vmem [shape: bf16[32,33], index: 10, kind: input, shape index: {}]
  %s11 = inlined_call_operand.vmem [shape: f32[1,33], index: 11, kind: input, shape index: {}]
  %s12 = inlined_call_operand.vmem [shape: bf16[32,1], index: 12, kind: input, shape index: {}]
  %s13 = inlined_call_operand.hbm [shape: f32[2,16,35], index: 13, kind: output, shape index: {}]
  %s14 = sld [smem:[#allocation0]]
  $region93: #{tpu_custom_call.1} parent=0
    _
  %s16 = ssub.s32 1, %s14
  %s17 = scalar_select 0, %s16, %s14
  $region1: #{tpu_custom_call.1} parent=0
    #allocation6 [shape = 'u8[16384]{0}', space=vmem, size = 0x4000, scoped, tag = 'output window, operand 0']
    #allocation7 [shape = 's32[2]{0}', space=sflag, size = 0x8, scoped, tag = 'scoped memory for tpu_custom_call.1']
    %18 = vsyncpa [#allocation7], 0
    %s19 = scalar_lea.sflag [#allocation7], 1
    %20 = vsyncpa %s19, 0
    loop: start=0, step=1, limit=4
    $region2: #{tpu_custom_call.1} parent=1 // loop_pre_header
      _
    $region3: #{tpu_custom_call.1} parent=1 // loop_header
      %s22 = sphi 0, %s26
      %p23 = scmp.ge.s32.totalorder %s22, 4
      %s29 = sphi 0, %s41
      %s30 = sphi 0, %s37
      %s31 = sphi 0, %s29
      %s32 = sphi 0, %s30
      %s33 = sphi 0, %s31
      %s34 = sphi 0, %s32
      %s46 = sphi 0, %s48
      %s49 = sphi 0, %s46
      %s50 = sphi 0, %s49
      %s66 = sphi 0, %s50
      %s74 = sphi 0, %s76
      %s77 = sphi 0, %s74
      %s78 = sphi 0, %s77
      %s94 = sphi 0, %s78
      %s102 = sphi 0, %s104
      %s105 = sphi 0, %s102
      %s106 = sphi 0, %s105
      %s122 = sphi 0, %s106
      %s130 = sphi 0, %s132
      %s133 = sphi 0, %s130
      %s134 = sphi 0, %s133
      %s150 = sphi 0, %s134
      %s154 = sphi 0, %s154
      %s156 = sphi 0, %s154
      %s157 = sphi 0, %s156
      %s171 = sphi 0, %s157
      %s175 = sphi 0, %s175
      %s177 = sphi 0, %s175
      %s178 = sphi 0, %s177
      %s192 = sphi 0, %s178
      %s196 = sphi 0, %s196
      %s198 = sphi 0, %s196
      %s199 = sphi 0, %s198
      %s213 = sphi 0, %s199
      %s217 = sphi 0, %s217
      %s219 = sphi 0, %s217
      %s220 = sphi 0, %s219
      %s234 = sphi 0, %s220
      %s238 = sphi 0, %s238
      %s240 = sphi 0, %s238
      %s241 = sphi 0, %s240
      %s255 = sphi 0, %s241
      %s259 = sphi 0, %s259
      %s261 = sphi 0, %s259
      %s262 = sphi 0, %s261
      %s276 = sphi 0, %s262
      %s280 = sphi 0, %s280
      %s282 = sphi 0, %s280
      %s283 = sphi 0, %s282
      %s297 = sphi 0, %s283
      %s301 = sphi 0, %s301
      %s303 = sphi 0, %s301
      %s304 = sphi 0, %s303
      %s318 = sphi 0, %s304
      %s322 = sphi 0, %s322
      %s324 = sphi 0, %s322
      %s325 = sphi 0, %s324
      %s339 = sphi 0, %s325
      %s345 = sphi 0, %s347
      %s348 = sphi 0, %s345
      %s349 = sphi 0, %s348
      %s365 = sphi 0, %s349
    $region4: #{tpu_custom_call.1} parent=1 // loop_header_branch
      %25 = sbr.rel (%p23) target = $region8
    $region5: #{tpu_custom_call.1} parent=1 // loop_body
      %s27 = ssub.s32 %s22, 1
      %s28 = ssub.s32 %s22, 2
      %s35 = sadd.s32 1, %s30
      %p36 = scmp.ge.s32.totalorder %s35, 1
      %s37 = scalar_select %p36, 0, %s35
      %s38 = sadd.s32 1, %s29
      %s39 = scalar_select %p36, %s38, %s29
      %p40 = scmp.ge.s32.totalorder %s39, 2
      %s41 = scalar_select %p40, 0, %s39
      %s42 = sadd.s32 %s29, %s30
      %s43 = sadd.s32 %s41, %s37
      %s44 = ssub.s32 %s42, %s43
      %p45 = scmp.eq.s32.totalorder %s44, 0
      %s47 = sadd.s32 %s46, 1
      %s48 = scalar_select %p45, %s46, %s47
      %p51 = pneg %p45
      %p52 = scmp.eq.s32.totalorder %s22, 1
      %p53 = por %p51, %p52
      %p54 = scmp.ne.s32.totalorder %s46, %s49
      %p55 = scmp.eq.s32.totalorder %s22, 0
      %p56 = por %p54, %p55
      %p57 = scmp.ne.s32.totalorder %s46, %s49
      %p58 = scmp.eq.s32.totalorder %s27, 1
      %p59 = por %p57, %p58
      %p60 = scmp.ne.s32.totalorder %s49, %s50
      %p61 = scmp.eq.s32.totalorder %s27, 0
      %p62 = por %p60, %p61
      %p63 = scmp.ne.s32.totalorder %s49, %s50
      %p64 = scmp.eq.s32.totalorder %s28, 1
      %p65 = por %p63, %p64
      %p67 = scmp.ne.s32.totalorder %s50, %s66
      %p68 = scmp.eq.s32.totalorder %s28, 0
      %p69 = por %p67, %p68
      %s70 = sadd.s32 %s29, %s30
      %s71 = sadd.s32 %s41, %s37
      %s72 = ssub.s32 %s70, %s71
      %p73 = scmp.eq.s32.totalorder %s72, 0
      %s75 = sadd.s32 %s74, 1
      %s76 = scalar_select %p73, %s74, %s75
      %p79 = pneg %p73
      %p80 = scmp.eq.s32.totalorder %s22, 1
      %p81 = por %p79, %p80
      %p82 = scmp.ne.s32.totalorder %s74, %s77
      %p83 = scmp.eq.s32.totalorder %s22, 0
      %p84 = por %p82, %p83
      %p85 = scmp.ne.s32.totalorder %s74, %s77
      %p86 = scmp.eq.s32.totalorder %s27, 1
      %p87 = por %p85, %p86
      %p88 = scmp.ne.s32.totalorder %s77, %s78
      %p89 = scmp.eq.s32.totalorder %s27, 0
      %p90 = por %p88, %p89
      %p91 = scmp.ne.s32.totalorder %s77, %s78
      %p92 = scmp.eq.s32.totalorder %s28, 1
      %p93 = por %p91, %p92
      %p95 = scmp.ne.s32.totalorder %s78, %s94
      %p96 = scmp.eq.s32.totalorder %s28, 0
      %p97 = por %p95, %p96
      %s98 = sadd.s32 %s29, %s30
      %s99 = sadd.s32 %s41, %s37
      %s100 = ssub.s32 %s98, %s99
      %p101 = scmp.eq.s32.totalorder %s100, 0
      %s103 = sadd.s32 %s102, 1
      %s104 = scalar_select %p101, %s102, %s103
      %p107 = pneg %p101
      %p108 = scmp.eq.s32.totalorder %s22, 1
      %p109 = por %p107, %p108
      %p110 = scmp.ne.s32.totalorder %s102, %s105
      %p111 = scmp.eq.s32.totalorder %s22, 0
      %p112 = por %p110, %p111
      %p113 = scmp.ne.s32.totalorder %s102, %s105
      %p114 = scmp.eq.s32.totalorder %s27, 1
      %p115 = por %p113, %p114
      %p116 = scmp.ne.s32.totalorder %s105, %s106
      %p117 = scmp.eq.s32.totalorder %s27, 0
      %p118 = por %p116, %p117
      %p119 = scmp.ne.s32.totalorder %s105, %s106
      %p120 = scmp.eq.s32.totalorder %s28, 1
      %p121 = por %p119, %p120
      %p123 = scmp.ne.s32.totalorder %s106, %s122
      %p124 = scmp.eq.s32.totalorder %s28, 0
      %p125 = por %p123, %p124
      %s126 = sadd.s32 %s29, %s30
      %s127 = sadd.s32 %s41, %s37
      %s128 = ssub.s32 %s126, %s127
      %p129 = scmp.eq.s32.totalorder %s128, 0
      %s131 = sadd.s32 %s130, 1
      %s132 = scalar_select %p129, %s130, %s131
      %p135 = pneg %p129
      %p136 = scmp.eq.s32.totalorder %s22, 1
      %p137 = por %p135, %p136
      %p138 = scmp.ne.s32.totalorder %s130, %s133
      %p139 = scmp.eq.s32.totalorder %s22, 0
      %p140 = por %p138, %p139
      %p141 = scmp.ne.s32.totalorder %s130, %s133
      %p142 = scmp.eq.s32.totalorder %s27, 1
      %p143 = por %p141, %p142
      %p144 = scmp.ne.s32.totalorder %s133, %s134
      %p145 = scmp.eq.s32.totalorder %s27, 0
      %p146 = por %p144, %p145
      %p147 = scmp.ne.s32.totalorder %s133, %s134
      %p148 = scmp.eq.s32.totalorder %s28, 1
      %p149 = por %p147, %p148
      %p151 = scmp.ne.s32.totalorder %s134, %s150
      %p152 = scmp.eq.s32.totalorder %s28, 0
      %p153 = por %p151, %p152
      %s155 = sadd.s32 %s154, 1
      %p158 = scmp.eq.s32.totalorder %s22, 1
      %p159 = scmp.ne.s32.totalorder %s154, %s156
      %p160 = scmp.eq.s32.totalorder %s22, 0
      %p161 = por %p159, %p160
      %p162 = scmp.ne.s32.totalorder %s154, %s156
      %p163 = scmp.eq.s32.totalorder %s27, 1
      %p164 = por %p162, %p163
      %p165 = scmp.ne.s32.totalorder %s156, %s157
      %p166 = scmp.eq.s32.totalorder %s27, 0
      %p167 = por %p165, %p166
      %p168 = scmp.ne.s32.totalorder %s156, %s157
      %p169 = scmp.eq.s32.totalorder %s28, 1
      %p170 = por %p168, %p169
      %p172 = scmp.ne.s32.totalorder %s157, %s171
      %p173 = scmp.eq.s32.totalorder %s28, 0
      %p174 = por %p172, %p173
      %s176 = sadd.s32 %s175, 1
      %p179 = scmp.eq.s32.totalorder %s22, 1
      %p180 = scmp.ne.s32.totalorder %s175, %s177
      %p181 = scmp.eq.s32.totalorder %s22, 0
      %p182 = por %p180, %p181
      %p183 = scmp.ne.s32.totalorder %s175, %s177
      %p184 = scmp.eq.s32.totalorder %s27, 1
      %p185 = por %p183, %p184
      %p186 = scmp.ne.s32.totalorder %s177, %s178
      %p187 = scmp.eq.s32.totalorder %s27, 0
      %p188 = por %p186, %p187
      %p189 = scmp.ne.s32.totalorder %s177, %s178
      %p190 = scmp.eq.s32.totalorder %s28, 1
      %p191 = por %p189, %p190
      %p193 = scmp.ne.s32.totalorder %s178, %s192
      %p194 = scmp.eq.s32.totalorder %s28, 0
      %p195 = por %p193, %p194
      %s197 = sadd.s32 %s196, 1
      %p200 = scmp.eq.s32.totalorder %s22, 1
      %p201 = scmp.ne.s32.totalorder %s196, %s198
      %p202 = scmp.eq.s32.totalorder %s22, 0
      %p203 = por %p201, %p202
      %p204 = scmp.ne.s32.totalorder %s196, %s198
      %p205 = scmp.eq.s32.totalorder %s27, 1
      %p206 = por %p204, %p205
      %p207 = scmp.ne.s32.totalorder %s198, %s199
      %p208 = scmp.eq.s32.totalorder %s27, 0
      %p209 = por %p207, %p208
      %p210 = scmp.ne.s32.totalorder %s198, %s199
      %p211 = scmp.eq.s32.totalorder %s28, 1
      %p212 = por %p210, %p211
      %p214 = scmp.ne.s32.totalorder %s199, %s213
      %p215 = scmp.eq.s32.totalorder %s28, 0
      %p216 = por %p214, %p215
      %s218 = sadd.s32 %s217, 1
      %p221 = scmp.eq.s32.totalorder %s22, 1
      %p222 = scmp.ne.s32.totalorder %s217, %s219
      %p223 = scmp.eq.s32.totalorder %s22, 0
      %p224 = por %p222, %p223
      %p225 = scmp.ne.s32.totalorder %s217, %s219
      %p226 = scmp.eq.s32.totalorder %s27, 1
      %p227 = por %p225, %p226
      %p228 = scmp.ne.s32.totalorder %s219, %s220
      %p229 = scmp.eq.s32.totalorder %s27, 0
      %p230 = por %p228, %p229
      %p231 = scmp.ne.s32.totalorder %s219, %s220
      %p232 = scmp.eq.s32.totalorder %s28, 1
      %p233 = por %p231, %p232
      %p235 = scmp.ne.s32.totalorder %s220, %s234
      %p236 = scmp.eq.s32.totalorder %s28, 0
      %p237 = por %p235, %p236
      %s239 = sadd.s32 %s238, 1
      %p242 = scmp.eq.s32.totalorder %s22, 1
      %p243 = scmp.ne.s32.totalorder %s238, %s240
      %p244 = scmp.eq.s32.totalorder %s22, 0
      %p245 = por %p243, %p244
      %p246 = scmp.ne.s32.totalorder %s238, %s240
      %p247 = scmp.eq.s32.totalorder %s27, 1
      %p248 = por %p246, %p247
      %p249 = scmp.ne.s32.totalorder %s240, %s241
      %p250 = scmp.eq.s32.totalorder %s27, 0
      %p251 = por %p249, %p250
      %p252 = scmp.ne.s32.totalorder %s240, %s241
      %p253 = scmp.eq.s32.totalorder %s28, 1
      %p254 = por %p252, %p253
      %p256 = scmp.ne.s32.totalorder %s241, %s255
      %p257 = scmp.eq.s32.totalorder %s28, 0
      %p258 = por %p256, %p257
      %s260 = sadd.s32 %s259, 1
      %p263 = scmp.eq.s32.totalorder %s22, 1
      %p264 = scmp.ne.s32.totalorder %s259, %s261
      %p265 = scmp.eq.s32.totalorder %s22, 0
      %p266 = por %p264, %p265
      %p267 = scmp.ne.s32.totalorder %s259, %s261
      %p268 = scmp.eq.s32.totalorder %s27, 1
      %p269 = por %p267, %p268
      %p270 = scmp.ne.s32.totalorder %s261, %s262
      %p271 = scmp.eq.s32.totalorder %s27, 0
      %p272 = por %p270, %p271
      %p273 = scmp.ne.s32.totalorder %s261, %s262
      %p274 = scmp.eq.s32.totalorder %s28, 1
      %p275 = por %p273, %p274
      %p277 = scmp.ne.s32.totalorder %s262, %s276
      %p278 = scmp.eq.s32.totalorder %s28, 0
      %p279 = por %p277, %p278
      %s281 = sadd.s32 %s280, 1
      %p284 = scmp.eq.s32.totalorder %s22, 1
      %p285 = scmp.ne.s32.totalorder %s280, %s282
      %p286 = scmp.eq.s32.totalorder %s22, 0
      %p287 = por %p285, %p286
      %p288 = scmp.ne.s32.totalorder %s280, %s282
      %p289 = scmp.eq.s32.totalorder %s27, 1
      %p290 = por %p288, %p289
      %p291 = scmp.ne.s32.totalorder %s282, %s283
      %p292 = scmp.eq.s32.totalorder %s27, 0
      %p293 = por %p291, %p292
      %p294 = scmp.ne.s32.totalorder %s282, %s283
      %p295 = scmp.eq.s32.totalorder %s28, 1
      %p296 = por %p294, %p295
      %p298 = scmp.ne.s32.totalorder %s283, %s297
      %p299 = scmp.eq.s32.totalorder %s28, 0
      %p300 = por %p298, %p299
      %s302 = sadd.s32 %s301, 1
      %p305 = scmp.eq.s32.totalorder %s22, 1
      %p306 = scmp.ne.s32.totalorder %s301, %s303
      %p307 = scmp.eq.s32.totalorder %s22, 0
      %p308 = por %p306, %p307
      %p309 = scmp.ne.s32.totalorder %s301, %s303
      %p310 = scmp.eq.s32.totalorder %s27, 1
      %p311 = por %p309, %p310
      %p312 = scmp.ne.s32.totalorder %s303, %s304
      %p313 = scmp.eq.s32.totalorder %s27, 0
      %p314 = por %p312, %p313
      %p315 = scmp.ne.s32.totalorder %s303, %s304
      %p316 = scmp.eq.s32.totalorder %s28, 1
      %p317 = por %p315, %p316
      %p319 = scmp.ne.s32.totalorder %s304, %s318
      %p320 = scmp.eq.s32.totalorder %s28, 0
      %p321 = por %p319, %p320
      %s323 = sadd.s32 %s322, 1
      %p326 = scmp.eq.s32.totalorder %s22, 1
      %p327 = scmp.ne.s32.totalorder %s322, %s324
      %p328 = scmp.eq.s32.totalorder %s22, 0
      %p329 = por %p327, %p328
      %p330 = scmp.ne.s32.totalorder %s322, %s324
      %p331 = scmp.eq.s32.totalorder %s27, 1
      %p332 = por %p330, %p331
      %p333 = scmp.ne.s32.totalorder %s324, %s325
      %p334 = scmp.eq.s32.totalorder %s27, 0
      %p335 = por %p333, %p334
      %p336 = scmp.ne.s32.totalorder %s324, %s325
      %p337 = scmp.eq.s32.totalorder %s28, 1
      %p338 = por %p336, %p337
      %p340 = scmp.ne.s32.totalorder %s325, %s339
      %p341 = scmp.eq.s32.totalorder %s28, 0
      %p342 = por %p340, %p341
      %s343 = ssub.s32 %s29, %s41
      %p344 = scmp.eq.s32.totalorder %s343, 0
      %s346 = sadd.s32 %s345, 1
      %s347 = scalar_select %p344, %s345, %s346
      %p350 = pneg %p344
      %p351 = scmp.eq.s32.totalorder %s22, 1
      %p352 = por %p350, %p351
      %p353 = scmp.ne.s32.totalorder %s345, %s348
      %p354 = scmp.eq.s32.totalorder %s22, 0
      %p355 = por %p353, %p354
      %p356 = scmp.ne.s32.totalorder %s345, %s348
      %p357 = scmp.eq.s32.totalorder %s27, 1
      %p358 = por %p356, %p357
      %p359 = scmp.ne.s32.totalorder %s348, %s349
      %p360 = scmp.eq.s32.totalorder %s27, 0
      %p361 = por %p359, %p360
      %p362 = scmp.ne.s32.totalorder %s348, %s349
      %p363 = scmp.eq.s32.totalorder %s28, 1
      %p364 = por %p362, %p363
      %p366 = scmp.ne.s32.totalorder %s349, %s365
      %p367 = scmp.eq.s32.totalorder %s28, 0
      %p368 = por %p366, %p367
      %p369 = scmp.le.s32.totalorder 1, %s22
      %p370 = scmp.lt.s32.totalorder %s22, 3
      %p371 = pnand %p369, %p370
      %p372 = pneg %p371
      // Predicated region
      $region9: #{tpu_custom_call.1} parent=5 // pred_check
        _
      $region10: #{tpu_custom_call.1} parent=5 // pred_check_branch
        %374 = sbr.rel (%p371) target = $region12
      $region11: #{tpu_custom_call.1} parent=5 // pred_region
        %s375 = ssub.s32 %s22, 1
        // Predicated region
        $region13: #{tpu_custom_call.1} parent=11 // pred_check
          %p376 = pneg %p167
        $region14: #{tpu_custom_call.1} parent=11 // pred_check_branch
          %378 = sbr.rel (%p376) target = $region16
        $region15: #{tpu_custom_call.1} parent=11 // pred_region
          _
        $region16: #{tpu_custom_call.1} parent=11 // pred_fallthru
          _
        // Predicated region
        $region17: #{tpu_custom_call.1} parent=11 // pred_check
          %p379 = pneg %p188
        $region18: #{tpu_custom_call.1} parent=11 // pred_check_branch
          %381 = sbr.rel (%p379) target = $region20
        $region19: #{tpu_custom_call.1} parent=11 // pred_region
          _
        $region20: #{tpu_custom_call.1} parent=11 // pred_fallthru
          _
        // Predicated region
        $region21: #{tpu_custom_call.1} parent=11 // pred_check
          %p382 = pneg %p209
        $region22: #{tpu_custom_call.1} parent=11 // pred_check_branch
          %384 = sbr.rel (%p382) target = $region24
        $region23: #{tpu_custom_call.1} parent=11 // pred_region
          _
        $region24: #{tpu_custom_call.1} parent=11 // pred_fallthru
          _
        // Predicated region
        $region25: #{tpu_custom_call.1} parent=11 // pred_check
          %p385 = pneg %p230
        $region26: #{tpu_custom_call.1} parent=11 // pred_check_branch
          %387 = sbr.rel (%p385) target = $region28
        $region27: #{tpu_custom_call.1} parent=11 // pred_region
          _
        $region28: #{tpu_custom_call.1} parent=11 // pred_fallthru
          _
        // Predicated region
        $region29: #{tpu_custom_call.1} parent=11 // pred_check
          %p388 = pneg %p251
        $region30: #{tpu_custom_call.1} parent=11 // pred_check_branch
          %390 = sbr.rel (%p388) target = $region32
        $region31: #{tpu_custom_call.1} parent=11 // pred_region
          _
        $region32: #{tpu_custom_call.1} parent=11 // pred_fallthru
          _
        // Predicated region
        $region33: #{tpu_custom_call.1} parent=11 // pred_check
          %p391 = pneg %p272
        $region34: #{tpu_custom_call.1} parent=11 // pred_check_branch
          %393 = sbr.rel (%p391) target = $region36
        $region35: #{tpu_custom_call.1} parent=11 // pred_region
          _
        $region36: #{tpu_custom_call.1} parent=11 // pred_fallthru
          _
        // Predicated region
        $region37: #{tpu_custom_call.1} parent=11 // pred_check
          %p394 = pneg %p293
        $region38: #{tpu_custom_call.1} parent=11 // pred_check_branch
          %396 = sbr.rel (%p394) target = $region40
        $region39: #{tpu_custom_call.1} parent=11 // pred_region
          _
        $region40: #{tpu_custom_call.1} parent=11 // pred_fallthru
          _
        // Predicated region
        $region41: #{tpu_custom_call.1} parent=11 // pred_check
          %p397 = pneg %p314
        $region42: #{tpu_custom_call.1} parent=11 // pred_check_branch
          %399 = sbr.rel (%p397) target = $region44
        $region43: #{tpu_custom_call.1} parent=11 // pred_region
          _
        $region44: #{tpu_custom_call.1} parent=11 // pred_fallthru
          _
        // Predicated region
        $region45: #{tpu_custom_call.1} parent=11 // pred_check
          %p400 = pneg %p335
        $region46: #{tpu_custom_call.1} parent=11 // pred_check_branch
          %402 = sbr.rel (%p400) target = $region48
        $region47: #{tpu_custom_call.1} parent=11 // pred_region
          _
        $region48: #{tpu_custom_call.1} parent=11 // pred_fallthru
          _
      $region12: #{tpu_custom_call.1} parent=5 // pred_fallthru
        _
      %p403 = scmp.lt.s32.totalorder %s22, 2
      // Predicated region
      $region49: #{tpu_custom_call.1} parent=5 // pred_check
        %p404 = pneg %p403
      $region50: #{tpu_custom_call.1} parent=5 // pred_check_branch
        %406 = sbr.rel (%p404) target = $region52
      $region51: #{tpu_custom_call.1} parent=5 // pred_region
        // Predicated region
        $region53: #{tpu_custom_call.1} parent=51 // pred_check
          %p407 = pneg %p56
        $region54: #{tpu_custom_call.1} parent=51 // pred_check_branch
          %409 = sbr.rel (%p407) target = $region56
        $region55: #{tpu_custom_call.1} parent=51 // pred_region
          %s410 = sadd.s32 %s29, %s30
          %s411 = smul.u32 16, %s410
          %p412 = scmp.lt.s32.totalorder %s411, 31
          %s413 = scalar_select %p412, %s411, 31
          %s414 = smul.addr %s413, 8
          %s415 = scalar_lea.vmem %s0, %s414
          %s416 = sadd.s32 %s29, %s30
          %s417 = smul.u32 16, %s416
        $region56: #{tpu_custom_call.1} parent=51 // pred_fallthru
          _
        // Predicated region
        $region57: #{tpu_custom_call.1} parent=51 // pred_check
          %p418 = pneg %p84
        $region58: #{tpu_custom_call.1} parent=51 // pred_check_branch
          %420 = sbr.rel (%p418) target = $region60
        $region59: #{tpu_custom_call.1} parent=51 // pred_region
          %s421 = sadd.s32 %s29, %s30
          %s422 = smul.u32 16, %s421
          %p423 = scmp.lt.s32.totalorder %s422, 31
          %s424 = scalar_select %p423, %s422, 31
          %s425 = smul.addr %s424, 8
          %s426 = scalar_lea.vmem %s1, %s425
          %s427 = sadd.s32 %s29, %s30
          %s428 = smul.u32 16, %s427
        $region60: #{tpu_custom_call.1} parent=51 // pred_fallthru
          _
        // Predicated region
        $region61: #{tpu_custom_call.1} parent=51 // pred_check
          %p429 = pneg %p112
        $region62: #{tpu_custom_call.1} parent=51 // pred_check_branch
          %431 = sbr.rel (%p429) target = $region64
        $region63: #{tpu_custom_call.1} parent=51 // pred_region
          %s432 = sadd.s32 %s29, %s30
          %p433 = scmp.lt.s32.totalorder %s432, 1
          %s434 = scalar_select %p433, %s432, 1
          %s435 = scalar_lea.vmem %s2, %s434
          %s436 = sadd.s32 %s29, %s30
        $region64: #{tpu_custom_call.1} parent=51 // pred_fallthru
          _
        // Predicated region
        $region65: #{tpu_custom_call.1} parent=51 // pred_check
          %p437 = pneg %p140
        $region66: #{tpu_custom_call.1} parent=51 // pred_check_branch
          %439 = sbr.rel (%p437) target = $region68
        $region67: #{tpu_custom_call.1} parent=51 // pred_region
          %s440 = sadd.s32 %s29, %s30
          %s441 = smul.u32 16, %s440
          %p442 = scmp.lt.s32.totalorder %s441, 31
          %s443 = scalar_select %p442, %s441, 31
          %s444 = smul.addr %s443, 4
          %s445 = scalar_lea.vmem %s3, %s444
          %s446 = sadd.s32 %s29, %s30
          %s447 = smul.u32 16, %s446
        $region68: #{tpu_custom_call.1} parent=51 // pred_fallthru
          _
      $region52: #{tpu_custom_call.1} parent=5 // pred_fallthru
        _
      %p448 = scmp.le.s32.totalorder 1, %s22
      %p449 = scmp.lt.s32.totalorder %s22, 3
      %p450 = pnand %p448, %p449
      %p451 = pneg %p450
      // Predicated region
      $region69: #{tpu_custom_call.1} parent=5 // pred_check
        _
      $region70: #{tpu_custom_call.1} parent=5 // pred_check_branch
        %453 = sbr.rel (%p450) target = $region72
      $region71: #{tpu_custom_call.1} parent=5 // pred_region
        %s454 = ssub.s32 %s22, 1
        %s455 = sadd.s32 %s31, %s32
        %s456 = smul.u32 16, %s455
        %p457 = scmp.lt.s32.totalorder %s456, 31
        %s458 = scalar_select %p457, %s456, 31
        %s459 = smul.addr %s458, 8
        %s460 = scalar_lea.vmem %s0, %s459
        %p461 = pneg %p62
        %p462 = pneg %p59
        %s463 = sadd.s32 %s31, %s32
        %s464 = smul.u32 16, %s463
        %p465 = scmp.lt.s32.totalorder %s464, 31
        %s466 = scalar_select %p465, %s464, 31
        %s467 = smul.addr %s466, 8
        %s468 = scalar_lea.vmem %s1, %s467
        %p469 = pneg %p90
        %p470 = pneg %p87
        %s471 = sadd.s32 %s31, %s32
        %p472 = scmp.lt.s32.totalorder %s471, 1
        %s473 = scalar_select %p472, %s471, 1
        %s474 = scalar_lea.vmem %s2, %s473
        %p475 = pneg %p118
        %p476 = pneg %p115
        %s477 = sadd.s32 %s31, %s32
        %s478 = smul.u32 16, %s477
        %p479 = scmp.lt.s32.totalorder %s478, 31
        %s480 = scalar_select %p479, %s478, 31
        %s481 = smul.addr %s480, 4
        %s482 = scalar_lea.vmem %s3, %s481
        %p483 = pneg %p146
        %p484 = pneg %p143
        %p485 = pneg %p167
        %p486 = pneg %p164
        %p487 = pneg %p188
        %p488 = pneg %p185
        %p489 = pneg %p209
        %p490 = pneg %p206
        %p491 = pneg %p230
        %p492 = pneg %p227
        %p493 = pneg %p251
        %p494 = pneg %p248
        %p495 = pneg %p272
        %p496 = pneg %p269
        %p497 = pneg %p293
        %p498 = pneg %p290
        %p499 = pneg %p314
        %p500 = pneg %p311
        %p501 = pneg %p335
        %p502 = pneg %p332
        %p503 = pneg %p361
        %p504 = pneg %p358
        %s505 = sand.u32 %s348, 1
        %s506 = scalar_lea.sflag [#allocation7], %s505
        %s507 = sand.u32 %s348, 1
        %s508 = smul.addr %s507, 16
        %s509 = scalar_lea.vmem [#allocation6], %s508
        %s510 = sadd.s32 %s31, %s32
        %s511 = smul.u32 16, %s510
        %p512 = scmp.lt.s32.totalorder %s511, 31
        %s513 = scalar_select %p512, %s511, 31
        %s514 = smul.addr %s513, 8
        %s515 = scalar_lea.vmem %s0, %s514
        %s516 = sadd.s32 %s31, %s32
        %s517 = smul.u32 16, %s516
        %s518 = sadd.s32 %s31, %s32
        %s519 = smul.u32 16, %s518
        %p520 = scmp.lt.s32.totalorder %s519, 31
        %s521 = scalar_select %p520, %s519, 31
        %s522 = smul.addr %s521, 8
        %s523 = scalar_lea.vmem %s1, %s522
        %s524 = sadd.s32 %s31, %s32
        %s525 = smul.u32 16, %s524
        %s526 = sadd.s32 %s31, %s32
        %p527 = scmp.lt.s32.totalorder %s526, 1
        %s528 = scalar_select %p527, %s526, 1
        %s529 = scalar_lea.vmem %s2, %s528
        %s530 = sadd.s32 %s31, %s32
        %s531 = sadd.s32 %s31, %s32
        %s532 = smul.u32 16, %s531
        %p533 = scmp.lt.s32.totalorder %s532, 31
        %s534 = scalar_select %p533, %s532, 31
        %s535 = smul.addr %s534, 4
        %s536 = scalar_lea.vmem %s3, %s535
        %s537 = sadd.s32 %s31, %s32
        %s538 = smul.u32 16, %s537
        %p540 = scmp.eq.s32.totalorder %s32, 0
        // Predicated region
        $region73: #{tpu_custom_call.1} parent=71 // pred_check
          %p541 = pneg %p540
        $region74: #{tpu_custom_call.1} parent=71 // pred_check_branch
          %543 = sbr.rel (%p541) target = $region76
        $region75: #{tpu_custom_call.1} parent=71 // pred_region
          %vm544 = vcmask 285696
          %545 = vst.msk [vmem:[#allocation5] sm:$0xff] %vm544, 0.0
          %546 = vst.msk [vmem:[#allocation5 + $0x8] sm:$0xff] %vm544, 0.0
        $region76: #{tpu_custom_call.1} parent=71 // pred_fallthru
          _
        %v547 = vlaneseq
        %v548 = vand.u32 %v547, 127
        %v549 = vlaneseq
        %v550 = vshrl.u32 %v549, 7
        %v551 = vadd.s32 %v550, 8
        %v552 = vld [vmem:[%s523] sm:$0xff]
        %v553 = vld [vmem:[%s523 + $0x8] sm:$0xff]
        %v554 = vld [vmem:[%s523 + $0x10] sm:$0xff]
        %v555 = vld [vmem:[%s523 + $0x18] sm:$0xff]
        %v556 = vld [vmem:[%s523 + $0x20] sm:$0xff]
        %v557 = vld [vmem:[%s523 + $0x28] sm:$0xff]
        %v558 = vld [vmem:[%s523 + $0x30] sm:$0xff]
        %v559 = vld [vmem:[%s523 + $0x38] sm:$0xff]
        %v560 = vld [vmem:[%s523 + $0x40] sm:$0xff]
        %v561 = vld [vmem:[%s523 + $0x48] sm:$0xff]
        %v562 = vld [vmem:[%s523 + $0x50] sm:$0xff]
        %v563 = vld [vmem:[%s523 + $0x58] sm:$0xff]
        %v564 = vld [vmem:[%s523 + $0x60] sm:$0xff]
        %v565 = vld [vmem:[%s523 + $0x68] sm:$0xff]
        %v566 = vld [vmem:[%s523 + $0x70] sm:$0xff]
        %v567 = vld [vmem:[%s523 + $0x78] sm:$0xff]
        %568 = vset.pattern.permute.xlu0 0
        %569 = vperm.xlu0 %568, %v552
        %v570 = vpop.permute.xlu0 %569
        %571 = vset.pattern.permute.xlu0 0
        %572 = vperm.xlu0 %571, %v553
        %v573 = vpop.permute.xlu0 %572
        %574 = vset.pattern.permute.xlu0 0
        %575 = vperm.xlu0 %574, %v554
        %v576 = vpop.permute.xlu0 %575
        %577 = vset.pattern.permute.xlu0 0
        %578 = vperm.xlu0 %577, %v555
        %v579 = vpop.permute.xlu0 %578
        %580 = vset.pattern.permute.xlu0 0
        %581 = vperm.xlu0 %580, %v556
        %v582 = vpop.permute.xlu0 %581
        %583 = vset.pattern.permute.xlu0 0
        %584 = vperm.xlu0 %583, %v557
        %v585 = vpop.permute.xlu0 %584
        %586 = vset.pattern.permute.xlu0 0
        %587 = vperm.xlu0 %586, %v558
        %v588 = vpop.permute.xlu0 %587
        %589 = vset.pattern.permute.xlu0 0
        %590 = vperm.xlu0 %589, %v559
        %v591 = vpop.permute.xlu0 %590
        %592 = vset.pattern.permute.xlu0 0
        %593 = vperm.xlu0 %592, %v560
        %v594 = vpop.permute.xlu0 %593
        %595 = vset.pattern.permute.xlu0 0
        %596 = vperm.xlu0 %595, %v561
        %v597 = vpop.permute.xlu0 %596
        %598 = vset.pattern.permute.xlu0 0
        %599 = vperm.xlu0 %598, %v562
        %v600 = vpop.permute.xlu0 %599
        %601 = vset.pattern.permute.xlu0 0
        %602 = vperm.xlu0 %601, %v563
        %v603 = vpop.permute.xlu0 %602
        %604 = vset.pattern.permute.xlu0 0
        %605 = vperm.xlu0 %604, %v564
        %v606 = vpop.permute.xlu0 %605
        %607 = vset.pattern.permute.xlu0 0
        %608 = vperm.xlu0 %607, %v565
        %v609 = vpop.permute.xlu0 %608
        %610 = vset.pattern.permute.xlu0 0
        %611 = vperm.xlu0 %610, %v566
        %v612 = vpop.permute.xlu0 %611
        %613 = vset.pattern.permute.xlu0 0
        %614 = vperm.xlu0 %613, %v567
        %v615 = vpop.permute.xlu0 %614
        %vm616 = vcmp.eq.s32.totalorder %v548, %v570
        %vm617 = vcmp.eq.s32.totalorder %v548, %v573
        %vm618 = vcmp.eq.s32.totalorder %v548, %v576
        %vm619 = vcmp.eq.s32.totalorder %v548, %v579
        %vm620 = vcmp.eq.s32.totalorder %v548, %v582
        %vm621 = vcmp.eq.s32.totalorder %v548, %v585
        %vm622 = vcmp.eq.s32.totalorder %v548, %v588
        %vm623 = vcmp.eq.s32.totalorder %v548, %v591
        %vm624 = vcmp.eq.s32.totalorder %v548, %v594
        %vm625 = vcmp.eq.s32.totalorder %v548, %v597
        %vm626 = vcmp.eq.s32.totalorder %v548, %v600
        %vm627 = vcmp.eq.s32.totalorder %v548, %v603
        %vm628 = vcmp.eq.s32.totalorder %v548, %v606
        %vm629 = vcmp.eq.s32.totalorder %v548, %v609
        %vm630 = vcmp.eq.s32.totalorder %v548, %v612
        %vm631 = vcmp.eq.s32.totalorder %v548, %v615
        %v632 = vsel %vm616, 1, 0
        %v633 = vsel %vm617, 1, 0
        %v634 = vsel %vm618, 1, 0
        %v635 = vsel %vm619, 1, 0
        %v636 = vsel %vm620, 1, 0
        %v637 = vsel %vm621, 1, 0
        %v638 = vsel %vm622, 1, 0
        %v639 = vsel %vm623, 1, 0
        %v640 = vsel %vm624, 1, 0
        %v641 = vsel %vm625, 1, 0
        %v642 = vsel %vm626, 1, 0
        %v643 = vsel %vm627, 1, 0
        %v644 = vsel %vm628, 1, 0
        %v645 = vsel %vm629, 1, 0
        %v646 = vsel %vm630, 1, 0
        %v647 = vsel %vm631, 1, 0
        %v648 = vcvt.s32.f32 %v632
        %v649 = vcvt.s32.f32 %v633
        %v650 = vcvt.s32.f32 %v634
        %v651 = vcvt.s32.f32 %v635
        %v652 = vcvt.s32.f32 %v636
        %v653 = vcvt.s32.f32 %v637
        %v654 = vcvt.s32.f32 %v638
        %v655 = vcvt.s32.f32 %v639
        %v656 = vcvt.s32.f32 %v640
        %v657 = vcvt.s32.f32 %v641
        %v658 = vcvt.s32.f32 %v642
        %v659 = vcvt.s32.f32 %v643
        %v660 = vcvt.s32.f32 %v644
        %v661 = vcvt.s32.f32 %v645
        %v662 = vcvt.s32.f32 %v646
        %v663 = vcvt.s32.f32 %v647
        %v664 = vpack.c.bf16 %v649, %v648
        %v665 = vpack.c.bf16 %v651, %v650
        %v666 = vpack.c.bf16 %v653, %v652
        %v667 = vpack.c.bf16 %v655, %v654
        %v668 = vpack.c.bf16 %v657, %v656
        %v669 = vpack.c.bf16 %v659, %v658
        %v670 = vpack.c.bf16 %v661, %v660
        %v671 = vpack.c.bf16 %v663, %v662
        %v672 = vld [vmem:[%s515] sm:$0xff]
        %v673 = vld [vmem:[%s515 + $0x8] sm:$0xff]
        %v674 = vld [vmem:[%s515 + $0x10] sm:$0xff]
        %v675 = vld [vmem:[%s515 + $0x18] sm:$0xff]
        %v676 = vld [vmem:[%s515 + $0x20] sm:$0xff]
        %v677 = vld [vmem:[%s515 + $0x28] sm:$0xff]
        %v678 = vld [vmem:[%s515 + $0x30] sm:$0xff]
        %v679 = vld [vmem:[%s515 + $0x38] sm:$0xff]
        %v680 = vld [vmem:[%s515 + $0x40] sm:$0xff]
        %v681 = vld [vmem:[%s515 + $0x48] sm:$0xff]
        %v682 = vld [vmem:[%s515 + $0x50] sm:$0xff]
        %v683 = vld [vmem:[%s515 + $0x58] sm:$0xff]
        %v684 = vld [vmem:[%s515 + $0x60] sm:$0xff]
        %v685 = vld [vmem:[%s515 + $0x68] sm:$0xff]
        %v686 = vld [vmem:[%s515 + $0x70] sm:$0xff]
        %v687 = vld [vmem:[%s515 + $0x78] sm:$0xff]
        %688 = vset.pattern.permute.xlu0 0
        %689 = vperm.xlu0 %688, %v672
        %v690 = vpop.permute.xlu0 %689
        %691 = vset.pattern.permute.xlu0 0
        %692 = vperm.xlu0 %691, %v673
        %v693 = vpop.permute.xlu0 %692
        %694 = vset.pattern.permute.xlu0 0
        %695 = vperm.xlu0 %694, %v674
        %v696 = vpop.permute.xlu0 %695
        %697 = vset.pattern.permute.xlu0 0
        %698 = vperm.xlu0 %697, %v675
        %v699 = vpop.permute.xlu0 %698
        %700 = vset.pattern.permute.xlu0 0
        %701 = vperm.xlu0 %700, %v676
        %v702 = vpop.permute.xlu0 %701
        %703 = vset.pattern.permute.xlu0 0
        %704 = vperm.xlu0 %703, %v677
        %v705 = vpop.permute.xlu0 %704
        %706 = vset.pattern.permute.xlu0 0
        %707 = vperm.xlu0 %706, %v678
        %v708 = vpop.permute.xlu0 %707
        %709 = vset.pattern.permute.xlu0 0
        %710 = vperm.xlu0 %709, %v679
        %v711 = vpop.permute.xlu0 %710
        %712 = vset.pattern.permute.xlu0 0
        %713 = vperm.xlu0 %712, %v680
        %v714 = vpop.permute.xlu0 %713
        %715 = vset.pattern.permute.xlu0 0
        %716 = vperm.xlu0 %715, %v681
        %v717 = vpop.permute.xlu0 %716
        %718 = vset.pattern.permute.xlu0 0
        %719 = vperm.xlu0 %718, %v682
        %v720 = vpop.permute.xlu0 %719
        %721 = vset.pattern.permute.xlu0 0
        %722 = vperm.xlu0 %721, %v683
        %v723 = vpop.permute.xlu0 %722
        %724 = vset.pattern.permute.xlu0 0
        %725 = vperm.xlu0 %724, %v684
        %v726 = vpop.permute.xlu0 %725
        %727 = vset.pattern.permute.xlu0 0
        %728 = vperm.xlu0 %727, %v685
        %v729 = vpop.permute.xlu0 %728
        %730 = vset.pattern.permute.xlu0 0
        %731 = vperm.xlu0 %730, %v686
        %v732 = vpop.permute.xlu0 %731
        %733 = vset.pattern.permute.xlu0 0
        %734 = vperm.xlu0 %733, %v687
        %v735 = vpop.permute.xlu0 %734
        %vm736 = vcmp.eq.s32.totalorder %v548, %v690
        %vm737 = vcmp.eq.s32.totalorder %v548, %v693
        %vm738 = vcmp.eq.s32.totalorder %v548, %v696
        %vm739 = vcmp.eq.s32.totalorder %v548, %v699
        %vm740 = vcmp.eq.s32.totalorder %v548, %v702
        %vm741 = vcmp.eq.s32.totalorder %v548, %v705
        %vm742 = vcmp.eq.s32.totalorder %v548, %v708
        %vm743 = vcmp.eq.s32.totalorder %v548, %v711
        %vm744 = vcmp.eq.s32.totalorder %v548, %v714
        %vm745 = vcmp.eq.s32.totalorder %v548, %v717
        %vm746 = vcmp.eq.s32.totalorder %v548, %v720
        %vm747 = vcmp.eq.s32.totalorder %v548, %v723
        %vm748 = vcmp.eq.s32.totalorder %v548, %v726
        %vm749 = vcmp.eq.s32.totalorder %v548, %v729
        %vm750 = vcmp.eq.s32.totalorder %v548, %v732
        %vm751 = vcmp.eq.s32.totalorder %v548, %v735
        %v752 = vsel %vm736, 1, 0
        %v753 = vsel %vm737, 1, 0
        %v754 = vsel %vm738, 1, 0
        %v755 = vsel %vm739, 1, 0
        %v756 = vsel %vm740, 1, 0
        %v757 = vsel %vm741, 1, 0
        %v758 = vsel %vm742, 1, 0
        %v759 = vsel %vm743, 1, 0
        %v760 = vsel %vm744, 1, 0
        %v761 = vsel %vm745, 1, 0
        %v762 = vsel %vm746, 1, 0
        %v763 = vsel %vm747, 1, 0
        %v764 = vsel %vm748, 1, 0
        %v765 = vsel %vm749, 1, 0
        %v766 = vsel %vm750, 1, 0
        %v767 = vsel %vm751, 1, 0
        %v768 = vcvt.s32.f32 %v752
        %v769 = vcvt.s32.f32 %v753
        %v770 = vcvt.s32.f32 %v754
        %v771 = vcvt.s32.f32 %v755
        %v772 = vcvt.s32.f32 %v756
        %v773 = vcvt.s32.f32 %v757
        %v774 = vcvt.s32.f32 %v758
        %v775 = vcvt.s32.f32 %v759
        %v776 = vcvt.s32.f32 %v760
        %v777 = vcvt.s32.f32 %v761
        %v778 = vcvt.s32.f32 %v762
        %v779 = vcvt.s32.f32 %v763
        %v780 = vcvt.s32.f32 %v764
        %v781 = vcvt.s32.f32 %v765
        %v782 = vcvt.s32.f32 %v766
        %v783 = vcvt.s32.f32 %v767
        %v784 = vpack.c.bf16 %v769, %v768
        %v785 = vpack.c.bf16 %v771, %v770
        %v786 = vpack.c.bf16 %v773, %v772
        %v787 = vpack.c.bf16 %v775, %v774
        %v788 = vpack.c.bf16 %v777, %v776
        %v789 = vpack.c.bf16 %v779, %v778
        %v790 = vpack.c.bf16 %v781, %v780
        %v791 = vpack.c.bf16 %v783, %v782
        %v792 = vld [vmem:[%s529] sm:$0x1]
        %v793 = vlaneseq
        %v794 = vshrl.u32 %v793, 7
        %v795 = vsub.s32 0, %v794
        %v796 = vrot.slane %v792, %v795
        %vm797 = vcmp.eq.s32.totalorder %v550, %v796
        %vm798 = vcmp.eq.s32.totalorder %v551, %v796
        %v799 = vsel %vm797, 1, 0
        %v800 = vsel %vm798, 1, 0
        %v801 = vcvt.s32.f32 %v799
        %v802 = vcvt.s32.f32 %v800
        %v803 = vpack.c.bf16 %v802, %v801
        %v804 = vld [vmem:[%s4] sm:$0xf]
        %v805 = vld [vmem:[%s4 + $0x4] sm:$0xf]
        %v806 = vld [vmem:[%s5] sm:$0xf]
        %v807 = vld [vmem:[%s5 + $0x4] sm:$0xf]
        %v810 = vunpack.c.l.b16 %v806
        %v811 = vunpack.c.l.b16 %v807
        %v812 = vpack.c.b16 %v811, %v810
        %vm814 = vcmask 130048
        %v816 = vsel %vm814, %v784, 0
        %v819 = vsel %vm814, %v785, 0
        %v822 = vsel %vm814, %v786, 0
        %v825 = vsel %vm814, %v787, 0
        %v828 = vsel %vm814, %v788, 0
        %v831 = vsel %vm814, %v789, 0
        %v834 = vsel %vm814, %v790, 0
        %v837 = vsel %vm814, %v791, 0
        %839 = vmatprep.subr.bf16.mxu0 0
        %840 = vmatpush1.bf16.msra.mxu0 %v812
        %841 = vmatprep.subr.bf16.mxu0 0
        %842 = vmatpush1.bf16.msra.mxu0 0
        %843 = vmatprep.subr.bf16.mxu0 0
        %844 = vmatpush1.bf16.msra.mxu0 0
        %845 = vmatprep.subr.bf16.mxu0 0
        %846 = vmatpush1.bf16.msra.mxu0 0
        %847 = vmatprep.subr.bf16.mxu0 0
        %848 = vmatpush1.bf16.msra.mxu0 0
        %849 = vmatprep.subr.bf16.mxu0 0
        %850 = vmatpush1.bf16.msra.mxu0 0
        %851 = vmatprep.subr.bf16.mxu0 0
        %852 = vmatpush1.bf16.msra.mxu0 0
        %853 = vmatprep.subr.bf16.mxu0 0
        %854 = vmatpush1.bf16.msra.mxu0 0
        %855 = vmatprep.subr.bf16.mxu0 0
        %856 = vmatpush1.bf16.msra.mxu0 0
        %857 = vmatprep.subr.bf16.mxu0 0
        %858 = vmatpush1.bf16.msra.mxu0 0
        %859 = vmatprep.subr.bf16.mxu0 0
        %860 = vmatpush1.bf16.msra.mxu0 0
        %861 = vmatprep.subr.bf16.mxu0 0
        %862 = vmatpush1.bf16.msra.mxu0 0
        %863 = vmatprep.subr.bf16.mxu0 0
        %864 = vmatpush1.bf16.msra.mxu0 0
        %865 = vmatprep.subr.bf16.mxu0 0
        %866 = vmatpush1.bf16.msra.mxu0 0
        %867 = vmatprep.subr.bf16.mxu0 0
        %868 = vmatpush1.bf16.msra.mxu0 0
        %869 = vmatprep.subr.bf16.mxu0 0
        %870 = vmatpush1.bf16.msra.mxu0 0
        %871 = vmatprep.mubr.bf16.mxu0 0
        %872 = vmatmul.mubr.bf16.gmra.mrb[0].mxu0 %v816
        %v873 = vpop.f32.mrb[0].mxu0
        %v874 = vadd.f32 0.0, %v873
        %v875 = vpop.f32.mrb[0].mxu0
        %v876 = vpop.f32.mrb[0].mxu0
        %v877 = vadd.f32 0.0, %v876
        %v878 = vpop.f32.mrb[0].mxu0
        %879 = vmatprep.mubr.bf16.mxu0 0
        %880 = vmatmul.mubr.bf16.gmra.mrb[0].mxu0 %v819
        %v881 = vpop.f32.mrb[0].mxu0
        %v882 = vadd.f32 0.0, %v881
        %v883 = vpop.f32.mrb[0].mxu0
        %v884 = vpop.f32.mrb[0].mxu0
        %v885 = vadd.f32 0.0, %v884
        %v886 = vpop.f32.mrb[0].mxu0
        %887 = vmatprep.mubr.bf16.mxu0 0
        %888 = vmatmul.mubr.bf16.gmra.mrb[0].mxu0 %v822
        %v889 = vpop.f32.mrb[0].mxu0
        %v890 = vadd.f32 0.0, %v889
        %v891 = vpop.f32.mrb[0].mxu0
        %v892 = vpop.f32.mrb[0].mxu0
        %v893 = vadd.f32 0.0, %v892
        %v894 = vpop.f32.mrb[0].mxu0
        %895 = vmatprep.mubr.bf16.mxu0 0
        %896 = vmatmul.mubr.bf16.gmra.mrb[0].mxu0 %v825
        %v897 = vpop.f32.mrb[0].mxu0
        %v898 = vadd.f32 0.0, %v897
        %v899 = vpop.f32.mrb[0].mxu0
        %v900 = vpop.f32.mrb[0].mxu0
        %v901 = vadd.f32 0.0, %v900
        %v902 = vpop.f32.mrb[0].mxu0
        %903 = vmatprep.mubr.bf16.mxu0 0
        %904 = vmatmul.mubr.bf16.gmra.mrb[0].mxu0 %v828
        %v905 = vpop.f32.mrb[0].mxu0
        %v906 = vadd.f32 0.0, %v905
        %v907 = vpop.f32.mrb[0].mxu0
        %v908 = vpop.f32.mrb[0].mxu0
        %v909 = vadd.f32 0.0, %v908
        %v910 = vpop.f32.mrb[0].mxu0
        %911 = vmatprep.mubr.bf16.mxu0 0
        %912 = vmatmul.mubr.bf16.gmra.mrb[0].mxu0 %v831
        %v913 = vpop.f32.mrb[0].mxu0
        %v914 = vadd.f32 0.0, %v913
        %v915 = vpop.f32.mrb[0].mxu0
        %v916 = vpop.f32.mrb[0].mxu0
        %v917 = vadd.f32 0.0, %v916
        %v918 = vpop.f32.mrb[0].mxu0
        %919 = vmatprep.mubr.bf16.mxu0 0
        %920 = vmatmul.mubr.bf16.gmra.mrb[0].mxu0 %v834
        %v921 = vpop.f32.mrb[0].mxu0
        %v922 = vadd.f32 0.0, %v921
        %v923 = vpop.f32.mrb[0].mxu0
        %v924 = vpop.f32.mrb[0].mxu0
        %v925 = vadd.f32 0.0, %v924
        %v926 = vpop.f32.mrb[0].mxu0
        %927 = vmatprep.mubr.bf16.mxu0 0
        %928 = vmatmul.mubr.bf16.gmra.mrb[0].mxu0 %v837
        %v929 = vpop.f32.mrb[0].mxu0
        %v930 = vadd.f32 0.0, %v929
        %v931 = vpop.f32.mrb[0].mxu0
        %v932 = vpop.f32.mrb[0].mxu0
        %v933 = vadd.f32 0.0, %v932
        %v934 = vpop.f32.mrb[0].mxu0
        %935 = vdwg.mxu0
        %v938 = vunpack.c.l.b16 %v804
        %v939 = vunpack.c.l.b16 %v805
        %v940 = vpack.c.b16 %v939, %v938
        %v943 = vsel %vm814, %v664, 0
        %v946 = vsel %vm814, %v665, 0
        %v949 = vsel %vm814, %v666, 0
        %v952 = vsel %vm814, %v667, 0
        %v955 = vsel %vm814, %v668, 0
        %v958 = vsel %vm814, %v669, 0
        %v961 = vsel %vm814, %v670, 0
        %v964 = vsel %vm814, %v671, 0
        %966 = vmatprep.subr.bf16.mxu0 0
        %967 = vmatpush1.bf16.msra.mxu0 %v940
        %968 = vmatprep.subr.bf16.mxu0 0
        %969 = vmatpush1.bf16.msra.mxu0 0
        %970 = vmatprep.subr.bf16.mxu0 0
        %971 = vmatpush1.bf16.msra.mxu0 0
        %972 = vmatprep.subr.bf16.mxu0 0
        %973 = vmatpush1.bf16.msra.mxu0 0
        %974 = vmatprep.subr.bf16.mxu0 0
        %975 = vmatpush1.bf16.msra.mxu0 0
        %976 = vmatprep.subr.bf16.mxu0 0
        %977 = vmatpush1.bf16.msra.mxu0 0
        %978 = vmatprep.subr.bf16.mxu0 0
        %979 = vmatpush1.bf16.msra.mxu0 0
        %980 = vmatprep.subr.bf16.mxu0 0
        %981 = vmatpush1.bf16.msra.mxu0 0
        %982 = vmatprep.subr.bf16.mxu0 0
        %983 = vmatpush1.bf16.msra.mxu0 0
        %984 = vmatprep.subr.bf16.mxu0 0
        %985 = vmatpush1.bf16.msra.mxu0 0
        %986 = vmatprep.subr.bf16.mxu0 0
        %987 = vmatpush1.bf16.msra.mxu0 0
        %988 = vmatprep.subr.bf16.mxu0 0
        %989 = vmatpush1.bf16.msra.mxu0 0
        %990 = vmatprep.subr.bf16.mxu0 0
        %991 = vmatpush1.bf16.msra.mxu0 0
        %992 = vmatprep.subr.bf16.mxu0 0
        %993 = vmatpush1.bf16.msra.mxu0 0
        %994 = vmatprep.subr.bf16.mxu0 0
        %995 = vmatpush1.bf16.msra.mxu0 0
        %996 = vmatprep.subr.bf16.mxu0 0
        %997 = vmatpush1.bf16.msra.mxu0 0
        %998 = vmatprep.mubr.bf16.mxu0 0
        %999 = vmatmul.mubr.bf16.gmra.mrb[0].mxu0 %v943
        %v1000 = vpop.f32.mrb[0].mxu0
        %v1001 = vadd.f32 %v874, %v1000
        %v1002 = vpop.f32.mrb[0].mxu0
        %v1003 = vpop.f32.mrb[0].mxu0
        %v1004 = vadd.f32 %v877, %v1003
        %v1005 = vpop.f32.mrb[0].mxu0
        %1006 = vmatprep.mubr.bf16.mxu0 0
        %1007 = vmatmul.mubr.bf16.gmra.mrb[0].mxu0 %v946
        %v1008 = vpop.f32.mrb[0].mxu0
        %v1009 = vadd.f32 %v882, %v1008
        %v1010 = vpop.f32.mrb[0].mxu0
        %v1011 = vpop.f32.mrb[0].mxu0
        %v1012 = vadd.f32 %v885, %v1011
        %v1013 = vpop.f32.mrb[0].mxu0
        %1014 = vmatprep.mubr.bf16.mxu0 0
        %1015 = vmatmul.mubr.bf16.gmra.mrb[0].mxu0 %v949
        %v1016 = vpop.f32.mrb[0].mxu0
        %v1017 = vadd.f32 %v890, %v1016
        %v1018 = vpop.f32.mrb[0].mxu0
        %v1019 = vpop.f32.mrb[0].mxu0
        %v1020 = vadd.f32 %v893, %v1019
        %v1021 = vpop.f32.mrb[0].mxu0
        %1022 = vmatprep.mubr.bf16.mxu0 0
        %1023 = vmatmul.mubr.bf16.gmra.mrb[0].mxu0 %v952
        %v1024 = vpop.f32.mrb[0].mxu0
        %v1025 = vadd.f32 %v898, %v1024
        %v1026 = vpop.f32.mrb[0].mxu0
        %v1027 = vpop.f32.mrb[0].mxu0
        %v1028 = vadd.f32 %v901, %v1027
        %v1029 = vpop.f32.mrb[0].mxu0
        %1030 = vmatprep.mubr.bf16.mxu0 0
        %1031 = vmatmul.mubr.bf16.gmra.mrb[0].mxu0 %v955
        %v1032 = vpop.f32.mrb[0].mxu0
        %v1033 = vadd.f32 %v906, %v1032
        %v1034 = vpop.f32.mrb[0].mxu0
        %v1035 = vpop.f32.mrb[0].mxu0
        %v1036 = vadd.f32 %v909, %v1035
        %v1037 = vpop.f32.mrb[0].mxu0
        %1038 = vmatprep.mubr.bf16.mxu0 0
        %1039 = vmatmul.mubr.bf16.gmra.mrb[0].mxu0 %v958
        %v1040 = vpop.f32.mrb[0].mxu0
        %v1041 = vadd.f32 %v914, %v1040
        %v1042 = vpop.f32.mrb[0].mxu0
        %v1043 = vpop.f32.mrb[0].mxu0
        %v1044 = vadd.f32 %v917, %v1043
        %v1045 = vpop.f32.mrb[0].mxu0
        %1046 = vmatprep.mubr.bf16.mxu0 0
        %1047 = vmatmul.mubr.bf16.gmra.mrb[0].mxu0 %v961
        %v1048 = vpop.f32.mrb[0].mxu0
        %v1049 = vadd.f32 %v922, %v1048
        %v1050 = vpop.f32.mrb[0].mxu0
        %v1051 = vpop.f32.mrb[0].mxu0
        %v1052 = vadd.f32 %v925, %v1051
        %v1053 = vpop.f32.mrb[0].mxu0
        %1054 = vmatprep.mubr.bf16.mxu0 0
        %1055 = vmatmul.mubr.bf16.gmra.mrb[0].mxu0 %v964
        %v1056 = vpop.f32.mrb[0].mxu0
        %v1057 = vadd.f32 %v930, %v1056
        %v1058 = vpop.f32.mrb[0].mxu0
        %v1059 = vpop.f32.mrb[0].mxu0
        %v1060 = vadd.f32 %v933, %v1059
        %v1061 = vpop.f32.mrb[0].mxu0
        %1062 = vdwg.mxu0
        %vm1063 = vcmask 285696
        %1064 = vst.msk [vmem:[#allocation2] sm:$0xff] %vm1063, %v1001
        %1065 = vst.msk [vmem:[#allocation2 + $0x8] sm:$0xff] %vm1063, %v1004
        %1066 = vst.msk [vmem:[#allocation2 + $0x10] sm:$0xff] %vm1063, %v1009
        %1067 = vst.msk [vmem:[#allocation2 + $0x18] sm:$0xff] %vm1063, %v1012
        %1068 = vst.msk [vmem:[#allocation2 + $0x20] sm:$0xff] %vm1063, %v1017
        %1069 = vst.msk [vmem:[#allocation2 + $0x28] sm:$0xff] %vm1063, %v1020
        %1070 = vst.msk [vmem:[#allocation2 + $0x30] sm:$0xff] %vm1063, %v1025
        %1071 = vst.msk [vmem:[#allocation2 + $0x38] sm:$0xff] %vm1063, %v1028
        %1072 = vst.msk [vmem:[#allocation2 + $0x40] sm:$0xff] %vm1063, %v1033
        %1073 = vst.msk [vmem:[#allocation2 + $0x48] sm:$0xff] %vm1063, %v1036
        %1074 = vst.msk [vmem:[#allocation2 + $0x50] sm:$0xff] %vm1063, %v1041
        %1075 = vst.msk [vmem:[#allocation2 + $0x58] sm:$0xff] %vm1063, %v1044
        %1076 = vst.msk [vmem:[#allocation2 + $0x60] sm:$0xff] %vm1063, %v1049
        %1077 = vst.msk [vmem:[#allocation2 + $0x68] sm:$0xff] %vm1063, %v1052
        %1078 = vst.msk [vmem:[#allocation2 + $0x70] sm:$0xff] %vm1063, %v1057
        %1079 = vst.msk [vmem:[#allocation2 + $0x78] sm:$0xff] %vm1063, %v1060
        %v1080 = vld [vmem:[#allocation2] sm:$0xff]
        %v1081 = vld [vmem:[#allocation2 + $0x8] sm:$0xff]
        %v1082 = vld [vmem:[#allocation2 + $0x10] sm:$0xff]
        %v1083 = vld [vmem:[#allocation2 + $0x18] sm:$0xff]
        %v1084 = vld [vmem:[#allocation2 + $0x20] sm:$0xff]
        %v1085 = vld [vmem:[#allocation2 + $0x28] sm:$0xff]
        %v1086 = vld [vmem:[#allocation2 + $0x30] sm:$0xff]
        %v1087 = vld [vmem:[#allocation2 + $0x38] sm:$0xff]
        %v1088 = vld [vmem:[#allocation2 + $0x40] sm:$0xff]
        %v1089 = vld [vmem:[#allocation2 + $0x48] sm:$0xff]
        %v1090 = vld [vmem:[#allocation2 + $0x50] sm:$0xff]
        %v1091 = vld [vmem:[#allocation2 + $0x58] sm:$0xff]
        %v1092 = vld [vmem:[#allocation2 + $0x60] sm:$0xff]
        %v1093 = vld [vmem:[#allocation2 + $0x68] sm:$0xff]
        %v1094 = vld [vmem:[#allocation2 + $0x70] sm:$0xff]
        %v1095 = vld [vmem:[#allocation2 + $0x78] sm:$0xff]
        %v1096 = vmul.f32 %v1080, %v1080
        %v1097 = vmul.f32 %v1081, %v1081
        %v1098 = vmul.f32 %v1082, %v1082
        %v1099 = vmul.f32 %v1083, %v1083
        %v1100 = vmul.f32 %v1084, %v1084
        %v1101 = vmul.f32 %v1085, %v1085
        %v1102 = vmul.f32 %v1086, %v1086
        %v1103 = vmul.f32 %v1087, %v1087
        %v1104 = vmul.f32 %v1088, %v1088
        %v1105 = vmul.f32 %v1089, %v1089
        %v1106 = vmul.f32 %v1090, %v1090
        %v1107 = vmul.f32 %v1091, %v1091
        %v1108 = vmul.f32 %v1092, %v1092
        %v1109 = vmul.f32 %v1093, %v1093
        %v1110 = vmul.f32 %v1094, %v1094
        %v1111 = vmul.f32 %v1095, %v1095
        %1128 = vrot.lane.b32.xlu0 %v1096, 96
        %v1129 = vpop.permute.xlu0 %1128
        %1130 = vrot.lane.b32.xlu0 %v1097, 96
        %v1131 = vpop.permute.xlu0 %1130
        %1132 = vrot.lane.b32.xlu0 %v1098, 96
        %v1133 = vpop.permute.xlu0 %1132
        %1134 = vrot.lane.b32.xlu0 %v1099, 96
        %v1135 = vpop.permute.xlu0 %1134
        %1136 = vrot.lane.b32.xlu0 %v1100, 96
        %v1137 = vpop.permute.xlu0 %1136
        %1138 = vrot.lane.b32.xlu0 %v1101, 96
        %v1139 = vpop.permute.xlu0 %1138
        %1140 = vrot.lane.b32.xlu0 %v1102, 96
        %v1141 = vpop.permute.xlu0 %1140
        %1142 = vrot.lane.b32.xlu0 %v1103, 96
        %v1143 = vpop.permute.xlu0 %1142
        %1144 = vrot.lane.b32.xlu0 %v1104, 96
        %v1145 = vpop.permute.xlu0 %1144
        %1146 = vrot.lane.b32.xlu0 %v1105, 96
        %v1147 = vpop.permute.xlu0 %1146
        %1148 = vrot.lane.b32.xlu0 %v1106, 96
        %v1149 = vpop.permute.xlu0 %1148
        %1150 = vrot.lane.b32.xlu0 %v1107, 96
        %v1151 = vpop.permute.xlu0 %1150
        %1152 = vrot.lane.b32.xlu0 %v1108, 96
        %v1153 = vpop.permute.xlu0 %1152
        %1154 = vrot.lane.b32.xlu0 %v1109, 96
        %v1155 = vpop.permute.xlu0 %1154
        %1156 = vrot.lane.b32.xlu0 %v1110, 96
        %v1157 = vpop.permute.xlu0 %1156
        %1158 = vrot.lane.b32.xlu0 %v1111, 96
        %v1159 = vpop.permute.xlu0 %1158
        %vm1176 = vcmask 23552
        %v1177 = vsel %vm1176, %v1129, 0.0
        %1178 = vadd.xlane.f32.xlu0 %v1177
        %v1179 = vpop.xlane.xlu0 %1178
        %v1180 = vsel %vm1176, %v1131, 0.0
        %1181 = vadd.xlane.f32.xlu0 %v1180
        %v1182 = vpop.xlane.xlu0 %1181
        %v1183 = vsel %vm1176, %v1133, 0.0
        %1184 = vadd.xlane.f32.xlu0 %v1183
        %v1185 = vpop.xlane.xlu0 %1184
        %v1186 = vsel %vm1176, %v1135, 0.0
        %1187 = vadd.xlane.f32.xlu0 %v1186
        %v1188 = vpop.xlane.xlu0 %1187
        %v1189 = vsel %vm1176, %v1137, 0.0
        %1190 = vadd.xlane.f32.xlu0 %v1189
        %v1191 = vpop.xlane.xlu0 %1190
        %v1192 = vsel %vm1176, %v1139, 0.0
        %1193 = vadd.xlane.f32.xlu0 %v1192
        %v1194 = vpop.xlane.xlu0 %1193
        %v1195 = vsel %vm1176, %v1141, 0.0
        %1196 = vadd.xlane.f32.xlu0 %v1195
        %v1197 = vpop.xlane.xlu0 %1196
        %v1198 = vsel %vm1176, %v1143, 0.0
        %1199 = vadd.xlane.f32.xlu0 %v1198
        %v1200 = vpop.xlane.xlu0 %1199
        %v1201 = vsel %vm1176, %v1145, 0.0
        %1202 = vadd.xlane.f32.xlu0 %v1201
        %v1203 = vpop.xlane.xlu0 %1202
        %v1204 = vsel %vm1176, %v1147, 0.0
        %1205 = vadd.xlane.f32.xlu0 %v1204
        %v1206 = vpop.xlane.xlu0 %1205
        %v1207 = vsel %vm1176, %v1149, 0.0
        %1208 = vadd.xlane.f32.xlu0 %v1207
        %v1209 = vpop.xlane.xlu0 %1208
        %v1210 = vsel %vm1176, %v1151, 0.0
        %1211 = vadd.xlane.f32.xlu0 %v1210
        %v1212 = vpop.xlane.xlu0 %1211
        %v1213 = vsel %vm1176, %v1153, 0.0
        %1214 = vadd.xlane.f32.xlu0 %v1213
        %v1215 = vpop.xlane.xlu0 %1214
        %v1216 = vsel %vm1176, %v1155, 0.0
        %1217 = vadd.xlane.f32.xlu0 %v1216
        %v1218 = vpop.xlane.xlu0 %1217
        %v1219 = vsel %vm1176, %v1157, 0.0
        %1220 = vadd.xlane.f32.xlu0 %v1219
        %v1221 = vpop.xlane.xlu0 %1220
        %v1222 = vsel %vm1176, %v1159, 0.0
        %1223 = vadd.xlane.f32.xlu0 %v1222
        %v1224 = vpop.xlane.xlu0 %1223
        %v1225 = vadd.f32 %v1179, 1e-08
        %v1226 = vadd.f32 %v1182, 1e-08
        %v1227 = vadd.f32 %v1185, 1e-08
        %v1228 = vadd.f32 %v1188, 1e-08
        %v1229 = vadd.f32 %v1191, 1e-08
        %v1230 = vadd.f32 %v1194, 1e-08
        %v1231 = vadd.f32 %v1197, 1e-08
        %v1232 = vadd.f32 %v1200, 1e-08
        %v1233 = vadd.f32 %v1203, 1e-08
        %v1234 = vadd.f32 %v1206, 1e-08
        %v1235 = vadd.f32 %v1209, 1e-08
        %v1236 = vadd.f32 %v1212, 1e-08
        %v1237 = vadd.f32 %v1215, 1e-08
        %v1238 = vadd.f32 %v1218, 1e-08
        %v1239 = vadd.f32 %v1221, 1e-08
        %v1240 = vadd.f32 %v1224, 1e-08
        %v1241 = vrsqrt.pop %v1225
        %v1242 = vmul.f32 %v1225, %v1241
        %vm1243 = vcmp.eq.f32.partialorder %v1225, inf
        %v1244 = vsel %vm1243, %v1225, %v1242
        %vm1245 = vcmp.eq.f32.partialorder %v1225, 0.0
        %v1246 = vand.u32 %v1225, 2147483648
        %v1247 = vsel %vm1245, %v1246, %v1244
        %v1248 = vrsqrt.pop %v1226
        %v1249 = vmul.f32 %v1226, %v1248
        %vm1250 = vcmp.eq.f32.partialorder %v1226, inf
        %v1251 = vsel %vm1250, %v1226, %v1249
        %vm1252 = vcmp.eq.f32.partialorder %v1226, 0.0
        %v1253 = vand.u32 %v1226, 2147483648
        %v1254 = vsel %vm1252, %v1253, %v1251
        %v1255 = vrsqrt.pop %v1227
        %v1256 = vmul.f32 %v1227, %v1255
        %vm1257 = vcmp.eq.f32.partialorder %v1227, inf
        %v1258 = vsel %vm1257, %v1227, %v1256
        %vm1259 = vcmp.eq.f32.partialorder %v1227, 0.0
        %v1260 = vand.u32 %v1227, 2147483648
        %v1261 = vsel %vm1259, %v1260, %v1258
        %v1262 = vrsqrt.pop %v1228
        %v1263 = vmul.f32 %v1228, %v1262
        %vm1264 = vcmp.eq.f32.partialorder %v1228, inf
        %v1265 = vsel %vm1264, %v1228, %v1263
        %vm1266 = vcmp.eq.f32.partialorder %v1228, 0.0
        %v1267 = vand.u32 %v1228, 2147483648
        %v1268 = vsel %vm1266, %v1267, %v1265
        %v1269 = vrsqrt.pop %v1229
        %v1270 = vmul.f32 %v1229, %v1269
        %vm1271 = vcmp.eq.f32.partialorder %v1229, inf
        %v1272 = vsel %vm1271, %v1229, %v1270
        %vm1273 = vcmp.eq.f32.partialorder %v1229, 0.0
        %v1274 = vand.u32 %v1229, 2147483648
        %v1275 = vsel %vm1273, %v1274, %v1272
        %v1276 = vrsqrt.pop %v1230
        %v1277 = vmul.f32 %v1230, %v1276
        %vm1278 = vcmp.eq.f32.partialorder %v1230, inf
        %v1279 = vsel %vm1278, %v1230, %v1277
        %vm1280 = vcmp.eq.f32.partialorder %v1230, 0.0
        %v1281 = vand.u32 %v1230, 2147483648
        %v1282 = vsel %vm1280, %v1281, %v1279
        %v1283 = vrsqrt.pop %v1231
        %v1284 = vmul.f32 %v1231, %v1283
        %vm1285 = vcmp.eq.f32.partialorder %v1231, inf
        %v1286 = vsel %vm1285, %v1231, %v1284
        %vm1287 = vcmp.eq.f32.partialorder %v1231, 0.0
        %v1288 = vand.u32 %v1231, 2147483648
        %v1289 = vsel %vm1287, %v1288, %v1286
        %v1290 = vrsqrt.pop %v1232
        %v1291 = vmul.f32 %v1232, %v1290
        %vm1292 = vcmp.eq.f32.partialorder %v1232, inf
        %v1293 = vsel %vm1292, %v1232, %v1291
        %vm1294 = vcmp.eq.f32.partialorder %v1232, 0.0
        %v1295 = vand.u32 %v1232, 2147483648
        %v1296 = vsel %vm1294, %v1295, %v1293
        %v1297 = vrsqrt.pop %v1233
        %v1298 = vmul.f32 %v1233, %v1297
        %vm1299 = vcmp.eq.f32.partialorder %v1233, inf
        %v1300 = vsel %vm1299, %v1233, %v1298
        %vm1301 = vcmp.eq.f32.partialorder %v1233, 0.0
        %v1302 = vand.u32 %v1233, 2147483648
        %v1303 = vsel %vm1301, %v1302, %v1300
        %v1304 = vrsqrt.pop %v1234
        %v1305 = vmul.f32 %v1234, %v1304
        %vm1306 = vcmp.eq.f32.partialorder %v1234, inf
        %v1307 = vsel %vm1306, %v1234, %v1305
        %vm1308 = vcmp.eq.f32.partialorder %v1234, 0.0
        %v1309 = vand.u32 %v1234, 2147483648
        %v1310 = vsel %vm1308, %v1309, %v1307
        %v1311 = vrsqrt.pop %v1235
        %v1312 = vmul.f32 %v1235, %v1311
        %vm1313 = vcmp.eq.f32.partialorder %v1235, inf
        %v1314 = vsel %vm1313, %v1235, %v1312
        %vm1315 = vcmp.eq.f32.partialorder %v1235, 0.0
        %v1316 = vand.u32 %v1235, 2147483648
        %v1317 = vsel %vm1315, %v1316, %v1314
        %v1318 = vrsqrt.pop %v1236
        %v1319 = vmul.f32 %v1236, %v1318
        %vm1320 = vcmp.eq.f32.partialorder %v1236, inf
        %v1321 = vsel %vm1320, %v1236, %v1319
        %vm1322 = vcmp.eq.f32.partialorder %v1236, 0.0
        %v1323 = vand.u32 %v1236, 2147483648
        %v1324 = vsel %vm1322, %v1323, %v1321
        %v1325 = vrsqrt.pop %v1237
        %v1326 = vmul.f32 %v1237, %v1325
        %vm1327 = vcmp.eq.f32.partialorder %v1237, inf
        %v1328 = vsel %vm1327, %v1237, %v1326
        %vm1329 = vcmp.eq.f32.partialorder %v1237, 0.0
        %v1330 = vand.u32 %v1237, 2147483648
        %v1331 = vsel %vm1329, %v1330, %v1328
        %v1332 = vrsqrt.pop %v1238
        %v1333 = vmul.f32 %v1238, %v1332
        %vm1334 = vcmp.eq.f32.partialorder %v1238, inf
        %v1335 = vsel %vm1334, %v1238, %v1333
        %vm1336 = vcmp.eq.f32.partialorder %v1238, 0.0
        %v1337 = vand.u32 %v1238, 2147483648
        %v1338 = vsel %vm1336, %v1337, %v1335
        %v1339 = vrsqrt.pop %v1239
        %v1340 = vmul.f32 %v1239, %v1339
        %vm1341 = vcmp.eq.f32.partialorder %v1239, inf
        %v1342 = vsel %vm1341, %v1239, %v1340
        %vm1343 = vcmp.eq.f32.partialorder %v1239, 0.0
        %v1344 = vand.u32 %v1239, 2147483648
        %v1345 = vsel %vm1343, %v1344, %v1342
        %v1346 = vrsqrt.pop %v1240
        %v1347 = vmul.f32 %v1240, %v1346
        %vm1348 = vcmp.eq.f32.partialorder %v1240, inf
        %v1349 = vsel %vm1348, %v1240, %v1347
        %vm1350 = vcmp.eq.f32.partialorder %v1240, 0.0
        %v1351 = vand.u32 %v1240, 2147483648
        %v1352 = vsel %vm1350, %v1351, %v1349
        %v1353 = vld [vmem:[%s6] sm:$0x1]
        %v1355 = vlaneseq
        %v1356 = vshrl.u32 %v1355, 7
        %v1357 = vsub.s32 0, %v1356
        %v1358 = vrot.slane %v1353, %v1357
        %v1360 = vsub.f32 %v1247, %v1358
        %v1361 = vsub.f32 %v1254, %v1358
        %v1362 = vsub.f32 %v1261, %v1358
        %v1363 = vsub.f32 %v1268, %v1358
        %v1364 = vsub.f32 %v1275, %v1358
        %v1365 = vsub.f32 %v1282, %v1358
        %v1366 = vsub.f32 %v1289, %v1358
        %v1367 = vsub.f32 %v1296, %v1358
        %v1368 = vsub.f32 %v1303, %v1358
        %v1369 = vsub.f32 %v1310, %v1358
        %v1370 = vsub.f32 %v1317, %v1358
        %v1371 = vsub.f32 %v1324, %v1358
        %v1372 = vsub.f32 %v1331, %v1358
        %v1373 = vsub.f32 %v1338, %v1358
        %v1374 = vsub.f32 %v1345, %v1358
        %v1375 = vsub.f32 %v1352, %v1358
        %v1376 = vmul.f32 %v1360, -0.5
        %v1377 = vmul.f32 %v1361, -0.5
        %v1378 = vmul.f32 %v1362, -0.5
        %v1379 = vmul.f32 %v1363, -0.5
        %v1380 = vmul.f32 %v1364, -0.5
        %v1381 = vmul.f32 %v1365, -0.5
        %v1382 = vmul.f32 %v1366, -0.5
        %v1383 = vmul.f32 %v1367, -0.5
        %v1384 = vmul.f32 %v1368, -0.5
        %v1385 = vmul.f32 %v1369, -0.5
        %v1386 = vmul.f32 %v1370, -0.5
        %v1387 = vmul.f32 %v1371, -0.5
        %v1388 = vmul.f32 %v1372, -0.5
        %v1389 = vmul.f32 %v1373, -0.5
        %v1390 = vmul.f32 %v1374, -0.5
        %v1391 = vmul.f32 %v1375, -0.5
        %v1392 = vmul.f32 %v1376, %v1360
        %v1393 = vmul.f32 %v1377, %v1361
        %v1394 = vmul.f32 %v1378, %v1362
        %v1395 = vmul.f32 %v1379, %v1363
        %v1396 = vmul.f32 %v1380, %v1364
        %v1397 = vmul.f32 %v1381, %v1365
        %v1398 = vmul.f32 %v1382, %v1366
        %v1399 = vmul.f32 %v1383, %v1367
        %v1400 = vmul.f32 %v1384, %v1368
        %v1401 = vmul.f32 %v1385, %v1369
        %v1402 = vmul.f32 %v1386, %v1370
        %v1403 = vmul.f32 %v1387, %v1371
        %v1404 = vmul.f32 %v1388, %v1372
        %v1405 = vmul.f32 %v1389, %v1373
        %v1406 = vmul.f32 %v1390, %v1374
        %v1407 = vmul.f32 %v1391, %v1375
        %v1408 = vmul.f32 %v1392, 1.442695
        %v1409 = vpow.pop %v1408
        %v1410 = vmul.f32 %v1393, 1.442695
        %v1411 = vpow.pop %v1410
        %v1412 = vmul.f32 %v1394, 1.442695
        %v1413 = vpow.pop %v1412
        %v1414 = vmul.f32 %v1395, 1.442695
        %v1415 = vpow.pop %v1414
        %v1416 = vmul.f32 %v1396, 1.442695
        %v1417 = vpow.pop %v1416
        %v1418 = vmul.f32 %v1397, 1.442695
        %v1419 = vpow.pop %v1418
        %v1420 = vmul.f32 %v1398, 1.442695
        %v1421 = vpow.pop %v1420
        %v1422 = vmul.f32 %v1399, 1.442695
        %v1423 = vpow.pop %v1422
        %v1424 = vmul.f32 %v1400, 1.442695
        %v1425 = vpow.pop %v1424
        %v1426 = vmul.f32 %v1401, 1.442695
        %v1427 = vpow.pop %v1426
        %v1428 = vmul.f32 %v1402, 1.442695
        %v1429 = vpow.pop %v1428
        %v1430 = vmul.f32 %v1403, 1.442695
        %v1431 = vpow.pop %v1430
        %v1432 = vmul.f32 %v1404, 1.442695
        %v1433 = vpow.pop %v1432
        %v1434 = vmul.f32 %v1405, 1.442695
        %v1435 = vpow.pop %v1434
        %v1436 = vmul.f32 %v1406, 1.442695
        %v1437 = vpow.pop %v1436
        %v1438 = vmul.f32 %v1407, 1.442695
        %v1439 = vpow.pop %v1438
        %v1440 = vpack.c.bf16 %v1411, %v1409
        %v1441 = vpack.c.bf16 %v1415, %v1413
        %v1442 = vpack.c.bf16 %v1419, %v1417
        %v1443 = vpack.c.bf16 %v1423, %v1421
        %v1444 = vpack.c.bf16 %v1427, %v1425
        %v1445 = vpack.c.bf16 %v1431, %v1429
        %v1446 = vpack.c.bf16 %v1435, %v1433
        %v1447 = vpack.c.bf16 %v1439, %v1437
        %v1448 = vld [vmem:[%s7] sm:$0xf]
        %v1449 = vld [vmem:[%s7 + $0x4] sm:$0xf]
        %v1450 = vld [vmem:[%s7 + $0x8] sm:$0x3]
        %v1454 = vunpack.c.l.b16 %v1448
        %v1455 = vunpack.c.l.b16 %v1449
        %v1456 = vunpack.c.l.b16 %v1450
        %v1457 = vpack.c.b16 %v1455, %v1454
        %v1458 = vpack.c.b16 %v1456, %v1456
        %vm1460 = vcmask 162816
        %v1462 = vsel %vm1460, %v1440, 0
        %v1465 = vsel %vm1460, %v1441, 0
        %v1468 = vsel %vm1460, %v1442, 0
        %v1471 = vsel %vm1460, %v1443, 0
        %v1474 = vsel %vm1460, %v1444, 0
        %v1477 = vsel %vm1460, %v1445, 0
        %v1480 = vsel %vm1460, %v1446, 0
        %v1483 = vsel %vm1460, %v1447, 0
        %vm1485 = vcmask 1041408
        %v1487 = vsel %vm1485, %v1458, 0
        %1489 = vmatprep.subr.bf16.mxu0 0
        %1490 = vmatpush1.bf16.msra.mxu0 %v1457
        %1491 = vmatprep.subr.bf16.mxu0 0
        %1492 = vmatpush1.bf16.msra.mxu0 %v1487
        %1493 = vmatprep.subr.bf16.mxu0 0
        %1494 = vmatpush1.bf16.msra.mxu0 0
        %1495 = vmatprep.subr.bf16.mxu0 0
        %1496 = vmatpush1.bf16.msra.mxu0 0
        %1497 = vmatprep.subr.bf16.mxu0 0
        %1498 = vmatpush1.bf16.msra.mxu0 0
        %1499 = vmatprep.subr.bf16.mxu0 0
        %1500 = vmatpush1.bf16.msra.mxu0 0
        %1501 = vmatprep.subr.bf16.mxu0 0
        %1502 = vmatpush1.bf16.msra.mxu0 0
        %1503 = vmatprep.subr.bf16.mxu0 0
        %1504 = vmatpush1.bf16.msra.mxu0 0
        %1505 = vmatprep.subr.bf16.mxu0 0
        %1506 = vmatpush1.bf16.msra.mxu0 0
        %1507 = vmatprep.subr.bf16.mxu0 0
        %1508 = vmatpush1.bf16.msra.mxu0 0
        %1509 = vmatprep.subr.bf16.mxu0 0
        %1510 = vmatpush1.bf16.msra.mxu0 0
        %1511 = vmatprep.subr.bf16.mxu0 0
        %1512 = vmatpush1.bf16.msra.mxu0 0
        %1513 = vmatprep.subr.bf16.mxu0 0
        %1514 = vmatpush1.bf16.msra.mxu0 0
        %1515 = vmatprep.subr.bf16.mxu0 0
        %1516 = vmatpush1.bf16.msra.mxu0 0
        %1517 = vmatprep.subr.bf16.mxu0 0
        %1518 = vmatpush1.bf16.msra.mxu0 0
        %1519 = vmatprep.subr.bf16.mxu0 0
        %1520 = vmatpush1.bf16.msra.mxu0 0
        %1521 = vmatprep.mubr.bf16.mxu0 0
        %1522 = vmatmul.mubr.bf16.gmra.mrb[0].mxu0 %v1462
        %v1523 = vpop.f32.mrb[0].mxu0
        %v1524 = vadd.f32 0.0, %v1523
        %v1525 = vpop.f32.mrb[0].mxu0
        %v1526 = vpop.f32.mrb[0].mxu0
        %v1527 = vadd.f32 0.0, %v1526
        %v1528 = vpop.f32.mrb[0].mxu0
        %1529 = vmatprep.mubr.bf16.mxu0 0
        %1530 = vmatmul.mubr.bf16.gmra.mrb[0].mxu0 %v1465
        %v1531 = vpop.f32.mrb[0].mxu0
        %v1532 = vadd.f32 0.0, %v1531
        %v1533 = vpop.f32.mrb[0].mxu0
        %v1534 = vpop.f32.mrb[0].mxu0
        %v1535 = vadd.f32 0.0, %v1534
        %v1536 = vpop.f32.mrb[0].mxu0
        %1537 = vmatprep.mubr.bf16.mxu0 0
        %1538 = vmatmul.mubr.bf16.gmra.mrb[0].mxu0 %v1468
        %v1539 = vpop.f32.mrb[0].mxu0
        %v1540 = vadd.f32 0.0, %v1539
        %v1541 = vpop.f32.mrb[0].mxu0
        %v1542 = vpop.f32.mrb[0].mxu0
        %v1543 = vadd.f32 0.0, %v1542
        %v1544 = vpop.f32.mrb[0].mxu0
        %1545 = vmatprep.mubr.bf16.mxu0 0
        %1546 = vmatmul.mubr.bf16.gmra.mrb[0].mxu0 %v1471
        %v1547 = vpop.f32.mrb[0].mxu0
        %v1548 = vadd.f32 0.0, %v1547
        %v1549 = vpop.f32.mrb[0].mxu0
        %v1550 = vpop.f32.mrb[0].mxu0
        %v1551 = vadd.f32 0.0, %v1550
        %v1552 = vpop.f32.mrb[0].mxu0
        %1553 = vmatprep.mubr.bf16.mxu0 0
        %1554 = vmatmul.mubr.bf16.gmra.mrb[0].mxu0 %v1474
        %v1555 = vpop.f32.mrb[0].mxu0
        %v1556 = vadd.f32 0.0, %v1555
        %v1557 = vpop.f32.mrb[0].mxu0
        %v1558 = vpop.f32.mrb[0].mxu0
        %v1559 = vadd.f32 0.0, %v1558
        %v1560 = vpop.f32.mrb[0].mxu0
        %1561 = vmatprep.mubr.bf16.mxu0 0
        %1562 = vmatmul.mubr.bf16.gmra.mrb[0].mxu0 %v1477
        %v1563 = vpop.f32.mrb[0].mxu0
        %v1564 = vadd.f32 0.0, %v1563
        %v1565 = vpop.f32.mrb[0].mxu0
        %v1566 = vpop.f32.mrb[0].mxu0
        %v1567 = vadd.f32 0.0, %v1566
        %v1568 = vpop.f32.mrb[0].mxu0
        %1569 = vmatprep.mubr.bf16.mxu0 0
        %1570 = vmatmul.mubr.bf16.gmra.mrb[0].mxu0 %v1480
        %v1571 = vpop.f32.mrb[0].mxu0
        %v1572 = vadd.f32 0.0, %v1571
        %v1573 = vpop.f32.mrb[0].mxu0
        %v1574 = vpop.f32.mrb[0].mxu0
        %v1575 = vadd.f32 0.0, %v1574
        %v1576 = vpop.f32.mrb[0].mxu0
        %1577 = vmatprep.mubr.bf16.mxu0 0
        %1578 = vmatmul.mubr.bf16.gmra.mrb[0].mxu0 %v1483
        %v1579 = vpop.f32.mrb[0].mxu0
        %v1580 = vadd.f32 0.0, %v1579
        %v1581 = vpop.f32.mrb[0].mxu0
        %v1582 = vpop.f32.mrb[0].mxu0
        %v1583 = vadd.f32 0.0, %v1582
        %v1584 = vpop.f32.mrb[0].mxu0
        %1585 = vdwg.mxu0
        %v1586 = vadd.f32 %v1080, %v1524
        %v1587 = vadd.f32 %v1081, %v1527
        %v1588 = vadd.f32 %v1082, %v1532
        %v1589 = vadd.f32 %v1083, %v1535
        %v1590 = vadd.f32 %v1084, %v1540
        %v1591 = vadd.f32 %v1085, %v1543
        %v1592 = vadd.f32 %v1086, %v1548
        %v1593 = vadd.f32 %v1087, %v1551
        %v1594 = vadd.f32 %v1088, %v1556
        %v1595 = vadd.f32 %v1089, %v1559
        %v1596 = vadd.f32 %v1090, %v1564
        %v1597 = vadd.f32 %v1091, %v1567
        %v1598 = vadd.f32 %v1092, %v1572
        %v1599 = vadd.f32 %v1093, %v1575
        %v1600 = vadd.f32 %v1094, %v1580
        %v1601 = vadd.f32 %v1095, %v1583
        %v1602 = vld [vmem:[%s536] sm:$0xf]
        %v1603 = vld [vmem:[%s536 + $0x4] sm:$0xf]
        %v1604 = vld [vmem:[%s536 + $0x8] sm:$0xf]
        %v1605 = vld [vmem:[%s536 + $0xc] sm:$0xf]
        %v1606 = vld [vmem:[%s536 + $0x10] sm:$0xf]
        %v1607 = vld [vmem:[%s536 + $0x14] sm:$0xf]
        %v1608 = vld [vmem:[%s536 + $0x18] sm:$0xf]
        %v1609 = vld [vmem:[%s536 + $0x1c] sm:$0xf]
        %v1610 = vld [vmem:[%s536 + $0x20] sm:$0xf]
        %v1611 = vld [vmem:[%s536 + $0x24] sm:$0xf]
        %v1612 = vld [vmem:[%s536 + $0x28] sm:$0xf]
        %v1613 = vld [vmem:[%s536 + $0x2c] sm:$0xf]
        %v1614 = vld [vmem:[%s536 + $0x30] sm:$0xf]
        %v1615 = vld [vmem:[%s536 + $0x34] sm:$0xf]
        %v1616 = vld [vmem:[%s536 + $0x38] sm:$0xf]
        %v1617 = vld [vmem:[%s536 + $0x3c] sm:$0xf]
        %v1618 = vunpack.c.l.bf16 %v1602
        %v1619 = vunpack.c.l.bf16 %v1603
        %v1620 = vunpack.c.l.bf16 %v1604
        %v1621 = vunpack.c.l.bf16 %v1605
        %v1622 = vunpack.c.l.bf16 %v1606
        %v1623 = vunpack.c.l.bf16 %v1607
        %v1624 = vunpack.c.l.bf16 %v1608
        %v1625 = vunpack.c.l.bf16 %v1609
        %v1626 = vunpack.c.l.bf16 %v1610
        %v1627 = vunpack.c.l.bf16 %v1611
        %v1628 = vunpack.c.l.bf16 %v1612
        %v1629 = vunpack.c.l.bf16 %v1613
        %v1630 = vunpack.c.l.bf16 %v1614
        %v1631 = vunpack.c.l.bf16 %v1615
        %v1632 = vunpack.c.l.bf16 %v1616
        %v1633 = vunpack.c.l.bf16 %v1617
        %v1634 = vadd.f32 %v1586, %v1618
        %v1635 = vadd.f32 %v1587, %v1619
        %v1636 = vadd.f32 %v1588, %v1620
        %v1637 = vadd.f32 %v1589, %v1621
        %v1638 = vadd.f32 %v1590, %v1622
        %v1639 = vadd.f32 %v1591, %v1623
        %v1640 = vadd.f32 %v1592, %v1624
        %v1641 = vadd.f32 %v1593, %v1625
        %v1642 = vadd.f32 %v1594, %v1626
        %v1643 = vadd.f32 %v1595, %v1627
        %v1644 = vadd.f32 %v1596, %v1628
        %v1645 = vadd.f32 %v1597, %v1629
        %v1646 = vadd.f32 %v1598, %v1630
        %v1647 = vadd.f32 %v1599, %v1631
        %v1648 = vadd.f32 %v1600, %v1632
        %v1649 = vadd.f32 %v1601, %v1633
        %v1650 = vxor.u32 %v1634, 2147483648
        %v1651 = vxor.u32 %v1635, 2147483648
        %v1652 = vxor.u32 %v1636, 2147483648
        %v1653 = vxor.u32 %v1637, 2147483648
        %v1654 = vxor.u32 %v1638, 2147483648
        %v1655 = vxor.u32 %v1639, 2147483648
        %v1656 = vxor.u32 %v1640, 2147483648
        %v1657 = vxor.u32 %v1641, 2147483648
        %v1658 = vxor.u32 %v1642, 2147483648
        %v1659 = vxor.u32 %v1643, 2147483648
        %v1660 = vxor.u32 %v1644, 2147483648
        %v1661 = vxor.u32 %v1645, 2147483648
        %v1662 = vxor.u32 %v1646, 2147483648
        %v1663 = vxor.u32 %v1647, 2147483648
        %v1664 = vxor.u32 %v1648, 2147483648
        %v1665 = vxor.u32 %v1649, 2147483648
        %v1666 = vmul.f32 %v1650, 1.442695
        %v1667 = vpow.pop %v1666
        %v1668 = vmul.f32 %v1651, 1.442695
        %v1669 = vpow.pop %v1668
        %v1670 = vmul.f32 %v1652, 1.442695
        %v1671 = vpow.pop %v1670
        %v1672 = vmul.f32 %v1653, 1.442695
        %v1673 = vpow.pop %v1672
        %v1674 = vmul.f32 %v1654, 1.442695
        %v1675 = vpow.pop %v1674
        %v1676 = vmul.f32 %v1655, 1.442695
        %v1677 = vpow.pop %v1676
        %v1678 = vmul.f32 %v1656, 1.442695
        %v1679 = vpow.pop %v1678
        %v1680 = vmul.f32 %v1657, 1.442695
        %v1681 = vpow.pop %v1680
        %v1682 = vmul.f32 %v1658, 1.442695
        %v1683 = vpow.pop %v1682
        %v1684 = vmul.f32 %v1659, 1.442695
        %v1685 = vpow.pop %v1684
        %v1686 = vmul.f32 %v1660, 1.442695
        %v1687 = vpow.pop %v1686
        %v1688 = vmul.f32 %v1661, 1.442695
        %v1689 = vpow.pop %v1688
        %v1690 = vmul.f32 %v1662, 1.442695
        %v1691 = vpow.pop %v1690
        %v1692 = vmul.f32 %v1663, 1.442695
        %v1693 = vpow.pop %v1692
        %v1694 = vmul.f32 %v1664, 1.442695
        %v1695 = vpow.pop %v1694
        %v1696 = vmul.f32 %v1665, 1.442695
        %v1697 = vpow.pop %v1696
        %v1698 = vadd.f32 %v1667, 1.0
        %v1699 = vadd.f32 %v1669, 1.0
        %v1700 = vadd.f32 %v1671, 1.0
        %v1701 = vadd.f32 %v1673, 1.0
        %v1702 = vadd.f32 %v1675, 1.0
        %v1703 = vadd.f32 %v1677, 1.0
        %v1704 = vadd.f32 %v1679, 1.0
        %v1705 = vadd.f32 %v1681, 1.0
        %v1706 = vadd.f32 %v1683, 1.0
        %v1707 = vadd.f32 %v1685, 1.0
        %v1708 = vadd.f32 %v1687, 1.0
        %v1709 = vadd.f32 %v1689, 1.0
        %v1710 = vadd.f32 %v1691, 1.0
        %v1711 = vadd.f32 %v1693, 1.0
        %v1712 = vadd.f32 %v1695, 1.0
        %v1713 = vadd.f32 %v1697, 1.0
        %v1714 = vrcp.pop %v1698
        %v1715 = vmul.f32 1.0, %v1714
        %v1716 = vrcp.pop %v1699
        %v1717 = vmul.f32 1.0, %v1716
        %v1718 = vrcp.pop %v1700
        %v1719 = vmul.f32 1.0, %v1718
        %v1720 = vrcp.pop %v1701
        %v1721 = vmul.f32 1.0, %v1720
        %v1722 = vrcp.pop %v1702
        %v1723 = vmul.f32 1.0, %v1722
        %v1724 = vrcp.pop %v1703
        %v1725 = vmul.f32 1.0, %v1724
        %v1726 = vrcp.pop %v1704
        %v1727 = vmul.f32 1.0, %v1726
        %v1728 = vrcp.pop %v1705
        %v1729 = vmul.f32 1.0, %v1728
        %v1730 = vrcp.pop %v1706
        %v1731 = vmul.f32 1.0, %v1730
        %v1732 = vrcp.pop %v1707
        %v1733 = vmul.f32 1.0, %v1732
        %v1734 = vrcp.pop %v1708
        %v1735 = vmul.f32 1.0, %v1734
        %v1736 = vrcp.pop %v1709
        %v1737 = vmul.f32 1.0, %v1736
        %v1738 = vrcp.pop %v1710
        %v1739 = vmul.f32 1.0, %v1738
        %v1740 = vrcp.pop %v1711
        %v1741 = vmul.f32 1.0, %v1740
        %v1742 = vrcp.pop %v1712
        %v1743 = vmul.f32 1.0, %v1742
        %v1744 = vrcp.pop %v1713
        %v1745 = vmul.f32 1.0, %v1744
        %v1746 = vmul.f32 %v1634, %v1715
        %v1747 = vmul.f32 %v1635, %v1717
        %v1748 = vmul.f32 %v1636, %v1719
        %v1749 = vmul.f32 %v1637, %v1721
        %v1750 = vmul.f32 %v1638, %v1723
        %v1751 = vmul.f32 %v1639, %v1725
        %v1752 = vmul.f32 %v1640, %v1727
        %v1753 = vmul.f32 %v1641, %v1729
        %v1754 = vmul.f32 %v1642, %v1731
        %v1755 = vmul.f32 %v1643, %v1733
        %v1756 = vmul.f32 %v1644, %v1735
        %v1757 = vmul.f32 %v1645, %v1737
        %v1758 = vmul.f32 %v1646, %v1739
        %v1759 = vmul.f32 %v1647, %v1741
        %v1760 = vmul.f32 %v1648, %v1743
        %v1761 = vmul.f32 %v1649, %v1745
        %v1762 = vpack.c.bf16 %v1747, %v1746
        %v1763 = vpack.c.bf16 %v1749, %v1748
        %v1764 = vpack.c.bf16 %v1751, %v1750
        %v1765 = vpack.c.bf16 %v1753, %v1752
        %v1766 = vpack.c.bf16 %v1755, %v1754
        %v1767 = vpack.c.bf16 %v1757, %v1756
        %v1768 = vpack.c.bf16 %v1759, %v1758
        %v1769 = vpack.c.bf16 %v1761, %v1760
        %v1770 = vld [vmem:[%s8] sm:$0xf]
        %v1771 = vld [vmem:[%s8 + $0x4] sm:$0xf]
        %v1772 = vld [vmem:[%s8 + $0x8] sm:$0xf]
        %v1773 = vld [vmem:[%s8 + $0xc] sm:$0xf]
        %v1774 = vld [vmem:[%s9] sm:$0x1]
        %v1776 = vlaneseq
        %v1777 = vshrl.u32 %v1776, 7
        %v1778 = vsub.s32 0, %v1777
        %v1779 = vrot.slane %v1774, %v1778
        %v1785 = vunpack.c.l.b16 %v1770
        %v1786 = vunpack.c.l.b16 %v1771
        %v1787 = vunpack.c.l.b16 %v1772
        %v1788 = vunpack.c.l.b16 %v1773
        %v1789 = vpack.c.b16 %v1786, %v1785
        %v1790 = vpack.c.b16 %v1788, %v1787
        %vm1793 = vcmask 261120
        %v1795 = vsel %vm1793, %v1762, 0
        %v1798 = vsel %vm1793, %v1763, 0
        %v1801 = vsel %vm1793, %v1764, 0
        %v1804 = vsel %vm1793, %v1765, 0
        %v1807 = vsel %vm1793, %v1766, 0
        %v1810 = vsel %vm1793, %v1767, 0
        %v1813 = vsel %vm1793, %v1768, 0
        %v1816 = vsel %vm1793, %v1769, 0
        %1818 = vmatprep.subr.bf16.mxu0 0
        %1819 = vmatpush1.bf16.msra.mxu0 %v1789
        %1820 = vmatprep.subr.bf16.mxu0 0
        %1821 = vmatpush1.bf16.msra.mxu0 %v1790
        %1822 = vmatprep.subr.bf16.mxu0 0
        %1823 = vmatpush1.bf16.msra.mxu0 0
        %1824 = vmatprep.subr.bf16.mxu0 0
        %1825 = vmatpush1.bf16.msra.mxu0 0
        %1826 = vmatprep.subr.bf16.mxu0 0
        %1827 = vmatpush1.bf16.msra.mxu0 0
        %1828 = vmatprep.subr.bf16.mxu0 0
        %1829 = vmatpush1.bf16.msra.mxu0 0
        %1830 = vmatprep.subr.bf16.mxu0 0
        %1831 = vmatpush1.bf16.msra.mxu0 0
        %1832 = vmatprep.subr.bf16.mxu0 0
        %1833 = vmatpush1.bf16.msra.mxu0 0
        %1834 = vmatprep.subr.bf16.mxu0 0
        %1835 = vmatpush1.bf16.msra.mxu0 0
        %1836 = vmatprep.subr.bf16.mxu0 0
        %1837 = vmatpush1.bf16.msra.mxu0 0
        %1838 = vmatprep.subr.bf16.mxu0 0
        %1839 = vmatpush1.bf16.msra.mxu0 0
        %1840 = vmatprep.subr.bf16.mxu0 0
        %1841 = vmatpush1.bf16.msra.mxu0 0
        %1842 = vmatprep.subr.bf16.mxu0 0
        %1843 = vmatpush1.bf16.msra.mxu0 0
        %1844 = vmatprep.subr.bf16.mxu0 0
        %1845 = vmatpush1.bf16.msra.mxu0 0
        %1846 = vmatprep.subr.bf16.mxu0 0
        %1847 = vmatpush1.bf16.msra.mxu0 0
        %1848 = vmatprep.subr.bf16.mxu0 0
        %1849 = vmatpush1.bf16.msra.mxu0 0
        %1850 = vmatprep.mubr.bf16.mxu0 0
        %1851 = vmatmul.mubr.bf16.gmra.mrb[0].mxu0 %v1795
        %v1852 = vpop.f32.mrb[0].mxu0
        %v1853 = vadd.f32 %v1779, %v1852
        %v1854 = vpop.f32.mrb[0].mxu0
        %v1855 = vpop.f32.mrb[0].mxu0
        %v1856 = vadd.f32 %v1779, %v1855
        %v1857 = vpop.f32.mrb[0].mxu0
        %1858 = vmatprep.mubr.bf16.mxu0 0
        %1859 = vmatmul.mubr.bf16.gmra.mrb[0].mxu0 %v1798
        %v1860 = vpop.f32.mrb[0].mxu0
        %v1861 = vadd.f32 %v1779, %v1860
        %v1862 = vpop.f32.mrb[0].mxu0
        %v1863 = vpop.f32.mrb[0].mxu0
        %v1864 = vadd.f32 %v1779, %v1863
        %v1865 = vpop.f32.mrb[0].mxu0
        %1866 = vmatprep.mubr.bf16.mxu0 0
        %1867 = vmatmul.mubr.bf16.gmra.mrb[0].mxu0 %v1801
        %v1868 = vpop.f32.mrb[0].mxu0
        %v1869 = vadd.f32 %v1779, %v1868
        %v1870 = vpop.f32.mrb[0].mxu0
        %v1871 = vpop.f32.mrb[0].mxu0
        %v1872 = vadd.f32 %v1779, %v1871
        %v1873 = vpop.f32.mrb[0].mxu0
        %1874 = vmatprep.mubr.bf16.mxu0 0
        %1875 = vmatmul.mubr.bf16.gmra.mrb[0].mxu0 %v1804
        %v1876 = vpop.f32.mrb[0].mxu0
        %v1877 = vadd.f32 %v1779, %v1876
        %v1878 = vpop.f32.mrb[0].mxu0
        %v1879 = vpop.f32.mrb[0].mxu0
        %v1880 = vadd.f32 %v1779, %v1879
        %v1881 = vpop.f32.mrb[0].mxu0
        %1882 = vmatprep.mubr.bf16.mxu0 0
        %1883 = vmatmul.mubr.bf16.gmra.mrb[0].mxu0 %v1807
        %v1884 = vpop.f32.mrb[0].mxu0
        %v1885 = vadd.f32 %v1779, %v1884
        %v1886 = vpop.f32.mrb[0].mxu0
        %v1887 = vpop.f32.mrb[0].mxu0
        %v1888 = vadd.f32 %v1779, %v1887
        %v1889 = vpop.f32.mrb[0].mxu0
        %1890 = vmatprep.mubr.bf16.mxu0 0
        %1891 = vmatmul.mubr.bf16.gmra.mrb[0].mxu0 %v1810
        %v1892 = vpop.f32.mrb[0].mxu0
        %v1893 = vadd.f32 %v1779, %v1892
        %v1894 = vpop.f32.mrb[0].mxu0
        %v1895 = vpop.f32.mrb[0].mxu0
        %v1896 = vadd.f32 %v1779, %v1895
        %v1897 = vpop.f32.mrb[0].mxu0
        %1898 = vmatprep.mubr.bf16.mxu0 0
        %1899 = vmatmul.mubr.bf16.gmra.mrb[0].mxu0 %v1813
        %v1900 = vpop.f32.mrb[0].mxu0
        %v1901 = vadd.f32 %v1779, %v1900
        %v1902 = vpop.f32.mrb[0].mxu0
        %v1903 = vpop.f32.mrb[0].mxu0
        %v1904 = vadd.f32 %v1779, %v1903
        %v1905 = vpop.f32.mrb[0].mxu0
        %1906 = vmatprep.mubr.bf16.mxu0 0
        %1907 = vmatmul.mubr.bf16.gmra.mrb[0].mxu0 %v1816
        %v1908 = vpop.f32.mrb[0].mxu0
        %v1909 = vadd.f32 %v1779, %v1908
        %v1910 = vpop.f32.mrb[0].mxu0
        %v1911 = vpop.f32.mrb[0].mxu0
        %v1912 = vadd.f32 %v1779, %v1911
        %v1913 = vpop.f32.mrb[0].mxu0
        %1914 = vdwg.mxu0
        %v1915 = vxor.u32 %v1853, 2147483648
        %v1916 = vxor.u32 %v1856, 2147483648
        %v1917 = vxor.u32 %v1861, 2147483648
        %v1918 = vxor.u32 %v1864, 2147483648
        %v1919 = vxor.u32 %v1869, 2147483648
        %v1920 = vxor.u32 %v1872, 2147483648
        %v1921 = vxor.u32 %v1877, 2147483648
        %v1922 = vxor.u32 %v1880, 2147483648
        %v1923 = vxor.u32 %v1885, 2147483648
        %v1924 = vxor.u32 %v1888, 2147483648
        %v1925 = vxor.u32 %v1893, 2147483648
        %v1926 = vxor.u32 %v1896, 2147483648
        %v1927 = vxor.u32 %v1901, 2147483648
        %v1928 = vxor.u32 %v1904, 2147483648
        %v1929 = vxor.u32 %v1909, 2147483648
        %v1930 = vxor.u32 %v1912, 2147483648
        %v1931 = vmul.f32 %v1915, 1.442695
        %v1932 = vpow.pop %v1931
        %v1933 = vmul.f32 %v1916, 1.442695
        %v1934 = vpow.pop %v1933
        %v1935 = vmul.f32 %v1917, 1.442695
        %v1936 = vpow.pop %v1935
        %v1937 = vmul.f32 %v1918, 1.442695
        %v1938 = vpow.pop %v1937
        %v1939 = vmul.f32 %v1919, 1.442695
        %v1940 = vpow.pop %v1939
        %v1941 = vmul.f32 %v1920, 1.442695
        %v1942 = vpow.pop %v1941
        %v1943 = vmul.f32 %v1921, 1.442695
        %v1944 = vpow.pop %v1943
        %v1945 = vmul.f32 %v1922, 1.442695
        %v1946 = vpow.pop %v1945
        %v1947 = vmul.f32 %v1923, 1.442695
        %v1948 = vpow.pop %v1947
        %v1949 = vmul.f32 %v1924, 1.442695
        %v1950 = vpow.pop %v1949
        %v1951 = vmul.f32 %v1925, 1.442695
        %v1952 = vpow.pop %v1951
        %v1953 = vmul.f32 %v1926, 1.442695
        %v1954 = vpow.pop %v1953
        %v1955 = vmul.f32 %v1927, 1.442695
        %v1956 = vpow.pop %v1955
        %v1957 = vmul.f32 %v1928, 1.442695
        %v1958 = vpow.pop %v1957
        %v1959 = vmul.f32 %v1929, 1.442695
        %v1960 = vpow.pop %v1959
        %v1961 = vmul.f32 %v1930, 1.442695
        %v1962 = vpow.pop %v1961
        %v1963 = vadd.f32 %v1932, 1.0
        %v1964 = vadd.f32 %v1934, 1.0
        %v1965 = vadd.f32 %v1936, 1.0
        %v1966 = vadd.f32 %v1938, 1.0
        %v1967 = vadd.f32 %v1940, 1.0
        %v1968 = vadd.f32 %v1942, 1.0
        %v1969 = vadd.f32 %v1944, 1.0
        %v1970 = vadd.f32 %v1946, 1.0
        %v1971 = vadd.f32 %v1948, 1.0
        %v1972 = vadd.f32 %v1950, 1.0
        %v1973 = vadd.f32 %v1952, 1.0
        %v1974 = vadd.f32 %v1954, 1.0
        %v1975 = vadd.f32 %v1956, 1.0
        %v1976 = vadd.f32 %v1958, 1.0
        %v1977 = vadd.f32 %v1960, 1.0
        %v1978 = vadd.f32 %v1962, 1.0
        %v1979 = vrcp.pop %v1963
        %v1980 = vmul.f32 1.0, %v1979
        %v1981 = vrcp.pop %v1964
        %v1982 = vmul.f32 1.0, %v1981
        %v1983 = vrcp.pop %v1965
        %v1984 = vmul.f32 1.0, %v1983
        %v1985 = vrcp.pop %v1966
        %v1986 = vmul.f32 1.0, %v1985
        %v1987 = vrcp.pop %v1967
        %v1988 = vmul.f32 1.0, %v1987
        %v1989 = vrcp.pop %v1968
        %v1990 = vmul.f32 1.0, %v1989
        %v1991 = vrcp.pop %v1969
        %v1992 = vmul.f32 1.0, %v1991
        %v1993 = vrcp.pop %v1970
        %v1994 = vmul.f32 1.0, %v1993
        %v1995 = vrcp.pop %v1971
        %v1996 = vmul.f32 1.0, %v1995
        %v1997 = vrcp.pop %v1972
        %v1998 = vmul.f32 1.0, %v1997
        %v1999 = vrcp.pop %v1973
        %v2000 = vmul.f32 1.0, %v1999
        %v2001 = vrcp.pop %v1974
        %v2002 = vmul.f32 1.0, %v2001
        %v2003 = vrcp.pop %v1975
        %v2004 = vmul.f32 1.0, %v2003
        %v2005 = vrcp.pop %v1976
        %v2006 = vmul.f32 1.0, %v2005
        %v2007 = vrcp.pop %v1977
        %v2008 = vmul.f32 1.0, %v2007
        %v2009 = vrcp.pop %v1978
        %v2010 = vmul.f32 1.0, %v2009
        %v2011 = vmul.f32 %v1853, %v1980
        %v2012 = vmul.f32 %v1856, %v1982
        %v2013 = vmul.f32 %v1861, %v1984
        %v2014 = vmul.f32 %v1864, %v1986
        %v2015 = vmul.f32 %v1869, %v1988
        %v2016 = vmul.f32 %v1872, %v1990
        %v2017 = vmul.f32 %v1877, %v1992
        %v2018 = vmul.f32 %v1880, %v1994
        %v2019 = vmul.f32 %v1885, %v1996
        %v2020 = vmul.f32 %v1888, %v1998
        %v2021 = vmul.f32 %v1893, %v2000
        %v2022 = vmul.f32 %v1896, %v2002
        %v2023 = vmul.f32 %v1901, %v2004
        %v2024 = vmul.f32 %v1904, %v2006
        %v2025 = vmul.f32 %v1909, %v2008
        %v2026 = vmul.f32 %v1912, %v2010
        %v2027 = vpack.c.bf16 %v2012, %v2011
        %v2028 = vpack.c.bf16 %v2014, %v2013
        %v2029 = vpack.c.bf16 %v2016, %v2015
        %v2030 = vpack.c.bf16 %v2018, %v2017
        %v2031 = vpack.c.bf16 %v2020, %v2019
        %v2032 = vpack.c.bf16 %v2022, %v2021
        %v2033 = vpack.c.bf16 %v2024, %v2023
        %v2034 = vpack.c.bf16 %v2026, %v2025
        %v2035 = vld [vmem:[%s10] sm:$0xf]
        %v2036 = vld [vmem:[%s10 + $0x4] sm:$0xf]
        %v2037 = vld [vmem:[%s10 + $0x8] sm:$0xf]
        %v2038 = vld [vmem:[%s10 + $0xc] sm:$0xf]
        %v2039 = vld [vmem:[%s11] sm:$0x1]
        %v2041 = vlaneseq
        %v2042 = vshrl.u32 %v2041, 7
        %v2043 = vsub.s32 0, %v2042
        %v2044 = vrot.slane %v2039, %v2043
        %v2050 = vunpack.c.l.b16 %v2035
        %v2051 = vunpack.c.l.b16 %v2036
        %v2052 = vunpack.c.l.b16 %v2037
        %v2053 = vunpack.c.l.b16 %v2038
        %v2054 = vpack.c.b16 %v2051, %v2050
        %v2055 = vpack.c.b16 %v2053, %v2052
        %v2059 = vsel %vm1793, %v2027, 0
        %v2062 = vsel %vm1793, %v2028, 0
        %v2065 = vsel %vm1793, %v2029, 0
        %v2068 = vsel %vm1793, %v2030, 0
        %v2071 = vsel %vm1793, %v2031, 0
        %v2074 = vsel %vm1793, %v2032, 0
        %v2077 = vsel %vm1793, %v2033, 0
        %v2080 = vsel %vm1793, %v2034, 0
        %2082 = vmatprep.subr.bf16.mxu0 0
        %2083 = vmatpush1.bf16.msra.mxu0 %v2054
        %2084 = vmatprep.subr.bf16.mxu0 0
        %2085 = vmatpush1.bf16.msra.mxu0 %v2055
        %2086 = vmatprep.subr.bf16.mxu0 0
        %2087 = vmatpush1.bf16.msra.mxu0 0
        %2088 = vmatprep.subr.bf16.mxu0 0
        %2089 = vmatpush1.bf16.msra.mxu0 0
        %2090 = vmatprep.subr.bf16.mxu0 0
        %2091 = vmatpush1.bf16.msra.mxu0 0
        %2092 = vmatprep.subr.bf16.mxu0 0
        %2093 = vmatpush1.bf16.msra.mxu0 0
        %2094 = vmatprep.subr.bf16.mxu0 0
        %2095 = vmatpush1.bf16.msra.mxu0 0
        %2096 = vmatprep.subr.bf16.mxu0 0
        %2097 = vmatpush1.bf16.msra.mxu0 0
        %2098 = vmatprep.subr.bf16.mxu0 0
        %2099 = vmatpush1.bf16.msra.mxu0 0
        %2100 = vmatprep.subr.bf16.mxu0 0
        %2101 = vmatpush1.bf16.msra.mxu0 0
        %2102 = vmatprep.subr.bf16.mxu0 0
        %2103 = vmatpush1.bf16.msra.mxu0 0
        %2104 = vmatprep.subr.bf16.mxu0 0
        %2105 = vmatpush1.bf16.msra.mxu0 0
        %2106 = vmatprep.subr.bf16.mxu0 0
        %2107 = vmatpush1.bf16.msra.mxu0 0
        %2108 = vmatprep.subr.bf16.mxu0 0
        %2109 = vmatpush1.bf16.msra.mxu0 0
        %2110 = vmatprep.subr.bf16.mxu0 0
        %2111 = vmatpush1.bf16.msra.mxu0 0
        %2112 = vmatprep.subr.bf16.mxu0 0
        %2113 = vmatpush1.bf16.msra.mxu0 0
        %2114 = vmatprep.mubr.bf16.mxu0 0
        %2115 = vmatmul.mubr.bf16.gmra.mrb[0].mxu0 %v2059
        %v2116 = vpop.f32.mrb[0].mxu0
        %v2117 = vadd.f32 %v2044, %v2116
        %v2118 = vpop.f32.mrb[0].mxu0
        %v2119 = vpop.f32.mrb[0].mxu0
        %v2120 = vadd.f32 %v2044, %v2119
        %v2121 = vpop.f32.mrb[0].mxu0
        %2122 = vmatprep.mubr.bf16.mxu0 0
        %2123 = vmatmul.mubr.bf16.gmra.mrb[0].mxu0 %v2062
        %v2124 = vpop.f32.mrb[0].mxu0
        %v2125 = vadd.f32 %v2044, %v2124
        %v2126 = vpop.f32.mrb[0].mxu0
        %v2127 = vpop.f32.mrb[0].mxu0
        %v2128 = vadd.f32 %v2044, %v2127
        %v2129 = vpop.f32.mrb[0].mxu0
        %2130 = vmatprep.mubr.bf16.mxu0 0
        %2131 = vmatmul.mubr.bf16.gmra.mrb[0].mxu0 %v2065
        %v2132 = vpop.f32.mrb[0].mxu0
        %v2133 = vadd.f32 %v2044, %v2132
        %v2134 = vpop.f32.mrb[0].mxu0
        %v2135 = vpop.f32.mrb[0].mxu0
        %v2136 = vadd.f32 %v2044, %v2135
        %v2137 = vpop.f32.mrb[0].mxu0
        %2138 = vmatprep.mubr.bf16.mxu0 0
        %2139 = vmatmul.mubr.bf16.gmra.mrb[0].mxu0 %v2068
        %v2140 = vpop.f32.mrb[0].mxu0
        %v2141 = vadd.f32 %v2044, %v2140
        %v2142 = vpop.f32.mrb[0].mxu0
        %v2143 = vpop.f32.mrb[0].mxu0
        %v2144 = vadd.f32 %v2044, %v2143
        %v2145 = vpop.f32.mrb[0].mxu0
        %2146 = vmatprep.mubr.bf16.mxu0 0
        %2147 = vmatmul.mubr.bf16.gmra.mrb[0].mxu0 %v2071
        %v2148 = vpop.f32.mrb[0].mxu0
        %v2149 = vadd.f32 %v2044, %v2148
        %v2150 = vpop.f32.mrb[0].mxu0
        %v2151 = vpop.f32.mrb[0].mxu0
        %v2152 = vadd.f32 %v2044, %v2151
        %v2153 = vpop.f32.mrb[0].mxu0
        %2154 = vmatprep.mubr.bf16.mxu0 0
        %2155 = vmatmul.mubr.bf16.gmra.mrb[0].mxu0 %v2074
        %v2156 = vpop.f32.mrb[0].mxu0
        %v2157 = vadd.f32 %v2044, %v2156
        %v2158 = vpop.f32.mrb[0].mxu0
        %v2159 = vpop.f32.mrb[0].mxu0
        %v2160 = vadd.f32 %v2044, %v2159
        %v2161 = vpop.f32.mrb[0].mxu0
        %2162 = vmatprep.mubr.bf16.mxu0 0
        %2163 = vmatmul.mubr.bf16.gmra.mrb[0].mxu0 %v2077
        %v2164 = vpop.f32.mrb[0].mxu0
        %v2165 = vadd.f32 %v2044, %v2164
        %v2166 = vpop.f32.mrb[0].mxu0
        %v2167 = vpop.f32.mrb[0].mxu0
        %v2168 = vadd.f32 %v2044, %v2167
        %v2169 = vpop.f32.mrb[0].mxu0
        %2170 = vmatprep.mubr.bf16.mxu0 0
        %2171 = vmatmul.mubr.bf16.gmra.mrb[0].mxu0 %v2080
        %v2172 = vpop.f32.mrb[0].mxu0
        %v2173 = vadd.f32 %v2044, %v2172
        %v2174 = vpop.f32.mrb[0].mxu0
        %v2175 = vpop.f32.mrb[0].mxu0
        %v2176 = vadd.f32 %v2044, %v2175
        %v2177 = vpop.f32.mrb[0].mxu0
        %2178 = vdwg.mxu0
        %vm2179 = vcmask 269312
        %2180 = vst.msk [vmem:[#allocation3] sm:$0xff] %vm2179, %v2117
        %2181 = vst.msk [vmem:[#allocation3 + $0x8] sm:$0xff] %vm2179, %v2120
        %2182 = vst.msk [vmem:[#allocation3 + $0x10] sm:$0xff] %vm2179, %v2125
        %2183 = vst.msk [vmem:[#allocation3 + $0x18] sm:$0xff] %vm2179, %v2128
        %2184 = vst.msk [vmem:[#allocation3 + $0x20] sm:$0xff] %vm2179, %v2133
        %2185 = vst.msk [vmem:[#allocation3 + $0x28] sm:$0xff] %vm2179, %v2136
        %2186 = vst.msk [vmem:[#allocation3 + $0x30] sm:$0xff] %vm2179, %v2141
        %2187 = vst.msk [vmem:[#allocation3 + $0x38] sm:$0xff] %vm2179, %v2144
        %2188 = vst.msk [vmem:[#allocation3 + $0x40] sm:$0xff] %vm2179, %v2149
        %2189 = vst.msk [vmem:[#allocation3 + $0x48] sm:$0xff] %vm2179, %v2152
        %2190 = vst.msk [vmem:[#allocation3 + $0x50] sm:$0xff] %vm2179, %v2157
        %2191 = vst.msk [vmem:[#allocation3 + $0x58] sm:$0xff] %vm2179, %v2160
        %2192 = vst.msk [vmem:[#allocation3 + $0x60] sm:$0xff] %vm2179, %v2165
        %2193 = vst.msk [vmem:[#allocation3 + $0x68] sm:$0xff] %vm2179, %v2168
        %2194 = vst.msk [vmem:[#allocation3 + $0x70] sm:$0xff] %vm2179, %v2173
        %2195 = vst.msk [vmem:[#allocation3 + $0x78] sm:$0xff] %vm2179, %v2176
        %v2196 = vld [vmem:[#allocation3] sm:$0xff]
        %v2197 = vld [vmem:[#allocation3 + $0x8] sm:$0xff]
        %v2198 = vld [vmem:[#allocation3 + $0x10] sm:$0xff]
        %v2199 = vld [vmem:[#allocation3 + $0x18] sm:$0xff]
        %v2200 = vld [vmem:[#allocation3 + $0x20] sm:$0xff]
        %v2201 = vld [vmem:[#allocation3 + $0x28] sm:$0xff]
        %v2202 = vld [vmem:[#allocation3 + $0x30] sm:$0xff]
        %v2203 = vld [vmem:[#allocation3 + $0x38] sm:$0xff]
        %v2204 = vld [vmem:[#allocation3 + $0x40] sm:$0xff]
        %v2205 = vld [vmem:[#allocation3 + $0x48] sm:$0xff]
        %v2206 = vld [vmem:[#allocation3 + $0x50] sm:$0xff]
        %v2207 = vld [vmem:[#allocation3 + $0x58] sm:$0xff]
        %v2208 = vld [vmem:[#allocation3 + $0x60] sm:$0xff]
        %v2209 = vld [vmem:[#allocation3 + $0x68] sm:$0xff]
        %v2210 = vld [vmem:[#allocation3 + $0x70] sm:$0xff]
        %v2211 = vld [vmem:[#allocation3 + $0x78] sm:$0xff]
        %v2212 = vxor.u32 %v2196, 2147483648
        %v2213 = vxor.u32 %v2197, 2147483648
        %v2214 = vxor.u32 %v2198, 2147483648
        %v2215 = vxor.u32 %v2199, 2147483648
        %v2216 = vxor.u32 %v2200, 2147483648
        %v2217 = vxor.u32 %v2201, 2147483648
        %v2218 = vxor.u32 %v2202, 2147483648
        %v2219 = vxor.u32 %v2203, 2147483648
        %v2220 = vxor.u32 %v2204, 2147483648
        %v2221 = vxor.u32 %v2205, 2147483648
        %v2222 = vxor.u32 %v2206, 2147483648
        %v2223 = vxor.u32 %v2207, 2147483648
        %v2224 = vxor.u32 %v2208, 2147483648
        %v2225 = vxor.u32 %v2209, 2147483648
        %v2226 = vxor.u32 %v2210, 2147483648
        %v2227 = vxor.u32 %v2211, 2147483648
        %v2228 = vmul.f32 %v2212, 1.442695
        %v2229 = vpow.pop %v2228
        %v2230 = vmul.f32 %v2213, 1.442695
        %v2231 = vpow.pop %v2230
        %v2232 = vmul.f32 %v2214, 1.442695
        %v2233 = vpow.pop %v2232
        %v2234 = vmul.f32 %v2215, 1.442695
        %v2235 = vpow.pop %v2234
        %v2236 = vmul.f32 %v2216, 1.442695
        %v2237 = vpow.pop %v2236
        %v2238 = vmul.f32 %v2217, 1.442695
        %v2239 = vpow.pop %v2238
        %v2240 = vmul.f32 %v2218, 1.442695
        %v2241 = vpow.pop %v2240
        %v2242 = vmul.f32 %v2219, 1.442695
        %v2243 = vpow.pop %v2242
        %v2244 = vmul.f32 %v2220, 1.442695
        %v2245 = vpow.pop %v2244
        %v2246 = vmul.f32 %v2221, 1.442695
        %v2247 = vpow.pop %v2246
        %v2248 = vmul.f32 %v2222, 1.442695
        %v2249 = vpow.pop %v2248
        %v2250 = vmul.f32 %v2223, 1.442695
        %v2251 = vpow.pop %v2250
        %v2252 = vmul.f32 %v2224, 1.442695
        %v2253 = vpow.pop %v2252
        %v2254 = vmul.f32 %v2225, 1.442695
        %v2255 = vpow.pop %v2254
        %v2256 = vmul.f32 %v2226, 1.442695
        %v2257 = vpow.pop %v2256
        %v2258 = vmul.f32 %v2227, 1.442695
        %v2259 = vpow.pop %v2258
        %v2260 = vadd.f32 %v2229, 1.0
        %v2261 = vadd.f32 %v2231, 1.0
        %v2262 = vadd.f32 %v2233, 1.0
        %v2263 = vadd.f32 %v2235, 1.0
        %v2264 = vadd.f32 %v2237, 1.0
        %v2265 = vadd.f32 %v2239, 1.0
        %v2266 = vadd.f32 %v2241, 1.0
        %v2267 = vadd.f32 %v2243, 1.0
        %v2268 = vadd.f32 %v2245, 1.0
        %v2269 = vadd.f32 %v2247, 1.0
        %v2270 = vadd.f32 %v2249, 1.0
        %v2271 = vadd.f32 %v2251, 1.0
        %v2272 = vadd.f32 %v2253, 1.0
        %v2273 = vadd.f32 %v2255, 1.0
        %v2274 = vadd.f32 %v2257, 1.0
        %v2275 = vadd.f32 %v2259, 1.0
        %v2276 = vrcp.pop %v2260
        %v2277 = vmul.f32 1.0, %v2276
        %v2278 = vrcp.pop %v2261
        %v2279 = vmul.f32 1.0, %v2278
        %v2280 = vrcp.pop %v2262
        %v2281 = vmul.f32 1.0, %v2280
        %v2282 = vrcp.pop %v2263
        %v2283 = vmul.f32 1.0, %v2282
        %v2284 = vrcp.pop %v2264
        %v2285 = vmul.f32 1.0, %v2284
        %v2286 = vrcp.pop %v2265
        %v2287 = vmul.f32 1.0, %v2286
        %v2288 = vrcp.pop %v2266
        %v2289 = vmul.f32 1.0, %v2288
        %v2290 = vrcp.pop %v2267
        %v2291 = vmul.f32 1.0, %v2290
        %v2292 = vrcp.pop %v2268
        %v2293 = vmul.f32 1.0, %v2292
        %v2294 = vrcp.pop %v2269
        %v2295 = vmul.f32 1.0, %v2294
        %v2296 = vrcp.pop %v2270
        %v2297 = vmul.f32 1.0, %v2296
        %v2298 = vrcp.pop %v2271
        %v2299 = vmul.f32 1.0, %v2298
        %v2300 = vrcp.pop %v2272
        %v2301 = vmul.f32 1.0, %v2300
        %v2302 = vrcp.pop %v2273
        %v2303 = vmul.f32 1.0, %v2302
        %v2304 = vrcp.pop %v2274
        %v2305 = vmul.f32 1.0, %v2304
        %v2306 = vrcp.pop %v2275
        %v2307 = vmul.f32 1.0, %v2306
        %v2308 = vmul.f32 %v2196, %v2277
        %v2309 = vmul.f32 %v2197, %v2279
        %v2310 = vmul.f32 %v2198, %v2281
        %v2311 = vmul.f32 %v2199, %v2283
        %v2312 = vmul.f32 %v2200, %v2285
        %v2313 = vmul.f32 %v2201, %v2287
        %v2314 = vmul.f32 %v2202, %v2289
        %v2315 = vmul.f32 %v2203, %v2291
        %v2316 = vmul.f32 %v2204, %v2293
        %v2317 = vmul.f32 %v2205, %v2295
        %v2318 = vmul.f32 %v2206, %v2297
        %v2319 = vmul.f32 %v2207, %v2299
        %v2320 = vmul.f32 %v2208, %v2301
        %v2321 = vmul.f32 %v2209, %v2303
        %v2322 = vmul.f32 %v2210, %v2305
        %v2323 = vmul.f32 %v2211, %v2307
        %v2324 = vpack.c.bf16 %v2309, %v2308
        %v2325 = vpack.c.bf16 %v2311, %v2310
        %v2326 = vpack.c.bf16 %v2313, %v2312
        %v2327 = vpack.c.bf16 %v2315, %v2314
        %v2328 = vpack.c.bf16 %v2317, %v2316
        %v2329 = vpack.c.bf16 %v2319, %v2318
        %v2330 = vpack.c.bf16 %v2321, %v2320
        %v2331 = vpack.c.bf16 %v2323, %v2322
        %v2332 = vld [vmem:[%s12] sm:$0xf]
        %v2333 = vld [vmem:[%s12 + $0x4] sm:$0xf]
        %v2334 = vld [vmem:[%s12 + $0x8] sm:$0xf]
        %v2335 = vld [vmem:[%s12 + $0xc] sm:$0xf]
        %v2340 = vunpack.c.l.b16 %v2332
        %v2341 = vunpack.c.l.b16 %v2333
        %v2342 = vunpack.c.l.b16 %v2334
        %v2343 = vunpack.c.l.b16 %v2335
        %v2344 = vpack.c.b16 %v2341, %v2340
        %v2345 = vpack.c.b16 %v2343, %v2342
        %v2349 = vsel %vm1793, %v2324, 0
        %v2352 = vsel %vm1793, %v2325, 0
        %v2355 = vsel %vm1793, %v2326, 0
        %v2358 = vsel %vm1793, %v2327, 0
        %v2361 = vsel %vm1793, %v2328, 0
        %v2364 = vsel %vm1793, %v2329, 0
        %v2367 = vsel %vm1793, %v2330, 0
        %v2370 = vsel %vm1793, %v2331, 0
        %2372 = vmatprep.subr.bf16.mxu0 0
        %2373 = vmatpush1.bf16.msra.mxu0 %v2344
        %2374 = vmatprep.subr.bf16.mxu0 0
        %2375 = vmatpush1.bf16.msra.mxu0 %v2345
        %2376 = vmatprep.subr.bf16.mxu0 0
        %2377 = vmatpush1.bf16.msra.mxu0 0
        %2378 = vmatprep.subr.bf16.mxu0 0
        %2379 = vmatpush1.bf16.msra.mxu0 0
        %2380 = vmatprep.subr.bf16.mxu0 0
        %2381 = vmatpush1.bf16.msra.mxu0 0
        %2382 = vmatprep.subr.bf16.mxu0 0
        %2383 = vmatpush1.bf16.msra.mxu0 0
        %2384 = vmatprep.subr.bf16.mxu0 0
        %2385 = vmatpush1.bf16.msra.mxu0 0
        %2386 = vmatprep.subr.bf16.mxu0 0
        %2387 = vmatpush1.bf16.msra.mxu0 0
        %2388 = vmatprep.subr.bf16.mxu0 0
        %2389 = vmatpush1.bf16.msra.mxu0 0
        %2390 = vmatprep.subr.bf16.mxu0 0
        %2391 = vmatpush1.bf16.msra.mxu0 0
        %2392 = vmatprep.subr.bf16.mxu0 0
        %2393 = vmatpush1.bf16.msra.mxu0 0
        %2394 = vmatprep.subr.bf16.mxu0 0
        %2395 = vmatpush1.bf16.msra.mxu0 0
        %2396 = vmatprep.subr.bf16.mxu0 0
        %2397 = vmatpush1.bf16.msra.mxu0 0
        %2398 = vmatprep.subr.bf16.mxu0 0
        %2399 = vmatpush1.bf16.msra.mxu0 0
        %2400 = vmatprep.subr.bf16.mxu0 0
        %2401 = vmatpush1.bf16.msra.mxu0 0
        %2402 = vmatprep.subr.bf16.mxu0 0
        %2403 = vmatpush1.bf16.msra.mxu0 0
        %2404 = vmatprep.mubr.bf16.mxu0 0
        %2405 = vmatmul.mubr.bf16.gmra.mrb[0].mxu0 %v2349
        %v2406 = vpop.f32.mrb[0].mxu0
        %v2407 = vadd.f32 0.0, %v2406
        %v2408 = vpop.f32.mrb[0].mxu0
        %v2409 = vpop.f32.mrb[0].mxu0
        %v2410 = vadd.f32 0.0, %v2409
        %v2411 = vpop.f32.mrb[0].mxu0
        %2412 = vmatprep.mubr.bf16.mxu0 0
        %2413 = vmatmul.mubr.bf16.gmra.mrb[0].mxu0 %v2352
        %v2414 = vpop.f32.mrb[0].mxu0
        %v2415 = vadd.f32 0.0, %v2414
        %v2416 = vpop.f32.mrb[0].mxu0
        %v2417 = vpop.f32.mrb[0].mxu0
        %v2418 = vadd.f32 0.0, %v2417
        %v2419 = vpop.f32.mrb[0].mxu0
        %2420 = vmatprep.mubr.bf16.mxu0 0
        %2421 = vmatmul.mubr.bf16.gmra.mrb[0].mxu0 %v2355
        %v2422 = vpop.f32.mrb[0].mxu0
        %v2423 = vadd.f32 0.0, %v2422
        %v2424 = vpop.f32.mrb[0].mxu0
        %v2425 = vpop.f32.mrb[0].mxu0
        %v2426 = vadd.f32 0.0, %v2425
        %v2427 = vpop.f32.mrb[0].mxu0
        %2428 = vmatprep.mubr.bf16.mxu0 0
        %2429 = vmatmul.mubr.bf16.gmra.mrb[0].mxu0 %v2358
        %v2430 = vpop.f32.mrb[0].mxu0
        %v2431 = vadd.f32 0.0, %v2430
        %v2432 = vpop.f32.mrb[0].mxu0
        %v2433 = vpop.f32.mrb[0].mxu0
        %v2434 = vadd.f32 0.0, %v2433
        %v2435 = vpop.f32.mrb[0].mxu0
        %2436 = vmatprep.mubr.bf16.mxu0 0
        %2437 = vmatmul.mubr.bf16.gmra.mrb[0].mxu0 %v2361
        %v2438 = vpop.f32.mrb[0].mxu0
        %v2439 = vadd.f32 0.0, %v2438
        %v2440 = vpop.f32.mrb[0].mxu0
        %v2441 = vpop.f32.mrb[0].mxu0
        %v2442 = vadd.f32 0.0, %v2441
        %v2443 = vpop.f32.mrb[0].mxu0
        %2444 = vmatprep.mubr.bf16.mxu0 0
        %2445 = vmatmul.mubr.bf16.gmra.mrb[0].mxu0 %v2364
        %v2446 = vpop.f32.mrb[0].mxu0
        %v2447 = vadd.f32 0.0, %v2446
        %v2448 = vpop.f32.mrb[0].mxu0
        %v2449 = vpop.f32.mrb[0].mxu0
        %v2450 = vadd.f32 0.0, %v2449
        %v2451 = vpop.f32.mrb[0].mxu0
        %2452 = vmatprep.mubr.bf16.mxu0 0
        %2453 = vmatmul.mubr.bf16.gmra.mrb[0].mxu0 %v2367
        %v2454 = vpop.f32.mrb[0].mxu0
        %v2455 = vadd.f32 0.0, %v2454
        %v2456 = vpop.f32.mrb[0].mxu0
        %v2457 = vpop.f32.mrb[0].mxu0
        %v2458 = vadd.f32 0.0, %v2457
        %v2459 = vpop.f32.mrb[0].mxu0
        %2460 = vmatprep.mubr.bf16.mxu0 0
        %2461 = vmatmul.mubr.bf16.gmra.mrb[0].mxu0 %v2370
        %v2462 = vpop.f32.mrb[0].mxu0
        %v2463 = vadd.f32 0.0, %v2462
        %v2464 = vpop.f32.mrb[0].mxu0
        %v2465 = vpop.f32.mrb[0].mxu0
        %v2466 = vadd.f32 0.0, %v2465
        %v2467 = vpop.f32.mrb[0].mxu0
        %2468 = vdwg.mxu0
        %v2469 = vtanh.pop %v2407
        %v2470 = vtanh.pop %v2410
        %v2471 = vtanh.pop %v2415
        %v2472 = vtanh.pop %v2418
        %v2473 = vtanh.pop %v2423
        %v2474 = vtanh.pop %v2426
        %v2475 = vtanh.pop %v2431
        %v2476 = vtanh.pop %v2434
        %v2477 = vtanh.pop %v2439
        %v2478 = vtanh.pop %v2442
        %v2479 = vtanh.pop %v2447
        %v2480 = vtanh.pop %v2450
        %v2481 = vtanh.pop %v2455
        %v2482 = vtanh.pop %v2458
        %v2483 = vtanh.pop %v2463
        %v2484 = vtanh.pop %v2466
        %2486 = vset.pattern.permute.xlu0 32
        %2487 = vperm.xlu0 %2486, %v2277
        %v2488 = vpop.permute.xlu0 %2487
        %2491 = vset.pattern.permute.xlu0 32
        %2492 = vperm.xlu0 %2491, %v2279
        %v2493 = vpop.permute.xlu0 %2492
        %2496 = vset.pattern.permute.xlu0 32
        %2497 = vperm.xlu0 %2496, %v2281
        %v2498 = vpop.permute.xlu0 %2497
        %2501 = vset.pattern.permute.xlu0 32
        %2502 = vperm.xlu0 %2501, %v2283
        %v2503 = vpop.permute.xlu0 %2502
        %2506 = vset.pattern.permute.xlu0 32
        %2507 = vperm.xlu0 %2506, %v2285
        %v2508 = vpop.permute.xlu0 %2507
        %2511 = vset.pattern.permute.xlu0 32
        %2512 = vperm.xlu0 %2511, %v2287
        %v2513 = vpop.permute.xlu0 %2512
        %2516 = vset.pattern.permute.xlu0 32
        %2517 = vperm.xlu0 %2516, %v2289
        %v2518 = vpop.permute.xlu0 %2517
        %2521 = vset.pattern.permute.xlu0 32
        %2522 = vperm.xlu0 %2521, %v2291
        %v2523 = vpop.permute.xlu0 %2522
        %2526 = vset.pattern.permute.xlu0 32
        %2527 = vperm.xlu0 %2526, %v2293
        %v2528 = vpop.permute.xlu0 %2527
        %2531 = vset.pattern.permute.xlu0 32
        %2532 = vperm.xlu0 %2531, %v2295
        %v2533 = vpop.permute.xlu0 %2532
        %2536 = vset.pattern.permute.xlu0 32
        %2537 = vperm.xlu0 %2536, %v2297
        %v2538 = vpop.permute.xlu0 %2537
        %2541 = vset.pattern.permute.xlu0 32
        %2542 = vperm.xlu0 %2541, %v2299
        %v2543 = vpop.permute.xlu0 %2542
        %2546 = vset.pattern.permute.xlu0 32
        %2547 = vperm.xlu0 %2546, %v2301
        %v2548 = vpop.permute.xlu0 %2547
        %2551 = vset.pattern.permute.xlu0 32
        %2552 = vperm.xlu0 %2551, %v2303
        %v2553 = vpop.permute.xlu0 %2552
        %2556 = vset.pattern.permute.xlu0 32
        %2557 = vperm.xlu0 %2556, %v2305
        %v2558 = vpop.permute.xlu0 %2557
        %2561 = vset.pattern.permute.xlu0 32
        %2562 = vperm.xlu0 %2561, %v2307
        %v2563 = vpop.permute.xlu0 %2562
        %v2565 = vmul.f32 %v2011, %v2488
        %v2566 = vmul.f32 %v2012, %v2493
        %v2567 = vmul.f32 %v2013, %v2498
        %v2568 = vmul.f32 %v2014, %v2503
        %v2569 = vmul.f32 %v2015, %v2508
        %v2570 = vmul.f32 %v2016, %v2513
        %v2571 = vmul.f32 %v2017, %v2518
        %v2572 = vmul.f32 %v2018, %v2523
        %v2573 = vmul.f32 %v2019, %v2528
        %v2574 = vmul.f32 %v2020, %v2533
        %v2575 = vmul.f32 %v2021, %v2538
        %v2576 = vmul.f32 %v2022, %v2543
        %v2577 = vmul.f32 %v2023, %v2548
        %v2578 = vmul.f32 %v2024, %v2553
        %v2579 = vmul.f32 %v2025, %v2558
        %v2580 = vmul.f32 %v2026, %v2563
        %v2581 = vpack.c.bf16 %v2566, %v2565
        %v2582 = vpack.c.bf16 %v2568, %v2567
        %v2583 = vpack.c.bf16 %v2570, %v2569
        %v2584 = vpack.c.bf16 %v2572, %v2571
        %v2585 = vpack.c.bf16 %v2574, %v2573
        %v2586 = vpack.c.bf16 %v2576, %v2575
        %v2587 = vpack.c.bf16 %v2578, %v2577
        %v2588 = vpack.c.bf16 %v2580, %v2579
        %2589 = vst.msk [vmem:[#allocation4] sm:$0xff] %vm1793, %v2581
        %2590 = vst.msk [vmem:[#allocation4 + $0x8] sm:$0xff] %vm1793, %v2582
        %2591 = vst.msk [vmem:[#allocation4 + $0x10] sm:$0xff] %vm1793, %v2583
        %2592 = vst.msk [vmem:[#allocation4 + $0x18] sm:$0xff] %vm1793, %v2584
        %2593 = vst.msk [vmem:[#allocation4 + $0x20] sm:$0xff] %vm1793, %v2585
        %2594 = vst.msk [vmem:[#allocation4 + $0x28] sm:$0xff] %vm1793, %v2586
        %2595 = vst.msk [vmem:[#allocation4 + $0x30] sm:$0xff] %vm1793, %v2587
        %2596 = vst.msk [vmem:[#allocation4 + $0x38] sm:$0xff] %vm1793, %v2588
        %v2597 = vadd.f32 %v1247, 1.0
        %v2598 = vadd.f32 %v1254, 1.0
        %v2599 = vadd.f32 %v1261, 1.0
        %v2600 = vadd.f32 %v1268, 1.0
        %v2601 = vadd.f32 %v1275, 1.0
        %v2602 = vadd.f32 %v1282, 1.0
        %v2603 = vadd.f32 %v1289, 1.0
        %v2604 = vadd.f32 %v1296, 1.0
        %v2605 = vadd.f32 %v1303, 1.0
        %v2606 = vadd.f32 %v1310, 1.0
        %v2607 = vadd.f32 %v1317, 1.0
        %v2608 = vadd.f32 %v1324, 1.0
        %v2609 = vadd.f32 %v1331, 1.0
        %v2610 = vadd.f32 %v1338, 1.0
        %v2611 = vadd.f32 %v1345, 1.0
        %v2612 = vadd.f32 %v1352, 1.0
        %v2613 = vrcp.pop %v2597
        %v2614 = vrcp.pop %v2598
        %v2615 = vrcp.pop %v2599
        %v2616 = vrcp.pop %v2600
        %v2617 = vrcp.pop %v2601
        %v2618 = vrcp.pop %v2602
        %v2619 = vrcp.pop %v2603
        %v2620 = vrcp.pop %v2604
        %v2621 = vrcp.pop %v2605
        %v2622 = vrcp.pop %v2606
        %v2623 = vrcp.pop %v2607
        %v2624 = vrcp.pop %v2608
        %v2625 = vrcp.pop %v2609
        %v2626 = vrcp.pop %v2610
        %v2627 = vrcp.pop %v2611
        %v2628 = vrcp.pop %v2612
        %v2629 = vmul.f32 %v2613, %v2469
        %v2630 = vmul.f32 %v2614, %v2470
        %v2631 = vmul.f32 %v2615, %v2471
        %v2632 = vmul.f32 %v2616, %v2472
        %v2633 = vmul.f32 %v2617, %v2473
        %v2634 = vmul.f32 %v2618, %v2474
        %v2635 = vmul.f32 %v2619, %v2475
        %v2636 = vmul.f32 %v2620, %v2476
        %v2637 = vmul.f32 %v2621, %v2477
        %v2638 = vmul.f32 %v2622, %v2478
        %v2639 = vmul.f32 %v2623, %v2479
        %v2640 = vmul.f32 %v2624, %v2480
        %v2641 = vmul.f32 %v2625, %v2481
        %v2642 = vmul.f32 %v2626, %v2482
        %v2643 = vmul.f32 %v2627, %v2483
        %v2644 = vmul.f32 %v2628, %v2484
        %2646 = vset.pattern.permute.xlu0 0
        %2647 = vperm.xlu0 %2646, %v2629
        %v2648 = vpop.permute.xlu0 %2647
        %2651 = vset.pattern.permute.xlu0 0
        %2652 = vperm.xlu0 %2651, %v2630
        %v2653 = vpop.permute.xlu0 %2652
        %2656 = vset.pattern.permute.xlu0 0
        %2657 = vperm.xlu0 %2656, %v2631
        %v2658 = vpop.permute.xlu0 %2657
        %2661 = vset.pattern.permute.xlu0 0
        %2662 = vperm.xlu0 %2661, %v2632
        %v2663 = vpop.permute.xlu0 %2662
        %2666 = vset.pattern.permute.xlu0 0
        %2667 = vperm.xlu0 %2666, %v2633
        %v2668 = vpop.permute.xlu0 %2667
        %2671 = vset.pattern.permute.xlu0 0
        %2672 = vperm.xlu0 %2671, %v2634
        %v2673 = vpop.permute.xlu0 %2672
        %2676 = vset.pattern.permute.xlu0 0
        %2677 = vperm.xlu0 %2676, %v2635
        %v2678 = vpop.permute.xlu0 %2677
        %2681 = vset.pattern.permute.xlu0 0
        %2682 = vperm.xlu0 %2681, %v2636
        %v2683 = vpop.permute.xlu0 %2682
        %2686 = vset.pattern.permute.xlu0 0
        %2687 = vperm.xlu0 %2686, %v2637
        %v2688 = vpop.permute.xlu0 %2687
        %2691 = vset.pattern.permute.xlu0 0
        %2692 = vperm.xlu0 %2691, %v2638
        %v2693 = vpop.permute.xlu0 %2692
        %2696 = vset.pattern.permute.xlu0 0
        %2697 = vperm.xlu0 %2696, %v2639
        %v2698 = vpop.permute.xlu0 %2697
        %2701 = vset.pattern.permute.xlu0 0
        %2702 = vperm.xlu0 %2701, %v2640
        %v2703 = vpop.permute.xlu0 %2702
        %2706 = vset.pattern.permute.xlu0 0
        %2707 = vperm.xlu0 %2706, %v2641
        %v2708 = vpop.permute.xlu0 %2707
        %2711 = vset.pattern.permute.xlu0 0
        %2712 = vperm.xlu0 %2711, %v2642
        %v2713 = vpop.permute.xlu0 %2712
        %2716 = vset.pattern.permute.xlu0 0
        %2717 = vperm.xlu0 %2716, %v2643
        %v2718 = vpop.permute.xlu0 %2717
        %2721 = vset.pattern.permute.xlu0 0
        %2722 = vperm.xlu0 %2721, %v2644
        %v2723 = vpop.permute.xlu0 %2722
        %v2725 = vmul.f32 %v1080, %v2648
        %v2726 = vmul.f32 %v1081, %v2653
        %v2727 = vmul.f32 %v1082, %v2658
        %v2728 = vmul.f32 %v1083, %v2663
        %v2729 = vmul.f32 %v1084, %v2668
        %v2730 = vmul.f32 %v1085, %v2673
        %v2731 = vmul.f32 %v1086, %v2678
        %v2732 = vmul.f32 %v1087, %v2683
        %v2733 = vmul.f32 %v1088, %v2688
        %v2734 = vmul.f32 %v1089, %v2693
        %v2735 = vmul.f32 %v1090, %v2698
        %v2736 = vmul.f32 %v1091, %v2703
        %v2737 = vmul.f32 %v1092, %v2708
        %v2738 = vmul.f32 %v1093, %v2713
        %v2739 = vmul.f32 %v1094, %v2718
        %v2740 = vmul.f32 %v1095, %v2723
        %v2741 = vpack.c.bf16 %v2726, %v2725
        %v2742 = vpack.c.bf16 %v2728, %v2727
        %v2743 = vpack.c.bf16 %v2730, %v2729
        %v2744 = vpack.c.bf16 %v2732, %v2731
        %v2745 = vpack.c.bf16 %v2734, %v2733
        %v2746 = vpack.c.bf16 %v2736, %v2735
        %v2747 = vpack.c.bf16 %v2738, %v2737
        %v2748 = vpack.c.bf16 %v2740, %v2739
        %vm2749 = vcmask 285952
        %2750 = vst.msk [vmem:[#allocation4] sm:$0xff] %vm2749, %v2741
        %2751 = vst.msk [vmem:[#allocation4 + $0x8] sm:$0xff] %vm2749, %v2742
        %2752 = vst.msk [vmem:[#allocation4 + $0x10] sm:$0xff] %vm2749, %v2743
        %2753 = vst.msk [vmem:[#allocation4 + $0x18] sm:$0xff] %vm2749, %v2744
        %2754 = vst.msk [vmem:[#allocation4 + $0x20] sm:$0xff] %vm2749, %v2745
        %2755 = vst.msk [vmem:[#allocation4 + $0x28] sm:$0xff] %vm2749, %v2746
        %2756 = vst.msk [vmem:[#allocation4 + $0x30] sm:$0xff] %vm2749, %v2747
        %2757 = vst.msk [vmem:[#allocation4 + $0x38] sm:$0xff] %vm2749, %v2748
        %v2758 = vld [vmem:[#allocation5] sm:$0xff]
        %v2759 = vld [vmem:[#allocation5 + $0x8] sm:$0xff]
        %v2760 = vld [vmem:[#allocation4] sm:$0xff]
        %v2761 = vld [vmem:[#allocation4 + $0x8] sm:$0xff]
        %v2762 = vld [vmem:[#allocation4 + $0x10] sm:$0xff]
        %v2763 = vld [vmem:[#allocation4 + $0x18] sm:$0xff]
        %v2764 = vld [vmem:[#allocation4 + $0x20] sm:$0xff]
        %v2765 = vld [vmem:[#allocation4 + $0x28] sm:$0xff]
        %v2766 = vld [vmem:[#allocation4 + $0x30] sm:$0xff]
        %v2767 = vld [vmem:[#allocation4 + $0x38] sm:$0xff]
        %2768 = vmatprep.subr.bf16.mxu0 0
        %2769 = vmatpush1.bf16.msra.mxu0 %v2760
        %2770 = vmatprep.subr.bf16.mxu0 0
        %2771 = vmatpush1.bf16.msra.mxu0 %v2761
        %2772 = vmatprep.subr.bf16.mxu0 0
        %2773 = vmatpush1.bf16.msra.mxu0 %v2762
        %2774 = vmatprep.subr.bf16.mxu0 0
        %2775 = vmatpush1.bf16.msra.mxu0 %v2763
        %2776 = vmatprep.subr.bf16.mxu0 0
        %2777 = vmatpush1.bf16.msra.mxu0 %v2764
        %2778 = vmatprep.subr.bf16.mxu0 0
        %2779 = vmatpush1.bf16.msra.mxu0 %v2765
        %2780 = vmatprep.subr.bf16.mxu0 0
        %2781 = vmatpush1.bf16.msra.mxu0 %v2766
        %2782 = vmatprep.subr.bf16.mxu0 0
        %2783 = vmatpush1.bf16.msra.mxu0 %v2767
        %2784 = vmatprep.subr.bf16.mxu0 0
        %2785 = vmatpush1.bf16.msra.mxu0 0
        %2786 = vmatprep.subr.bf16.mxu0 0
        %2787 = vmatpush1.bf16.msra.mxu0 0
        %2788 = vmatprep.subr.bf16.mxu0 0
        %2789 = vmatpush1.bf16.msra.mxu0 0
        %2790 = vmatprep.subr.bf16.mxu0 0
        %2791 = vmatpush1.bf16.msra.mxu0 0
        %2792 = vmatprep.subr.bf16.mxu0 0
        %2793 = vmatpush1.bf16.msra.mxu0 0
        %2794 = vmatprep.subr.bf16.mxu0 0
        %2795 = vmatpush1.bf16.msra.mxu0 0
        %2796 = vmatprep.subr.bf16.mxu0 0
        %2797 = vmatpush1.bf16.msra.mxu0 0
        %2798 = vmatprep.subr.bf16.mxu0 0
        %2799 = vmatpush1.bf16.msra.mxu0 0
        %2800 = vmatprep.mubr.bf16.mxu0 0
        %2801 = vmatmul.mubr.bf16.gmra.mrb[0].mxu0 %v803
        %v2802 = vpop.f32.mrb[0].mxu0
        %v2803 = vadd.f32 0.0, %v2802
        %v2804 = vpop.f32.mrb[0].mxu0
        %v2805 = vpop.f32.mrb[0].mxu0
        %v2806 = vadd.f32 0.0, %v2805
        %v2807 = vpop.f32.mrb[0].mxu0
        %2808 = vdwg.mxu0
        %v2809 = vadd.f32 %v2758, %v2803
        %v2810 = vadd.f32 %v2759, %v2806
        %2811 = vst.msk [vmem:[#allocation5] sm:$0xff] %vm1063, %v2809
        %2812 = vst.msk [vmem:[#allocation5 + $0x8] sm:$0xff] %vm1063, %v2810
        // Predicated region
        $region77: #{tpu_custom_call.1} parent=71 // pred_check
          %p2813 = pneg %p540
        $region78: #{tpu_custom_call.1} parent=71 // pred_check_branch
          %2815 = sbr.rel (%p2813) target = $region80
        $region79: #{tpu_custom_call.1} parent=71 // pred_region
          %v2816 = vld [vmem:[#allocation5] sm:$0xff]
          %v2817 = vld [vmem:[#allocation5 + $0x8] sm:$0xff]
          %2818 = vst.msk [vmem:[%s509] sm:$0xff] %vm1063, %v2816
          %2819 = vst.msk [vmem:[%s509 + $0x8] sm:$0xff] %vm1063, %v2817
        $region80: #{tpu_custom_call.1} parent=71 // pred_fallthru
          _
        %s2820 = sand.u32 %s348, 1
        %s2821 = scalar_lea.sflag [#allocation7], %s2820
        %s2822 = sand.u32 %s348, 1
        %s2823 = smul.addr %s2822, 16
        %s2824 = scalar_lea.vmem [#allocation6], %s2823
        // Predicated region
        $region81: #{tpu_custom_call.1} parent=71 // pred_check
          %p2825 = pneg %p358
        $region82: #{tpu_custom_call.1} parent=71 // pred_check_branch
          %2827 = sbr.rel (%p2825) target = $region84
        $region83: #{tpu_custom_call.1} parent=71 // pred_region
          %s2829 = ssub.s32 256, 256
          %2830 = vsyncadd %s2821, %s2829
          %s2831 = smul.addr %s31, 2
          %s2832 = smul.addr %s2831, 128
          %s2833 = scalar_lea.hbm %s13, %s2832
          %s2834 = sshll.u32 %s2824, 4
          %s2835 = int_to_ptr.vmem [resolvable:$true] %s2834
          %2840 = dma.vmem_to_hbm [thread:$0]  %s2835, 256, %s2833, %s2821, 128, 128, 8
        $region84: #{tpu_custom_call.1} parent=71 // pred_fallthru
          _
      $region72: #{tpu_custom_call.1} parent=5 // pred_fallthru
        _
      %p2841 = scmp.le.s32.totalorder 2, %s22
      // Predicated region
      $region85: #{tpu_custom_call.1} parent=5 // pred_check
        %p2842 = pneg %p2841
      $region86: #{tpu_custom_call.1} parent=5 // pred_check_branch
        %2844 = sbr.rel (%p2842) target = $region88
      $region87: #{tpu_custom_call.1} parent=5 // pred_region
        %s2845 = ssub.s32 %s22, 2
        // Predicated region
        $region89: #{tpu_custom_call.1} parent=87 // pred_check
          %p2846 = pneg %p364
        $region90: #{tpu_custom_call.1} parent=87 // pred_check_branch
          %2848 = sbr.rel (%p2846) target = $region92
        $region91: #{tpu_custom_call.1} parent=87 // pred_region
          %s2849 = sand.u32 %s349, 1
          %s2850 = scalar_lea.sflag [#allocation7], %s2849
          %s2851 = sand.u32 %s349, 1
          %s2852 = smul.addr %s2851, 16
          %s2853 = scalar_lea.vmem [#allocation6], %s2852
          %2854 = dma.done %s2850, 256
        $region92: #{tpu_custom_call.1} parent=87 // pred_fallthru
          _
      $region88: #{tpu_custom_call.1} parent=5 // pred_fallthru
        _
    $region6: #{tpu_custom_call.1} parent=1 // loop_footer
      %s26 = sadd.s32 1, %s22
    $region7: #{tpu_custom_call.1} parent=1 // loop_footer_branch
      %21 = sbr.rel target = $region3
    $region8: #{tpu_custom_call.1} parent=1 // loop_exit
      _
    %2855 = vsyncpa [#allocation7], 1
    %s2856 = scalar_lea.sflag [#allocation7], 1
    %2857 = vsyncpa %s2856, 1

</llo_original>
